<compile_context>
chip_gen: v7x
topology: tpu7x:2x2x1
jax: 0.10.0
libtpu: 0.0.40
codegen_flags: <defaults>
</compile_context>

<pallas_src>
import functools

import jax
import jax.numpy as jnp
from jax import lax
from jax.experimental import pallas as pl
from jax.experimental.pallas import tpu as pltpu

F32 = jnp.float32
LANES = 128
SUB = 8          # sub-tile rows: one (8,128) f32 vreg per channel
TR_MAX = 128     # max rows (of 128 points) per grid step -> 16384 pts/step
NOUT = 39        # output channels (no pad row)


# ----------------------------------------------------------------------------
# glue: rotations / euler angles (tiny 3x3 math, stays in plain JAX)
# ----------------------------------------------------------------------------
def _rot_x(a):
    c, s = jnp.cos(a), jnp.sin(a)
    return jnp.array([[1, 0, 0], [0, c, -s], [0, s, c]], dtype=F32)


def _rot_y(a):
    c, s = jnp.cos(a), jnp.sin(a)
    return jnp.array([[c, 0, s], [0, 1, 0], [-s, 0, c]], dtype=F32)


def _rot_z(a):
    c, s = jnp.cos(a), jnp.sin(a)
    return jnp.array([[c, -s, 0], [s, c, 0], [0, 0, 1]], dtype=F32)


def get_rot_mat(alpha, beta, gamma):
    # R = Rz(gamma) @ Ry(beta) @ Rx(alpha)
    return _rot_z(gamma) @ _rot_y(beta) @ _rot_x(alpha)


def get_stereo_camera_angles(R):
    # inverse of get_rot_mat (ZYX euler extraction)
    beta = -jnp.arcsin(jnp.clip(R[2, 0], -1.0, 1.0))
    alpha = jnp.arctan2(R[2, 1], R[2, 2])
    gamma = jnp.arctan2(R[1, 0], R[0, 0])
    return alpha, beta, gamma


# ----------------------------------------------------------------------------
# Pallas kernel: full per-point geometry pipeline on 8-row sub-tiles
#
# Output slab channel layout (rows of the (39, R, 128) output):
#   0-2   recon_3D            3-5   recon_3D_real      6-8   recon_3D_virtual
#   9-11  recon_3D_1          12-14 recon_3D_2         15-17 recon_3D_12
#   18-20 recon_3D_21
#   21-26 closest_distance_{real, virtual, 1, 2, 12, 21}
#   27-28 recon_pixels_1      29-30 recon_pixels_2
#   31-32 recon_pixels_0_virt 33-34 recon_pixels_1_virt
#   35 intersection_penalty_1 36 intersection_penalty_2
#   37 distortion_penalty_0   38 distortion_penalty_1
# ----------------------------------------------------------------------------
def _geometry_kernel(params_ref, pix_ref, out_ref):
    p = params_ref
    # --- unpack scalar params from SMEM (hoisted above the point loop) ---
    cx0, cy0, f0, inv_f0 = p[0], p[1], p[2], p[3]
    k01, k02, k03 = p[4], p[5], p[6]
    cx1, cy1, f1, inv_f1 = p[7], p[8], p[9], p[10]
    k11, k12, k13 = p[11], p[12], p[13]
    R2 = [[p[14 + 3 * r + c] for c in range(3)] for r in range(3)]
    T2 = (p[23], p[24], p[25])
    ap2 = (p[26], p[27], p[28])          # world position of camera 2 center
    pc = (p[29], p[30], p[31])           # prism center
    pn = (p[32], p[33], p[34])           # prism face normal (unit)
    thick = p[35]
    half_a, half_b = p[36], p[37]
    n_glass = p[38]
    inv_n_glass = p[39]
    Rp = [[p[40 + 3 * r + c] for c in range(3)] for r in range(3)]

    # scalar-only prism face centers (hoisted out of the point loop)
    c_in = tuple(pc[i] - 0.5 * thick * pn[i] for i in range(3))
    c_out = tuple(pc[i] + 0.5 * thick * pn[i] for i in range(3))

    # --- small vector helpers over (8, 128) sub-tiles / scalars ---
    def dot3(a, b):
        return a[0] * b[0] + a[1] * b[1] + a[2] * b[2]

    def add3(a, b):
        return (a[0] + b[0], a[1] + b[1], a[2] + b[2])

    def sub3(a, b):
        return (a[0] - b[0], a[1] - b[1], a[2] - b[2])

    def scale3(a, s):
        return (a[0] * s, a[1] * s, a[2] * s)

    def unit3(a):
        inv = jax.lax.rsqrt(dot3(a, a) + 1e-20)
        return scale3(a, inv)

    def matvec3(M, v):
        return tuple(M[r][0] * v[0] + M[r][1] * v[1] + M[r][2] * v[2]
                     for r in range(3))

    def matTvec3(M, v):
        return tuple(M[0][r] * v[0] + M[1][r] * v[1] + M[2][r] * v[2]
                     for r in range(3))

    def approx_recip(x):
        # EUP approximate reciprocal + one Newton step (~f32 accurate)
        r = pl.reciprocal(x, approx=True)
        return r * (2.0 - x * r)

    def safe_recip(x, eps):
        # sign-preserving eps clamp, single shared reciprocal
        sgn = jnp.where(x < 0.0, -1.0, 1.0)
        return sgn * approx_recip(jnp.maximum(jnp.abs(x), eps))

    # --- camera model helpers (normalized coords; shared reciprocals) ---
    def undist_norm(u, v, cx, cy, inv_f, k1, k2, k3):
        x = (u - cx) * inv_f
        y = (v - cy) * inv_f
        r2 = x * x + y * y
        radial = 1.0 + r2 * (k1 + r2 * (k2 + r2 * k3))
        inv_rad = approx_recip(radial)
        return x * inv_rad, y * inv_rad

    def cam0_dir(xn, yn):
        return unit3((xn, yn, 1.0))

    def cam1_dir(xn, yn):
        return unit3(matTvec3(R2, (xn, yn, 1.0)))   # R2^T * d_cam

    # --- ray / triangulation helpers (directions assumed unit) ---
    def closest_point_unit(o1, d1, o2, d2):
        w0 = sub3(o1, o2)
        b = dot3(d1, d2)
        dd = dot3(d1, w0)
        e = dot3(d2, w0)
        inv_denom = safe_recip(1.0 - b * b, 1e-9)
        t1 = (b * e - dd) * inv_denom
        t2 = (e - b * dd) * inv_denom
        p1 = add3(o1, scale3(d1, t1))
        p2 = add3(o2, scale3(d2, t2))
        mid = scale3(add3(p1, p2), 0.5)
        diff = sub3(p1, p2)
        dist = jnp.sqrt(dot3(diff, diff))
        return mid, dist

    def refract(d, n_face, eta):
        # d unit, n_face unit -> output is unit (no re-normalization needed)
        cosi = -dot3(n_face, d)
        sgn = jnp.where(cosi < 0.0, -1.0, 1.0)
        nf = scale3(n_face, sgn)
        cosi = jnp.abs(cosi)
        sin2t = eta * eta * (1.0 - cosi * cosi)
        cost = jnp.sqrt(jnp.maximum(1.0 - sin2t, 0.0))
        return add3(scale3(d, eta), scale3(nf, eta * cosi - cost))

    def plane_intersect(o, d, c, n):
        inv_denom = safe_recip(dot3(n, d), 1e-9)
        t = dot3(n, sub3(c, o)) * inv_denom
        return add3(o, scale3(d, t))

    def prism_pass(o, d):
        p1 = plane_intersect(o, d, c_in, pn)
        d1 = refract(d, pn, inv_n_glass)       # air -> glass
        p2 = plane_intersect(p1, d1, c_out, pn)
        d2 = refract(d1, pn, n_glass)          # glass -> air

        def face_penalty(pt):
            rel = sub3(pt, pc)
            la = Rp[0][0] * rel[0] + Rp[1][0] * rel[1] + Rp[2][0] * rel[2]
            lb = Rp[0][1] * rel[0] + Rp[1][1] * rel[1] + Rp[2][1] * rel[2]
            return (jnp.maximum(jnp.abs(la) - half_a, 0.0)
                    + jnp.maximum(jnp.abs(lb) - half_b, 0.0))

        return p2, d2, face_penalty(p1) + face_penalty(p2)

    # --- reprojection (normalized coords, shared inv_z) + distortion ---
    def reproject_cam0(X):
        inv_z = safe_recip(X[2], 1e-9)
        return X[0] * inv_z, X[1] * inv_z

    def reproject_cam1(X):
        Xc = add3(matvec3(R2, X), T2)
        inv_z = safe_recip(Xc[2], 1e-9)
        return Xc[0] * inv_z, Xc[1] * inv_z

    def distort(xn, yn, cx, cy, f, k1, k2, k3):
        r2 = xn * xn + yn * yn
        radial = 1.0 + r2 * (k1 + r2 * (k2 + r2 * k3))
        xd = xn * radial
        yd = yn * radial
        return xd * f + cx, yd * f + cy, xd, yd

    def dpenalty(xd, yd, k1, k2, k3):
        r2d = xd * xd + yd * yd
        dpen = r2d * (k1 + r2d * (k2 + r2d * k3))
        return dpen * dpen

    nsub = out_ref.shape[1] // SUB

    # --- per-(8,128) sub-tile pipeline: everything stays in vregs ---
    def sub_tile(r, carry):
        base = pl.multiple_of(r * SUB, SUB)

        def ld(ch):
            return pix_ref[ch, pl.ds(base, SUB), :]

        def st(row, v):
            out_ref[row, pl.ds(base, SUB), :] = v

        def write3(row, X):
            st(row, X[0])
            st(row + 1, X[1])
            st(row + 2, X[2])

        u0r, v0r, u1r, v1r = ld(0), ld(1), ld(2), ld(3)
        u0v, v0v, u1v, v1v = ld(4), ld(5), ld(6), ld(7)

        # undistort to normalized camera coordinates
        x0r, y0r = undist_norm(u0r, v0r, cx0, cy0, inv_f0, k01, k02, k03)
        x1r, y1r = undist_norm(u1r, v1r, cx1, cy1, inv_f1, k11, k12, k13)
        x0v, y0v = undist_norm(u0v, v0v, cx0, cy0, inv_f0, k01, k02, k03)
        x1v, y1v = undist_norm(u1v, v1v, cx1, cy1, inv_f1, k11, k12, k13)

        # back-project to world-space unit rays (camera centers are scalars)
        o0 = (0.0, 0.0, 0.0)    # camera 1 at origin
        o1 = ap2                # camera 2 center

        d0_real = cam0_dir(x0r, y0r)
        d1_real = cam1_dir(x1r, y1r)
        d0_virt = cam0_dir(x0v, y0v)
        d1_virt = cam1_dir(x1v, y1v)

        # virtual rays pass through the prism
        e1_o, e1_d, pen1 = prism_pass(o0, d0_virt)
        e2_o, e2_d, pen2 = prism_pass(o1, d1_virt)
        st(35, pen1)
        st(36, pen2)

        # six two-ray triangulations (stored eagerly to limit live vregs)
        recon_real, cd = closest_point_unit(o0, d0_real, o1, d1_real)
        write3(3, recon_real)
        st(21, cd)
        a0, a1, a2 = recon_real

        recon_virt, cd = closest_point_unit(e1_o, e1_d, e2_o, e2_d)
        write3(6, recon_virt)
        st(22, cd)
        a0, a1, a2 = a0 + recon_virt[0], a1 + recon_virt[1], a2 + recon_virt[2]

        r3, cd = closest_point_unit(e1_o, e1_d, o0, d0_real)
        write3(9, r3)
        st(23, cd)
        a0, a1, a2 = a0 + r3[0], a1 + r3[1], a2 + r3[2]

        r3, cd = closest_point_unit(e2_o, e2_d, o1, d1_real)
        write3(12, r3)
        st(24, cd)
        a0, a1, a2 = a0 + r3[0], a1 + r3[1], a2 + r3[2]

        r3, cd = closest_point_unit(e1_o, e1_d, o1, d1_real)
        write3(15, r3)
        st(25, cd)
        a0, a1, a2 = a0 + r3[0], a1 + r3[1], a2 + r3[2]

        r3, cd = closest_point_unit(e2_o, e2_d, o0, d0_real)
        write3(18, r3)
        st(26, cd)
        a0, a1, a2 = a0 + r3[0], a1 + r3[1], a2 + r3[2]

        sixth = 1.0 / 6.0
        recon = (a0 * sixth, a1 * sixth, a2 * sixth)
        write3(0, recon)

        # reprojection + re-distortion + distortion penalties
        xn, yn = reproject_cam0(recon)
        u, v, xd, yd = distort(xn, yn, cx0, cy0, f0, k01, k02, k03)
        st(27, u)
        st(28, v)
        st(37, dpenalty(xd, yd, k01, k02, k03))

        xn, yn = reproject_cam1(recon)
        u, v, xd, yd = distort(xn, yn, cx1, cy1, f1, k11, k12, k13)
        st(29, u)
        st(30, v)
        st(38, dpenalty(xd, yd, k11, k12, k13))

        xn, yn = reproject_cam0(recon_virt)
        u, v, _, _ = distort(xn, yn, cx0, cy0, f0, k01, k02, k03)
        st(31, u)
        st(32, v)

        xn, yn = reproject_cam1(recon_virt)
        u, v, _, _ = distort(xn, yn, cx1, cy1, f1, k11, k12, k13)
        st(33, u)
        st(34, v)

        return carry

    lax.fori_loop(0, nsub, sub_tile, 0)


# ----------------------------------------------------------------------------
# wrapper (module equivalent)
# ----------------------------------------------------------------------------
class ArenaReprojectionLossPallas:
    def __init__(self, pp_cam0, pp_cam1, f_cam0, f_cam1, R_stereo, T_stereo,
                 prism_angles, prism_center, prism_size=(20.0, 20.0, 20.0),
                 refractive_index_glass=1.51):
        self.pp0 = jnp.asarray(pp_cam0, F32).reshape(2)
        self.pp1 = jnp.asarray(pp_cam1, F32).reshape(2)
        self.f0 = jnp.asarray(f_cam0, F32)
        self.f1 = jnp.asarray(f_cam1, F32)
        self.k0 = jnp.zeros((3,), F32)
        self.k1 = jnp.zeros((3,), F32)
        self.T_stereo = jnp.asarray(T_stereo, F32).reshape(3)
        a, b, g = get_stereo_camera_angles(jnp.asarray(R_stereo, F32))
        self.stereo_angles = jnp.stack([a, b, g])
        self.prism_angles = jnp.asarray(prism_angles, F32)
        self.prism_center = jnp.asarray(prism_center, F32).reshape(3)
        self.prism_size = jnp.asarray(prism_size, F32)
        self.n_glass = jnp.asarray(refractive_index_glass, F32)

    def _pack_params(self):
        R2 = get_rot_mat(self.stereo_angles[0], self.stereo_angles[1],
                         self.stereo_angles[2])
        T2 = self.T_stereo
        ap2 = -(R2.T @ T2)                      # camera 2 center in world frame
        Rp = get_rot_mat(self.prism_angles[0], self.prism_angles[1],
                         self.prism_angles[2])
        pn = Rp @ jnp.array([0.0, 0.0, 1.0], F32)
        cam = jnp.stack([
            self.pp0[0], self.pp0[1], self.f0, 1.0 / self.f0,
            self.k0[0], self.k0[1], self.k0[2],
            self.pp1[0], self.pp1[1], self.f1, 1.0 / self.f1,
            self.k1[0], self.k1[1], self.k1[2],
        ])
        prism_scalars = jnp.stack([
            self.prism_size[2], self.prism_size[0] / 2.0,
            self.prism_size[1] / 2.0, self.n_glass, 1.0 / self.n_glass,
        ])
        params = jnp.concatenate([
            cam, R2.reshape(-1), T2, ap2, self.prism_center, pn,
            prism_scalars, Rp.reshape(-1),
        ]).astype(F32)
        return params

    @functools.partial(jax.jit, static_argnums=0)
    def __call__(self, pixels_virtual_two_cams, pixels_real_two_cams):
        pv = pixels_virtual_two_cams.astype(F32)
        pr = pixels_real_two_cams.astype(F32)
        # hstack the two point-grids per camera (matches torch.hstack)
        dr0 = jnp.concatenate([pr[:2, :], pr[2:4, :]], axis=1)
        dr1 = jnp.concatenate([pr[4:6, :], pr[6:, :]], axis=1)
        dv0 = jnp.concatenate([pv[:2, :], pv[2:4, :]], axis=1)
        dv1 = jnp.concatenate([pv[4:6, :], pv[6:, :]], axis=1)
        M = dr0.shape[1]

        # one packed (8, M) pixel slab: [u0r, v0r, u1r, v1r, u0v, v0v, u1v, v1v]
        # TODO(synk): this repack costs one extra HBM round-trip of the inputs;
        # fusing it into the operand fetch would need allow_input_fusion.
        pix = jnp.concatenate([dr0, dr1, dv0, dv1], axis=0)

        # fold points onto (rows, 128) tiles; prefer >=2 grid steps so a v7x
        # megacore can shard the "parallel" axis across both TensorCores.
        R = max(1, -(-M // LANES))
        R8 = -(-R // SUB) * SUB
        if R8 <= SUB:
            TR, grid = SUB, 1
        elif R8 <= 2 * TR_MAX:
            TR = -(-(R8 // SUB) // 2) * SUB
            grid = 2
        else:
            TR = TR_MAX
            grid = -(-R8 // TR)
        R_pad = TR * grid
        M_pad = R_pad * LANES

        pix = jnp.pad(pix, ((0, 0), (0, M_pad - M)))
        pix = pix.reshape(8, R_pad, LANES)

        params = self._pack_params()

        slab = pl.pallas_call(
            _geometry_kernel,
            out_shape=jax.ShapeDtypeStruct((NOUT, R_pad, LANES), F32),
            grid=(grid,),
            in_specs=[
                pl.BlockSpec(memory_space=pltpu.MemorySpace.SMEM),
                pl.BlockSpec((8, TR, LANES), lambda i: (0, i, 0)),
            ],
            out_specs=pl.BlockSpec((NOUT, TR, LANES), lambda i: (0, i, 0)),
            compiler_params=pltpu.CompilerParams(
                dimension_semantics=("parallel",)),
        )(params, pix)

        slab = slab.reshape(NOUT, M_pad)[:, :M]

        recon = slab[0:3]
        recon_real = slab[3:6]
        recon_virt = slab[6:9]
        recon_1 = slab[9:12]
        recon_2 = slab[12:15]
        recon_12 = slab[15:18]
        recon_21 = slab[18:21]
        cd_real, cd_virt = slab[21], slab[22]
        cd_1, cd_2, cd_12, cd_21 = slab[23], slab[24], slab[25], slab[26]
        rp1 = slab[27:29]
        rp2 = slab[29:31]
        rp0v = slab[31:33]
        rp1v = slab[33:35]
        ip1, ip2 = slab[35], slab[36]
        dp0, dp1 = slab[37], slab[38]

        num_points = M // 2
        closest_distance = ((cd_real + cd_virt + cd_1 + cd_2 + cd_12 + cd_21)
                            / 6.0)[:num_points]
        pairwise_distance = jnp.sqrt(
            jnp.sum((recon[:, :num_points] - recon[:, num_points:]) ** 2,
                    axis=0))

        return {
            "recon_3D": recon,
            "recon_3D_real": recon_real,
            "recon_3D_virtual": recon_virt,
            "recon_3D_12": recon_12,
            "recon_3D_21": recon_21,
            "recon_3D_1": recon_1,
            "recon_3D_2": recon_2,
            "closest_distance": closest_distance,
            "closest_distance_real": cd_real,
            "closest_distance_virtual": cd_virt,
            "closest_distance_1": cd_1,
            "closest_distance_2": cd_2,
            "closest_distance_12": cd_12,
            "closest_distance_21": cd_21,
            "recon_pixels_1": rp1,
            "recon_pixels_2": rp2,
            "recon_pixels_0_virtual": rp0v,
            "recon_pixels_1_virtual": rp1v,
            "intersection_penalty_1": ip1,
            "intersection_penalty_2": ip2,
            "distortion_penalty_cam_0": jnp.mean(dp0),
            "distortion_penalty_cam_1": jnp.mean(dp1),
            "pairwise_distance": pairwise_distance,
        }


# ----------------------------------------------------------------------------
# main
# ----------------------------------------------------------------------------
if __name__ == "__main__":
    key = jax.random.PRNGKey(0)
    kv, kr = jax.random.split(key)

    N = 1152  # grid points per pattern half -> M = 2N points per camera
              # (exercises grid=2 steps and the in-kernel 8-row sub-tile loop)

    # 8 rows: (u,v) of pattern A cam0, pattern B cam0, pattern A cam1, pattern B cam1
    pixels_virtual = jax.random.uniform(kv, (8, N), minval=120.0, maxval=520.0,
                                        dtype=F32)
    pixels_real = jax.random.uniform(kr, (8, N), minval=120.0, maxval=520.0,
                                     dtype=F32)

    # deterministic parameter init (synthetic, mirrors module __init__ shapes)
    R_stereo = get_rot_mat(jnp.asarray(0.05, F32), jnp.asarray(0.30, F32),
                           jnp.asarray(-0.02, F32))
    model = ArenaReprojectionLossPallas(
        pp_cam0=(320.0, 240.0),
        pp_cam1=(330.0, 250.0),
        f_cam0=500.0,
        f_cam1=510.0,
        R_stereo=R_stereo,
        T_stereo=(-100.0, 5.0, 10.0),
        prism_angles=(0.10, -0.05, 0.20),
        prism_center=(0.0, 0.0, 50.0),
        prism_size=(20.0, 20.0, 20.0),
        refractive_index_glass=1.51,
    )

    out = model(pixels_virtual, pixels_real)
    out = jax.block_until_ready(out)
    print("KERNEL_OK")
</pallas_src>

<mosaic_0001>
module attributes {stable_mosaic.version = 11 : i64} {
  func.func @_geometry_kernel(%arg0: i32, %arg1: memref<49xf32, #tpu.memory_space<smem>>, %arg2: memref<8x16x128xf32, #tpu.memory_space<vmem>>, %arg3: memref<39x16x128xf32, #tpu.memory_space<vmem>>) attributes {dimension_semantics = [#tpu.dimension_semantics<parallel>], iteration_bounds = array<i64: 2>, scalar_prefetch = 0 : i64, scratch_operands = 0 : i64, tpu.core_type = #tpu.core_type<tc>, window_params = [{transform_indices = @transform_0, window_bounds = array<i64: 49>}, {transform_indices = @transform_1, window_bounds = array<i64: 8, 16, 128>}, {transform_indices = @transform_2, window_bounds = array<i64: 39, 16, 128>}]} {
    %c0 = arith.constant 0 : index
    %0 = memref.load %arg1[%c0] : memref<49xf32, #tpu.memory_space<smem>>
    %c1 = arith.constant 1 : index
    %1 = memref.load %arg1[%c1] : memref<49xf32, #tpu.memory_space<smem>>
    %c2 = arith.constant 2 : index
    %2 = memref.load %arg1[%c2] : memref<49xf32, #tpu.memory_space<smem>>
    %c3 = arith.constant 3 : index
    %3 = memref.load %arg1[%c3] : memref<49xf32, #tpu.memory_space<smem>>
    %c4 = arith.constant 4 : index
    %4 = memref.load %arg1[%c4] : memref<49xf32, #tpu.memory_space<smem>>
    %c5 = arith.constant 5 : index
    %5 = memref.load %arg1[%c5] : memref<49xf32, #tpu.memory_space<smem>>
    %c6 = arith.constant 6 : index
    %6 = memref.load %arg1[%c6] : memref<49xf32, #tpu.memory_space<smem>>
    %c7 = arith.constant 7 : index
    %7 = memref.load %arg1[%c7] : memref<49xf32, #tpu.memory_space<smem>>
    %c8 = arith.constant 8 : index
    %8 = memref.load %arg1[%c8] : memref<49xf32, #tpu.memory_space<smem>>
    %c9 = arith.constant 9 : index
    %9 = memref.load %arg1[%c9] : memref<49xf32, #tpu.memory_space<smem>>
    %c10 = arith.constant 10 : index
    %10 = memref.load %arg1[%c10] : memref<49xf32, #tpu.memory_space<smem>>
    %c11 = arith.constant 11 : index
    %11 = memref.load %arg1[%c11] : memref<49xf32, #tpu.memory_space<smem>>
    %c12 = arith.constant 12 : index
    %12 = memref.load %arg1[%c12] : memref<49xf32, #tpu.memory_space<smem>>
    %c13 = arith.constant 13 : index
    %13 = memref.load %arg1[%c13] : memref<49xf32, #tpu.memory_space<smem>>
    %c14 = arith.constant 14 : index
    %14 = memref.load %arg1[%c14] : memref<49xf32, #tpu.memory_space<smem>>
    %c15 = arith.constant 15 : index
    %15 = memref.load %arg1[%c15] : memref<49xf32, #tpu.memory_space<smem>>
    %c16 = arith.constant 16 : index
    %16 = memref.load %arg1[%c16] : memref<49xf32, #tpu.memory_space<smem>>
    %c17 = arith.constant 17 : index
    %17 = memref.load %arg1[%c17] : memref<49xf32, #tpu.memory_space<smem>>
    %c18 = arith.constant 18 : index
    %18 = memref.load %arg1[%c18] : memref<49xf32, #tpu.memory_space<smem>>
    %c19 = arith.constant 19 : index
    %19 = memref.load %arg1[%c19] : memref<49xf32, #tpu.memory_space<smem>>
    %c20 = arith.constant 20 : index
    %20 = memref.load %arg1[%c20] : memref<49xf32, #tpu.memory_space<smem>>
    %c21 = arith.constant 21 : index
    %21 = memref.load %arg1[%c21] : memref<49xf32, #tpu.memory_space<smem>>
    %c22 = arith.constant 22 : index
    %22 = memref.load %arg1[%c22] : memref<49xf32, #tpu.memory_space<smem>>
    %c23 = arith.constant 23 : index
    %23 = memref.load %arg1[%c23] : memref<49xf32, #tpu.memory_space<smem>>
    %c24 = arith.constant 24 : index
    %24 = memref.load %arg1[%c24] : memref<49xf32, #tpu.memory_space<smem>>
    %c25 = arith.constant 25 : index
    %25 = memref.load %arg1[%c25] : memref<49xf32, #tpu.memory_space<smem>>
    %c26 = arith.constant 26 : index
    %26 = memref.load %arg1[%c26] : memref<49xf32, #tpu.memory_space<smem>>
    %c27 = arith.constant 27 : index
    %27 = memref.load %arg1[%c27] : memref<49xf32, #tpu.memory_space<smem>>
    %c28 = arith.constant 28 : index
    %28 = memref.load %arg1[%c28] : memref<49xf32, #tpu.memory_space<smem>>
    %c29 = arith.constant 29 : index
    %29 = memref.load %arg1[%c29] : memref<49xf32, #tpu.memory_space<smem>>
    %c30 = arith.constant 30 : index
    %30 = memref.load %arg1[%c30] : memref<49xf32, #tpu.memory_space<smem>>
    %c31 = arith.constant 31 : index
    %31 = memref.load %arg1[%c31] : memref<49xf32, #tpu.memory_space<smem>>
    %c32 = arith.constant 32 : index
    %32 = memref.load %arg1[%c32] : memref<49xf32, #tpu.memory_space<smem>>
    %c33 = arith.constant 33 : index
    %33 = memref.load %arg1[%c33] : memref<49xf32, #tpu.memory_space<smem>>
    %c34 = arith.constant 34 : index
    %34 = memref.load %arg1[%c34] : memref<49xf32, #tpu.memory_space<smem>>
    %c35 = arith.constant 35 : index
    %35 = memref.load %arg1[%c35] : memref<49xf32, #tpu.memory_space<smem>>
    %c36 = arith.constant 36 : index
    %36 = memref.load %arg1[%c36] : memref<49xf32, #tpu.memory_space<smem>>
    %c37 = arith.constant 37 : index
    %37 = memref.load %arg1[%c37] : memref<49xf32, #tpu.memory_space<smem>>
    %c38 = arith.constant 38 : index
    %38 = memref.load %arg1[%c38] : memref<49xf32, #tpu.memory_space<smem>>
    %c39 = arith.constant 39 : index
    %39 = memref.load %arg1[%c39] : memref<49xf32, #tpu.memory_space<smem>>
    %c40 = arith.constant 40 : index
    %40 = memref.load %arg1[%c40] : memref<49xf32, #tpu.memory_space<smem>>
    %c41 = arith.constant 41 : index
    %41 = memref.load %arg1[%c41] : memref<49xf32, #tpu.memory_space<smem>>
    %c43 = arith.constant 43 : index
    %42 = memref.load %arg1[%c43] : memref<49xf32, #tpu.memory_space<smem>>
    %c44 = arith.constant 44 : index
    %43 = memref.load %arg1[%c44] : memref<49xf32, #tpu.memory_space<smem>>
    %c46 = arith.constant 46 : index
    %44 = memref.load %arg1[%c46] : memref<49xf32, #tpu.memory_space<smem>>
    %c47 = arith.constant 47 : index
    %45 = memref.load %arg1[%c47] : memref<49xf32, #tpu.memory_space<smem>>
    %cst = arith.constant 5.000000e-01 : f32
    %46 = arith.mulf %cst, %35 : f32
    %47 = arith.mulf %46, %32 : f32
    %48 = arith.subf %29, %47 : f32
    %cst_0 = arith.constant 5.000000e-01 : f32
    %49 = arith.mulf %cst_0, %35 : f32
    %50 = arith.mulf %49, %33 : f32
    %51 = arith.subf %30, %50 : f32
    %cst_1 = arith.constant 5.000000e-01 : f32
    %52 = arith.mulf %cst_1, %35 : f32
    %53 = arith.mulf %52, %34 : f32
    %54 = arith.subf %31, %53 : f32
    %cst_2 = arith.constant 5.000000e-01 : f32
    %55 = arith.mulf %cst_2, %35 : f32
    %56 = arith.mulf %55, %32 : f32
    %57 = arith.addf %29, %56 : f32
    %cst_3 = arith.constant 5.000000e-01 : f32
    %58 = arith.mulf %cst_3, %35 : f32
    %59 = arith.mulf %58, %33 : f32
    %60 = arith.addf %30, %59 : f32
    %cst_4 = arith.constant 5.000000e-01 : f32
    %61 = arith.mulf %cst_4, %35 : f32
    %62 = arith.mulf %61, %34 : f32
    %63 = arith.addf %31, %62 : f32
    %c0_i32 = arith.constant 0 : i32
    %c2_i32 = arith.constant 2 : i32
    %64 = arith.addi %c0_i32, %c2_i32 : i32
    %c1_i32 = arith.constant 1 : i32
    scf.for %arg4 = %c0_i32 to %64 step %c1_i32  : i32 {
      %c8_i32 = arith.constant 8 : i32
      %65 = arith.muli %arg4, %c8_i32 : i32
      %66 = tpu.assume_multiple %65, 8 : i32
      %c0_6 = arith.constant 0 : index
      %67 = arith.index_cast %66 : i32 to index
      %c0_7 = arith.constant 0 : index
      %68 = vector.load %arg2[%c0_6, %67, %c0_7] : memref<8x16x128xf32, #tpu.memory_space<vmem>>, vector<1x8x128xf32>
      %69 = vector.shape_cast %68 : vector<1x8x128xf32> to vector<8x128xf32>
      %c1_8 = arith.constant 1 : index
      %70 = arith.index_cast %66 : i32 to index
      %c0_9 = arith.constant 0 : index
      %71 = vector.load %arg2[%c1_8, %70, %c0_9] : memref<8x16x128xf32, #tpu.memory_space<vmem>>, vector<1x8x128xf32>
      %72 = vector.shape_cast %71 : vector<1x8x128xf32> to vector<8x128xf32>
      %c2_10 = arith.constant 2 : index
      %73 = arith.index_cast %66 : i32 to index
      %c0_11 = arith.constant 0 : index
      %74 = vector.load %arg2[%c2_10, %73, %c0_11] : memref<8x16x128xf32, #tpu.memory_space<vmem>>, vector<1x8x128xf32>
      %75 = vector.shape_cast %74 : vector<1x8x128xf32> to vector<8x128xf32>
      %c3_12 = arith.constant 3 : index
      %76 = arith.index_cast %66 : i32 to index
      %c0_13 = arith.constant 0 : index
      %77 = vector.load %arg2[%c3_12, %76, %c0_13] : memref<8x16x128xf32, #tpu.memory_space<vmem>>, vector<1x8x128xf32>
      %78 = vector.shape_cast %77 : vector<1x8x128xf32> to vector<8x128xf32>
      %c4_14 = arith.constant 4 : index
      %79 = arith.index_cast %66 : i32 to index
      %c0_15 = arith.constant 0 : index
      %80 = vector.load %arg2[%c4_14, %79, %c0_15] : memref<8x16x128xf32, #tpu.memory_space<vmem>>, vector<1x8x128xf32>
      %81 = vector.shape_cast %80 : vector<1x8x128xf32> to vector<8x128xf32>
      %c5_16 = arith.constant 5 : index
      %82 = arith.index_cast %66 : i32 to index
      %c0_17 = arith.constant 0 : index
      %83 = vector.load %arg2[%c5_16, %82, %c0_17] : memref<8x16x128xf32, #tpu.memory_space<vmem>>, vector<1x8x128xf32>
      %84 = vector.shape_cast %83 : vector<1x8x128xf32> to vector<8x128xf32>
      %c6_18 = arith.constant 6 : index
      %85 = arith.index_cast %66 : i32 to index
      %c0_19 = arith.constant 0 : index
      %86 = vector.load %arg2[%c6_18, %85, %c0_19] : memref<8x16x128xf32, #tpu.memory_space<vmem>>, vector<1x8x128xf32>
      %87 = vector.shape_cast %86 : vector<1x8x128xf32> to vector<8x128xf32>
      %c7_20 = arith.constant 7 : index
      %88 = arith.index_cast %66 : i32 to index
      %c0_21 = arith.constant 0 : index
      %89 = vector.load %arg2[%c7_20, %88, %c0_21] : memref<8x16x128xf32, #tpu.memory_space<vmem>>, vector<1x8x128xf32>
      %90 = vector.shape_cast %89 : vector<1x8x128xf32> to vector<8x128xf32>
      %91 = vector.broadcast %0 : f32 to vector<8x128xf32>
      %92 = arith.subf %69, %91 : vector<8x128xf32>
      %93 = vector.broadcast %3 : f32 to vector<8x128xf32>
      %94 = arith.mulf %92, %93 : vector<8x128xf32>
      %95 = vector.broadcast %1 : f32 to vector<8x128xf32>
      %96 = arith.subf %72, %95 : vector<8x128xf32>
      %97 = vector.broadcast %3 : f32 to vector<8x128xf32>
      %98 = arith.mulf %96, %97 : vector<8x128xf32>
      %99 = arith.mulf %94, %94 : vector<8x128xf32>
      %100 = arith.mulf %98, %98 : vector<8x128xf32>
      %101 = arith.addf %99, %100 : vector<8x128xf32>
      %102 = vector.broadcast %6 : f32 to vector<8x128xf32>
      %103 = arith.mulf %101, %102 : vector<8x128xf32>
      %104 = vector.broadcast %5 : f32 to vector<8x128xf32>
      %105 = arith.addf %104, %103 : vector<8x128xf32>
      %106 = arith.mulf %101, %105 : vector<8x128xf32>
      %107 = vector.broadcast %4 : f32 to vector<8x128xf32>
      %108 = arith.addf %107, %106 : vector<8x128xf32>
      %109 = arith.mulf %101, %108 : vector<8x128xf32>
      %cst_22 = arith.constant 1.000000e+00 : f32
      %110 = vector.broadcast %cst_22 : f32 to vector<8x128xf32>
      %111 = arith.addf %110, %109 : vector<8x128xf32>
      %112 = tpu.reciprocal %111 {approx = true} : vector<8x128xf32> -> vector<8x128xf32>
      %113 = arith.mulf %111, %112 : vector<8x128xf32>
      %cst_23 = arith.constant 2.000000e+00 : f32
      %114 = vector.broadcast %cst_23 : f32 to vector<8x128xf32>
      %115 = arith.subf %114, %113 : vector<8x128xf32>
      %116 = arith.mulf %112, %115 : vector<8x128xf32>
      %117 = arith.mulf %94, %116 : vector<8x128xf32>
      %118 = arith.mulf %98, %116 : vector<8x128xf32>
      %119 = vector.broadcast %7 : f32 to vector<8x128xf32>
      %120 = arith.subf %75, %119 : vector<8x128xf32>
      %121 = vector.broadcast %10 : f32 to vector<8x128xf32>
      %122 = arith.mulf %120, %121 : vector<8x128xf32>
      %123 = vector.broadcast %8 : f32 to vector<8x128xf32>
      %124 = arith.subf %78, %123 : vector<8x128xf32>
      %125 = vector.broadcast %10 : f32 to vector<8x128xf32>
      %126 = arith.mulf %124, %125 : vector<8x128xf32>
      %127 = arith.mulf %122, %122 : vector<8x128xf32>
      %128 = arith.mulf %126, %126 : vector<8x128xf32>
      %129 = arith.addf %127, %128 : vector<8x128xf32>
      %130 = vector.broadcast %13 : f32 to vector<8x128xf32>
      %131 = arith.mulf %129, %130 : vector<8x128xf32>
      %132 = vector.broadcast %12 : f32 to vector<8x128xf32>
      %133 = arith.addf %132, %131 : vector<8x128xf32>
      %134 = arith.mulf %129, %133 : vector<8x128xf32>
      %135 = vector.broadcast %11 : f32 to vector<8x128xf32>
      %136 = arith.addf %135, %134 : vector<8x128xf32>
      %137 = arith.mulf %129, %136 : vector<8x128xf32>
      %cst_24 = arith.constant 1.000000e+00 : f32
      %138 = vector.broadcast %cst_24 : f32 to vector<8x128xf32>
      %139 = arith.addf %138, %137 : vector<8x128xf32>
      %140 = tpu.reciprocal %139 {approx = true} : vector<8x128xf32> -> vector<8x128xf32>
      %141 = arith.mulf %139, %140 : vector<8x128xf32>
      %cst_25 = arith.constant 2.000000e+00 : f32
      %142 = vector.broadcast %cst_25 : f32 to vector<8x128xf32>
      %143 = arith.subf %142, %141 : vector<8x128xf32>
      %144 = arith.mulf %140, %143 : vector<8x128xf32>
      %145 = arith.mulf %122, %144 : vector<8x128xf32>
      %146 = arith.mulf %126, %144 : vector<8x128xf32>
      %147 = vector.broadcast %0 : f32 to vector<8x128xf32>
      %148 = arith.subf %81, %147 : vector<8x128xf32>
      %149 = vector.broadcast %3 : f32 to vector<8x128xf32>
      %150 = arith.mulf %148, %149 : vector<8x128xf32>
      %151 = vector.broadcast %1 : f32 to vector<8x128xf32>
      %152 = arith.subf %84, %151 : vector<8x128xf32>
      %153 = vector.broadcast %3 : f32 to vector<8x128xf32>
      %154 = arith.mulf %152, %153 : vector<8x128xf32>
      %155 = arith.mulf %150, %150 : vector<8x128xf32>
      %156 = arith.mulf %154, %154 : vector<8x128xf32>
      %157 = arith.addf %155, %156 : vector<8x128xf32>
      %158 = vector.broadcast %6 : f32 to vector<8x128xf32>
      %159 = arith.mulf %157, %158 : vector<8x128xf32>
      %160 = vector.broadcast %5 : f32 to vector<8x128xf32>
      %161 = arith.addf %160, %159 : vector<8x128xf32>
      %162 = arith.mulf %157, %161 : vector<8x128xf32>
      %163 = vector.broadcast %4 : f32 to vector<8x128xf32>
      %164 = arith.addf %163, %162 : vector<8x128xf32>
      %165 = arith.mulf %157, %164 : vector<8x128xf32>
      %cst_26 = arith.constant 1.000000e+00 : f32
      %166 = vector.broadcast %cst_26 : f32 to vector<8x128xf32>
      %167 = arith.addf %166, %165 : vector<8x128xf32>
      %168 = tpu.reciprocal %167 {approx = true} : vector<8x128xf32> -> vector<8x128xf32>
      %169 = arith.mulf %167, %168 : vector<8x128xf32>
      %cst_27 = arith.constant 2.000000e+00 : f32
      %170 = vector.broadcast %cst_27 : f32 to vector<8x128xf32>
      %171 = arith.subf %170, %169 : vector<8x128xf32>
      %172 = arith.mulf %168, %171 : vector<8x128xf32>
      %173 = arith.mulf %150, %172 : vector<8x128xf32>
      %174 = arith.mulf %154, %172 : vector<8x128xf32>
      %175 = vector.broadcast %7 : f32 to vector<8x128xf32>
      %176 = arith.subf %87, %175 : vector<8x128xf32>
      %177 = vector.broadcast %10 : f32 to vector<8x128xf32>
      %178 = arith.mulf %176, %177 : vector<8x128xf32>
      %179 = vector.broadcast %8 : f32 to vector<8x128xf32>
      %180 = arith.subf %90, %179 : vector<8x128xf32>
      %181 = vector.broadcast %10 : f32 to vector<8x128xf32>
      %182 = arith.mulf %180, %181 : vector<8x128xf32>
      %183 = arith.mulf %178, %178 : vector<8x128xf32>
      %184 = arith.mulf %182, %182 : vector<8x128xf32>
      %185 = arith.addf %183, %184 : vector<8x128xf32>
      %186 = vector.broadcast %13 : f32 to vector<8x128xf32>
      %187 = arith.mulf %185, %186 : vector<8x128xf32>
      %188 = vector.broadcast %12 : f32 to vector<8x128xf32>
      %189 = arith.addf %188, %187 : vector<8x128xf32>
      %190 = arith.mulf %185, %189 : vector<8x128xf32>
      %191 = vector.broadcast %11 : f32 to vector<8x128xf32>
      %192 = arith.addf %191, %190 : vector<8x128xf32>
      %193 = arith.mulf %185, %192 : vector<8x128xf32>
      %cst_28 = arith.constant 1.000000e+00 : f32
      %194 = vector.broadcast %cst_28 : f32 to vector<8x128xf32>
      %195 = arith.addf %194, %193 : vector<8x128xf32>
      %196 = tpu.reciprocal %195 {approx = true} : vector<8x128xf32> -> vector<8x128xf32>
      %197 = arith.mulf %195, %196 : vector<8x128xf32>
      %cst_29 = arith.constant 2.000000e+00 : f32
      %198 = vector.broadcast %cst_29 : f32 to vector<8x128xf32>
      %199 = arith.subf %198, %197 : vector<8x128xf32>
      %200 = arith.mulf %196, %199 : vector<8x128xf32>
      %201 = arith.mulf %178, %200 : vector<8x128xf32>
      %202 = arith.mulf %182, %200 : vector<8x128xf32>
      %203 = arith.mulf %117, %117 : vector<8x128xf32>
      %204 = arith.mulf %118, %118 : vector<8x128xf32>
      %205 = arith.addf %203, %204 : vector<8x128xf32>
      %cst_30 = arith.constant 1.000000e+00 : f32
      %206 = vector.broadcast %cst_30 : f32 to vector<8x128xf32>
      %207 = arith.addf %205, %206 : vector<8x128xf32>
      %cst_31 = arith.constant 9.99999968E-21 : f32
      %208 = vector.broadcast %cst_31 : f32 to vector<8x128xf32>
      %209 = arith.addf %207, %208 : vector<8x128xf32>
      %210 = math.rsqrt %209 : vector<8x128xf32>
      %211 = arith.mulf %117, %210 : vector<8x128xf32>
      %212 = arith.mulf %118, %210 : vector<8x128xf32>
      %cst_32 = arith.constant 1.000000e+00 : f32
      %213 = vector.broadcast %cst_32 : f32 to vector<8x128xf32>
      %214 = arith.mulf %213, %210 : vector<8x128xf32>
      %215 = vector.broadcast %14 : f32 to vector<8x128xf32>
      %216 = arith.mulf %215, %145 : vector<8x128xf32>
      %217 = vector.broadcast %17 : f32 to vector<8x128xf32>
      %218 = arith.mulf %217, %146 : vector<8x128xf32>
      %219 = arith.addf %216, %218 : vector<8x128xf32>
      %cst_33 = arith.constant 1.000000e+00 : f32
      %220 = arith.mulf %20, %cst_33 : f32
      %221 = vector.broadcast %220 : f32 to vector<8x128xf32>
      %222 = arith.addf %219, %221 : vector<8x128xf32>
      %223 = vector.broadcast %15 : f32 to vector<8x128xf32>
      %224 = arith.mulf %223, %145 : vector<8x128xf32>
      %225 = vector.broadcast %18 : f32 to vector<8x128xf32>
      %226 = arith.mulf %225, %146 : vector<8x128xf32>
      %227 = arith.addf %224, %226 : vector<8x128xf32>
      %cst_34 = arith.constant 1.000000e+00 : f32
      %228 = arith.mulf %21, %cst_34 : f32
      %229 = vector.broadcast %228 : f32 to vector<8x128xf32>
      %230 = arith.addf %227, %229 : vector<8x128xf32>
      %231 = vector.broadcast %16 : f32 to vector<8x128xf32>
      %232 = arith.mulf %231, %145 : vector<8x128xf32>
      %233 = vector.broadcast %19 : f32 to vector<8x128xf32>
      %234 = arith.mulf %233, %146 : vector<8x128xf32>
      %235 = arith.addf %232, %234 : vector<8x128xf32>
      %cst_35 = arith.constant 1.000000e+00 : f32
      %236 = arith.mulf %22, %cst_35 : f32
      %237 = vector.broadcast %236 : f32 to vector<8x128xf32>
      %238 = arith.addf %235, %237 : vector<8x128xf32>
      %239 = arith.mulf %222, %222 : vector<8x128xf32>
      %240 = arith.mulf %230, %230 : vector<8x128xf32>
      %241 = arith.addf %239, %240 : vector<8x128xf32>
      %242 = arith.mulf %238, %238 : vector<8x128xf32>
      %243 = arith.addf %241, %242 : vector<8x128xf32>
      %cst_36 = arith.constant 9.99999968E-21 : f32
      %244 = vector.broadcast %cst_36 : f32 to vector<8x128xf32>
      %245 = arith.addf %243, %244 : vector<8x128xf32>
      %246 = math.rsqrt %245 : vector<8x128xf32>
      %247 = arith.mulf %222, %246 : vector<8x128xf32>
      %248 = arith.mulf %230, %246 : vector<8x128xf32>
      %249 = arith.mulf %238, %246 : vector<8x128xf32>
      %250 = arith.mulf %173, %173 : vector<8x128xf32>
      %251 = arith.mulf %174, %174 : vector<8x128xf32>
      %252 = arith.addf %250, %251 : vector<8x128xf32>
      %cst_37 = arith.constant 1.000000e+00 : f32
      %253 = vector.broadcast %cst_37 : f32 to vector<8x128xf32>
      %254 = arith.addf %252, %253 : vector<8x128xf32>
      %cst_38 = arith.constant 9.99999968E-21 : f32
      %255 = vector.broadcast %cst_38 : f32 to vector<8x128xf32>
      %256 = arith.addf %254, %255 : vector<8x128xf32>
      %257 = math.rsqrt %256 : vector<8x128xf32>
      %258 = arith.mulf %173, %257 : vector<8x128xf32>
      %259 = arith.mulf %174, %257 : vector<8x128xf32>
      %cst_39 = arith.constant 1.000000e+00 : f32
      %260 = vector.broadcast %cst_39 : f32 to vector<8x128xf32>
      %261 = arith.mulf %260, %257 : vector<8x128xf32>
      %262 = vector.broadcast %14 : f32 to vector<8x128xf32>
      %263 = arith.mulf %262, %201 : vector<8x128xf32>
      %264 = vector.broadcast %17 : f32 to vector<8x128xf32>
      %265 = arith.mulf %264, %202 : vector<8x128xf32>
      %266 = arith.addf %263, %265 : vector<8x128xf32>
      %cst_40 = arith.constant 1.000000e+00 : f32
      %267 = arith.mulf %20, %cst_40 : f32
      %268 = vector.broadcast %267 : f32 to vector<8x128xf32>
      %269 = arith.addf %266, %268 : vector<8x128xf32>
      %270 = vector.broadcast %15 : f32 to vector<8x128xf32>
      %271 = arith.mulf %270, %201 : vector<8x128xf32>
      %272 = vector.broadcast %18 : f32 to vector<8x128xf32>
      %273 = arith.mulf %272, %202 : vector<8x128xf32>
      %274 = arith.addf %271, %273 : vector<8x128xf32>
      %cst_41 = arith.constant 1.000000e+00 : f32
      %275 = arith.mulf %21, %cst_41 : f32
      %276 = vector.broadcast %275 : f32 to vector<8x128xf32>
      %277 = arith.addf %274, %276 : vector<8x128xf32>
      %278 = vector.broadcast %16 : f32 to vector<8x128xf32>
      %279 = arith.mulf %278, %201 : vector<8x128xf32>
      %280 = vector.broadcast %19 : f32 to vector<8x128xf32>
      %281 = arith.mulf %280, %202 : vector<8x128xf32>
      %282 = arith.addf %279, %281 : vector<8x128xf32>
      %cst_42 = arith.constant 1.000000e+00 : f32
      %283 = arith.mulf %22, %cst_42 : f32
      %284 = vector.broadcast %283 : f32 to vector<8x128xf32>
      %285 = arith.addf %282, %284 : vector<8x128xf32>
      %286 = arith.mulf %269, %269 : vector<8x128xf32>
      %287 = arith.mulf %277, %277 : vector<8x128xf32>
      %288 = arith.addf %286, %287 : vector<8x128xf32>
      %289 = arith.mulf %285, %285 : vector<8x128xf32>
      %290 = arith.addf %288, %289 : vector<8x128xf32>
      %cst_43 = arith.constant 9.99999968E-21 : f32
      %291 = vector.broadcast %cst_43 : f32 to vector<8x128xf32>
      %292 = arith.addf %290, %291 : vector<8x128xf32>
      %293 = math.rsqrt %292 : vector<8x128xf32>
      %294 = arith.mulf %269, %293 : vector<8x128xf32>
      %295 = arith.mulf %277, %293 : vector<8x128xf32>
      %296 = arith.mulf %285, %293 : vector<8x128xf32>
      %297 = vector.broadcast %32 : f32 to vector<8x128xf32>
      %298 = arith.mulf %297, %258 : vector<8x128xf32>
      %299 = vector.broadcast %33 : f32 to vector<8x128xf32>
      %300 = arith.mulf %299, %259 : vector<8x128xf32>
      %301 = arith.addf %298, %300 : vector<8x128xf32>
      %302 = vector.broadcast %34 : f32 to vector<8x128xf32>
      %303 = arith.mulf %302, %261 : vector<8x128xf32>
      %304 = arith.addf %301, %303 : vector<8x128xf32>
      %cst_44 = arith.constant 0.000000e+00 : f32
      %305 = vector.broadcast %cst_44 : f32 to vector<8x128xf32>
      %306 = arith.cmpf olt, %304, %305 : vector<8x128xf32>
      %cst_45 = arith.constant -1.000000e+00 : f32
      %cst_46 = arith.constant 1.000000e+00 : f32
      %307 = vector.broadcast %cst_45 : f32 to vector<8x128xf32>
      %308 = vector.broadcast %cst_46 : f32 to vector<8x128xf32>
      %309 = arith.select %306, %307, %308 : vector<8x128xi1>, vector<8x128xf32>
      %310 = math.absf %304 : vector<8x128xf32>
      %cst_47 = arith.constant 9.99999971E-10 : f32
      %311 = vector.broadcast %cst_47 : f32 to vector<8x128xf32>
      %312 = arith.maximumf %310, %311 : vector<8x128xf32>
      %313 = tpu.reciprocal %312 {approx = true} : vector<8x128xf32> -> vector<8x128xf32>
      %314 = arith.mulf %312, %313 : vector<8x128xf32>
      %cst_48 = arith.constant 2.000000e+00 : f32
      %315 = vector.broadcast %cst_48 : f32 to vector<8x128xf32>
      %316 = arith.subf %315, %314 : vector<8x128xf32>
      %317 = arith.mulf %313, %316 : vector<8x128xf32>
      %318 = arith.mulf %309, %317 : vector<8x128xf32>
      %cst_49 = arith.constant 0.000000e+00 : f32
      %319 = arith.subf %48, %cst_49 : f32
      %cst_50 = arith.constant 0.000000e+00 : f32
      %320 = arith.subf %51, %cst_50 : f32
      %cst_51 = arith.constant 0.000000e+00 : f32
      %321 = arith.subf %54, %cst_51 : f32
      %322 = arith.mulf %32, %319 : f32
      %323 = arith.mulf %33, %320 : f32
      %324 = arith.addf %322, %323 : f32
      %325 = arith.mulf %34, %321 : f32
      %326 = arith.addf %324, %325 : f32
      %327 = vector.broadcast %326 : f32 to vector<8x128xf32>
      %328 = arith.mulf %327, %318 : vector<8x128xf32>
      %329 = arith.mulf %258, %328 : vector<8x128xf32>
      %330 = arith.mulf %259, %328 : vector<8x128xf32>
      %331 = arith.mulf %261, %328 : vector<8x128xf32>
      %cst_52 = arith.constant 0.000000e+00 : f32
      %332 = vector.broadcast %cst_52 : f32 to vector<8x128xf32>
      %333 = arith.addf %332, %329 : vector<8x128xf32>
      %cst_53 = arith.constant 0.000000e+00 : f32
      %334 = vector.broadcast %cst_53 : f32 to vector<8x128xf32>
      %335 = arith.addf %334, %330 : vector<8x128xf32>
      %cst_54 = arith.constant 0.000000e+00 : f32
      %336 = vector.broadcast %cst_54 : f32 to vector<8x128xf32>
      %337 = arith.addf %336, %331 : vector<8x128xf32>
      %338 = vector.broadcast %32 : f32 to vector<8x128xf32>
      %339 = arith.mulf %338, %258 : vector<8x128xf32>
      %340 = vector.broadcast %33 : f32 to vector<8x128xf32>
      %341 = arith.mulf %340, %259 : vector<8x128xf32>
      %342 = arith.addf %339, %341 : vector<8x128xf32>
      %343 = vector.broadcast %34 : f32 to vector<8x128xf32>
      %344 = arith.mulf %343, %261 : vector<8x128xf32>
      %345 = arith.addf %342, %344 : vector<8x128xf32>
      %cst_55 = arith.constant 0.000000e+00 : f32
      %346 = vector.broadcast %cst_55 : f32 to vector<8x128xf32>
      %347 = arith.subf %346, %345 : vector<8x128xf32>
      %cst_56 = arith.constant 0.000000e+00 : f32
      %348 = vector.broadcast %cst_56 : f32 to vector<8x128xf32>
      %349 = arith.cmpf olt, %347, %348 : vector<8x128xf32>
      %cst_57 = arith.constant -1.000000e+00 : f32
      %cst_58 = arith.constant 1.000000e+00 : f32
      %350 = vector.broadcast %cst_57 : f32 to vector<8x128xf32>
      %351 = vector.broadcast %cst_58 : f32 to vector<8x128xf32>
      %352 = arith.select %349, %350, %351 : vector<8x128xi1>, vector<8x128xf32>
      %353 = vector.broadcast %32 : f32 to vector<8x128xf32>
      %354 = arith.mulf %353, %352 : vector<8x128xf32>
      %355 = vector.broadcast %33 : f32 to vector<8x128xf32>
      %356 = arith.mulf %355, %352 : vector<8x128xf32>
      %357 = vector.broadcast %34 : f32 to vector<8x128xf32>
      %358 = arith.mulf %357, %352 : vector<8x128xf32>
      %359 = math.absf %347 : vector<8x128xf32>
      %360 = arith.mulf %39, %39 : f32
      %361 = arith.mulf %359, %359 : vector<8x128xf32>
      %cst_59 = arith.constant 1.000000e+00 : f32
      %362 = vector.broadcast %cst_59 : f32 to vector<8x128xf32>
      %363 = arith.subf %362, %361 : vector<8x128xf32>
      %364 = vector.broadcast %360 : f32 to vector<8x128xf32>
      %365 = arith.mulf %364, %363 : vector<8x128xf32>
      %cst_60 = arith.constant 1.000000e+00 : f32
      %366 = vector.broadcast %cst_60 : f32 to vector<8x128xf32>
      %367 = arith.subf %366, %365 : vector<8x128xf32>
      %cst_61 = arith.constant 0.000000e+00 : f32
      %368 = vector.broadcast %cst_61 : f32 to vector<8x128xf32>
      %369 = arith.maximumf %367, %368 : vector<8x128xf32>
      %370 = math.sqrt %369 : vector<8x128xf32>
      %371 = vector.broadcast %39 : f32 to vector<8x128xf32>
      %372 = arith.mulf %258, %371 : vector<8x128xf32>
      %373 = vector.broadcast %39 : f32 to vector<8x128xf32>
      %374 = arith.mulf %259, %373 : vector<8x128xf32>
      %375 = vector.broadcast %39 : f32 to vector<8x128xf32>
      %376 = arith.mulf %261, %375 : vector<8x128xf32>
      %377 = vector.broadcast %39 : f32 to vector<8x128xf32>
      %378 = arith.mulf %377, %359 : vector<8x128xf32>
      %379 = arith.subf %378, %370 : vector<8x128xf32>
      %380 = arith.mulf %354, %379 : vector<8x128xf32>
      %381 = arith.mulf %356, %379 : vector<8x128xf32>
      %382 = arith.mulf %358, %379 : vector<8x128xf32>
      %383 = arith.addf %372, %380 : vector<8x128xf32>
      %384 = arith.addf %374, %381 : vector<8x128xf32>
      %385 = arith.addf %376, %382 : vector<8x128xf32>
      %386 = vector.broadcast %32 : f32 to vector<8x128xf32>
      %387 = arith.mulf %386, %383 : vector<8x128xf32>
      %388 = vector.broadcast %33 : f32 to vector<8x128xf32>
      %389 = arith.mulf %388, %384 : vector<8x128xf32>
      %390 = arith.addf %387, %389 : vector<8x128xf32>
      %391 = vector.broadcast %34 : f32 to vector<8x128xf32>
      %392 = arith.mulf %391, %385 : vector<8x128xf32>
      %393 = arith.addf %390, %392 : vector<8x128xf32>
      %cst_62 = arith.constant 0.000000e+00 : f32
      %394 = vector.broadcast %cst_62 : f32 to vector<8x128xf32>
      %395 = arith.cmpf olt, %393, %394 : vector<8x128xf32>
      %cst_63 = arith.constant -1.000000e+00 : f32
      %cst_64 = arith.constant 1.000000e+00 : f32
      %396 = vector.broadcast %cst_63 : f32 to vector<8x128xf32>
      %397 = vector.broadcast %cst_64 : f32 to vector<8x128xf32>
      %398 = arith.select %395, %396, %397 : vector<8x128xi1>, vector<8x128xf32>
      %399 = math.absf %393 : vector<8x128xf32>
      %cst_65 = arith.constant 9.99999971E-10 : f32
      %400 = vector.broadcast %cst_65 : f32 to vector<8x128xf32>
      %401 = arith.maximumf %399, %400 : vector<8x128xf32>
      %402 = tpu.reciprocal %401 {approx = true} : vector<8x128xf32> -> vector<8x128xf32>
      %403 = arith.mulf %401, %402 : vector<8x128xf32>
      %cst_66 = arith.constant 2.000000e+00 : f32
      %404 = vector.broadcast %cst_66 : f32 to vector<8x128xf32>
      %405 = arith.subf %404, %403 : vector<8x128xf32>
      %406 = arith.mulf %402, %405 : vector<8x128xf32>
      %407 = arith.mulf %398, %406 : vector<8x128xf32>
      %408 = vector.broadcast %57 : f32 to vector<8x128xf32>
      %409 = arith.subf %408, %333 : vector<8x128xf32>
      %410 = vector.broadcast %60 : f32 to vector<8x128xf32>
      %411 = arith.subf %410, %335 : vector<8x128xf32>
      %412 = vector.broadcast %63 : f32 to vector<8x128xf32>
      %413 = arith.subf %412, %337 : vector<8x128xf32>
      %414 = vector.broadcast %32 : f32 to vector<8x128xf32>
      %415 = arith.mulf %414, %409 : vector<8x128xf32>
      %416 = vector.broadcast %33 : f32 to vector<8x128xf32>
      %417 = arith.mulf %416, %411 : vector<8x128xf32>
      %418 = arith.addf %415, %417 : vector<8x128xf32>
      %419 = vector.broadcast %34 : f32 to vector<8x128xf32>
      %420 = arith.mulf %419, %413 : vector<8x128xf32>
      %421 = arith.addf %418, %420 : vector<8x128xf32>
      %422 = arith.mulf %421, %407 : vector<8x128xf32>
      %423 = arith.mulf %383, %422 : vector<8x128xf32>
      %424 = arith.mulf %384, %422 : vector<8x128xf32>
      %425 = arith.mulf %385, %422 : vector<8x128xf32>
      %426 = arith.addf %333, %423 : vector<8x128xf32>
      %427 = arith.addf %335, %424 : vector<8x128xf32>
      %428 = arith.addf %337, %425 : vector<8x128xf32>
      %429 = vector.broadcast %32 : f32 to vector<8x128xf32>
      %430 = arith.mulf %429, %383 : vector<8x128xf32>
      %431 = vector.broadcast %33 : f32 to vector<8x128xf32>
      %432 = arith.mulf %431, %384 : vector<8x128xf32>
      %433 = arith.addf %430, %432 : vector<8x128xf32>
      %434 = vector.broadcast %34 : f32 to vector<8x128xf32>
      %435 = arith.mulf %434, %385 : vector<8x128xf32>
      %436 = arith.addf %433, %435 : vector<8x128xf32>
      %cst_67 = arith.constant 0.000000e+00 : f32
      %437 = vector.broadcast %cst_67 : f32 to vector<8x128xf32>
      %438 = arith.subf %437, %436 : vector<8x128xf32>
      %cst_68 = arith.constant 0.000000e+00 : f32
      %439 = vector.broadcast %cst_68 : f32 to vector<8x128xf32>
      %440 = arith.cmpf olt, %438, %439 : vector<8x128xf32>
      %cst_69 = arith.constant -1.000000e+00 : f32
      %cst_70 = arith.constant 1.000000e+00 : f32
      %441 = vector.broadcast %cst_69 : f32 to vector<8x128xf32>
      %442 = vector.broadcast %cst_70 : f32 to vector<8x128xf32>
      %443 = arith.select %440, %441, %442 : vector<8x128xi1>, vector<8x128xf32>
      %444 = vector.broadcast %32 : f32 to vector<8x128xf32>
      %445 = arith.mulf %444, %443 : vector<8x128xf32>
      %446 = vector.broadcast %33 : f32 to vector<8x128xf32>
      %447 = arith.mulf %446, %443 : vector<8x128xf32>
      %448 = vector.broadcast %34 : f32 to vector<8x128xf32>
      %449 = arith.mulf %448, %443 : vector<8x128xf32>
      %450 = math.absf %438 : vector<8x128xf32>
      %451 = arith.mulf %38, %38 : f32
      %452 = arith.mulf %450, %450 : vector<8x128xf32>
      %cst_71 = arith.constant 1.000000e+00 : f32
      %453 = vector.broadcast %cst_71 : f32 to vector<8x128xf32>
      %454 = arith.subf %453, %452 : vector<8x128xf32>
      %455 = vector.broadcast %451 : f32 to vector<8x128xf32>
      %456 = arith.mulf %455, %454 : vector<8x128xf32>
      %cst_72 = arith.constant 1.000000e+00 : f32
      %457 = vector.broadcast %cst_72 : f32 to vector<8x128xf32>
      %458 = arith.subf %457, %456 : vector<8x128xf32>
      %cst_73 = arith.constant 0.000000e+00 : f32
      %459 = vector.broadcast %cst_73 : f32 to vector<8x128xf32>
      %460 = arith.maximumf %458, %459 : vector<8x128xf32>
      %461 = math.sqrt %460 : vector<8x128xf32>
      %462 = vector.broadcast %38 : f32 to vector<8x128xf32>
      %463 = arith.mulf %383, %462 : vector<8x128xf32>
      %464 = vector.broadcast %38 : f32 to vector<8x128xf32>
      %465 = arith.mulf %384, %464 : vector<8x128xf32>
      %466 = vector.broadcast %38 : f32 to vector<8x128xf32>
      %467 = arith.mulf %385, %466 : vector<8x128xf32>
      %468 = vector.broadcast %38 : f32 to vector<8x128xf32>
      %469 = arith.mulf %468, %450 : vector<8x128xf32>
      %470 = arith.subf %469, %461 : vector<8x128xf32>
      %471 = arith.mulf %445, %470 : vector<8x128xf32>
      %472 = arith.mulf %447, %470 : vector<8x128xf32>
      %473 = arith.mulf %449, %470 : vector<8x128xf32>
      %474 = arith.addf %463, %471 : vector<8x128xf32>
      %475 = arith.addf %465, %472 : vector<8x128xf32>
      %476 = arith.addf %467, %473 : vector<8x128xf32>
      %477 = vector.broadcast %29 : f32 to vector<8x128xf32>
      %478 = arith.subf %333, %477 : vector<8x128xf32>
      %479 = vector.broadcast %30 : f32 to vector<8x128xf32>
      %480 = arith.subf %335, %479 : vector<8x128xf32>
      %481 = vector.broadcast %31 : f32 to vector<8x128xf32>
      %482 = arith.subf %337, %481 : vector<8x128xf32>
      %483 = vector.broadcast %40 : f32 to vector<8x128xf32>
      %484 = arith.mulf %483, %478 : vector<8x128xf32>
      %485 = vector.broadcast %42 : f32 to vector<8x128xf32>
      %486 = arith.mulf %485, %480 : vector<8x128xf32>
      %487 = arith.addf %484, %486 : vector<8x128xf32>
      %488 = vector.broadcast %44 : f32 to vector<8x128xf32>
      %489 = arith.mulf %488, %482 : vector<8x128xf32>
      %490 = arith.addf %487, %489 : vector<8x128xf32>
      %491 = vector.broadcast %41 : f32 to vector<8x128xf32>
      %492 = arith.mulf %491, %478 : vector<8x128xf32>
      %493 = vector.broadcast %43 : f32 to vector<8x128xf32>
      %494 = arith.mulf %493, %480 : vector<8x128xf32>
      %495 = arith.addf %492, %494 : vector<8x128xf32>
      %496 = vector.broadcast %45 : f32 to vector<8x128xf32>
      %497 = arith.mulf %496, %482 : vector<8x128xf32>
      %498 = arith.addf %495, %497 : vector<8x128xf32>
      %499 = math.absf %490 : vector<8x128xf32>
      %500 = vector.broadcast %36 : f32 to vector<8x128xf32>
      %501 = arith.subf %499, %500 : vector<8x128xf32>
      %cst_74 = arith.constant 0.000000e+00 : f32
      %502 = vector.broadcast %cst_74 : f32 to vector<8x128xf32>
      %503 = arith.maximumf %501, %502 : vector<8x128xf32>
      %504 = math.absf %498 : vector<8x128xf32>
      %505 = vector.broadcast %37 : f32 to vector<8x128xf32>
      %506 = arith.subf %504, %505 : vector<8x128xf32>
      %cst_75 = arith.constant 0.000000e+00 : f32
      %507 = vector.broadcast %cst_75 : f32 to vector<8x128xf32>
      %508 = arith.maximumf %506, %507 : vector<8x128xf32>
      %509 = arith.addf %503, %508 : vector<8x128xf32>
      %510 = vector.broadcast %29 : f32 to vector<8x128xf32>
      %511 = arith.subf %426, %510 : vector<8x128xf32>
      %512 = vector.broadcast %30 : f32 to vector<8x128xf32>
      %513 = arith.subf %427, %512 : vector<8x128xf32>
      %514 = vector.broadcast %31 : f32 to vector<8x128xf32>
      %515 = arith.subf %428, %514 : vector<8x128xf32>
      %516 = vector.broadcast %40 : f32 to vector<8x128xf32>
      %517 = arith.mulf %516, %511 : vector<8x128xf32>
      %518 = vector.broadcast %42 : f32 to vector<8x128xf32>
      %519 = arith.mulf %518, %513 : vector<8x128xf32>
      %520 = arith.addf %517, %519 : vector<8x128xf32>
      %521 = vector.broadcast %44 : f32 to vector<8x128xf32>
      %522 = arith.mulf %521, %515 : vector<8x128xf32>
      %523 = arith.addf %520, %522 : vector<8x128xf32>
      %524 = vector.broadcast %41 : f32 to vector<8x128xf32>
      %525 = arith.mulf %524, %511 : vector<8x128xf32>
      %526 = vector.broadcast %43 : f32 to vector<8x128xf32>
      %527 = arith.mulf %526, %513 : vector<8x128xf32>
      %528 = arith.addf %525, %527 : vector<8x128xf32>
      %529 = vector.broadcast %45 : f32 to vector<8x128xf32>
      %530 = arith.mulf %529, %515 : vector<8x128xf32>
      %531 = arith.addf %528, %530 : vector<8x128xf32>
      %532 = math.absf %523 : vector<8x128xf32>
      %533 = vector.broadcast %36 : f32 to vector<8x128xf32>
      %534 = arith.subf %532, %533 : vector<8x128xf32>
      %cst_76 = arith.constant 0.000000e+00 : f32
      %535 = vector.broadcast %cst_76 : f32 to vector<8x128xf32>
      %536 = arith.maximumf %534, %535 : vector<8x128xf32>
      %537 = math.absf %531 : vector<8x128xf32>
      %538 = vector.broadcast %37 : f32 to vector<8x128xf32>
      %539 = arith.subf %537, %538 : vector<8x128xf32>
      %cst_77 = arith.constant 0.000000e+00 : f32
      %540 = vector.broadcast %cst_77 : f32 to vector<8x128xf32>
      %541 = arith.maximumf %539, %540 : vector<8x128xf32>
      %542 = arith.addf %536, %541 : vector<8x128xf32>
      %543 = arith.addf %509, %542 : vector<8x128xf32>
      %544 = vector.broadcast %32 : f32 to vector<8x128xf32>
      %545 = arith.mulf %544, %294 : vector<8x128xf32>
      %546 = vector.broadcast %33 : f32 to vector<8x128xf32>
      %547 = arith.mulf %546, %295 : vector<8x128xf32>
      %548 = arith.addf %545, %547 : vector<8x128xf32>
      %549 = vector.broadcast %34 : f32 to vector<8x128xf32>
      %550 = arith.mulf %549, %296 : vector<8x128xf32>
      %551 = arith.addf %548, %550 : vector<8x128xf32>
      %cst_78 = arith.constant 0.000000e+00 : f32
      %552 = vector.broadcast %cst_78 : f32 to vector<8x128xf32>
      %553 = arith.cmpf olt, %551, %552 : vector<8x128xf32>
      %cst_79 = arith.constant -1.000000e+00 : f32
      %cst_80 = arith.constant 1.000000e+00 : f32
      %554 = vector.broadcast %cst_79 : f32 to vector<8x128xf32>
      %555 = vector.broadcast %cst_80 : f32 to vector<8x128xf32>
      %556 = arith.select %553, %554, %555 : vector<8x128xi1>, vector<8x128xf32>
      %557 = math.absf %551 : vector<8x128xf32>
      %cst_81 = arith.constant 9.99999971E-10 : f32
      %558 = vector.broadcast %cst_81 : f32 to vector<8x128xf32>
      %559 = arith.maximumf %557, %558 : vector<8x128xf32>
      %560 = tpu.reciprocal %559 {approx = true} : vector<8x128xf32> -> vector<8x128xf32>
      %561 = arith.mulf %559, %560 : vector<8x128xf32>
      %cst_82 = arith.constant 2.000000e+00 : f32
      %562 = vector.broadcast %cst_82 : f32 to vector<8x128xf32>
      %563 = arith.subf %562, %561 : vector<8x128xf32>
      %564 = arith.mulf %560, %563 : vector<8x128xf32>
      %565 = arith.mulf %556, %564 : vector<8x128xf32>
      %566 = arith.subf %48, %26 : f32
      %567 = arith.subf %51, %27 : f32
      %568 = arith.subf %54, %28 : f32
      %569 = arith.mulf %32, %566 : f32
      %570 = arith.mulf %33, %567 : f32
      %571 = arith.addf %569, %570 : f32
      %572 = arith.mulf %34, %568 : f32
      %573 = arith.addf %571, %572 : f32
      %574 = vector.broadcast %573 : f32 to vector<8x128xf32>
      %575 = arith.mulf %574, %565 : vector<8x128xf32>
      %576 = arith.mulf %294, %575 : vector<8x128xf32>
      %577 = arith.mulf %295, %575 : vector<8x128xf32>
      %578 = arith.mulf %296, %575 : vector<8x128xf32>
      %579 = vector.broadcast %26 : f32 to vector<8x128xf32>
      %580 = arith.addf %579, %576 : vector<8x128xf32>
      %581 = vector.broadcast %27 : f32 to vector<8x128xf32>
      %582 = arith.addf %581, %577 : vector<8x128xf32>
      %583 = vector.broadcast %28 : f32 to vector<8x128xf32>
      %584 = arith.addf %583, %578 : vector<8x128xf32>
      %585 = vector.broadcast %32 : f32 to vector<8x128xf32>
      %586 = arith.mulf %585, %294 : vector<8x128xf32>
      %587 = vector.broadcast %33 : f32 to vector<8x128xf32>
      %588 = arith.mulf %587, %295 : vector<8x128xf32>
      %589 = arith.addf %586, %588 : vector<8x128xf32>
      %590 = vector.broadcast %34 : f32 to vector<8x128xf32>
      %591 = arith.mulf %590, %296 : vector<8x128xf32>
      %592 = arith.addf %589, %591 : vector<8x128xf32>
      %cst_83 = arith.constant 0.000000e+00 : f32
      %593 = vector.broadcast %cst_83 : f32 to vector<8x128xf32>
      %594 = arith.subf %593, %592 : vector<8x128xf32>
      %cst_84 = arith.constant 0.000000e+00 : f32
      %595 = vector.broadcast %cst_84 : f32 to vector<8x128xf32>
      %596 = arith.cmpf olt, %594, %595 : vector<8x128xf32>
      %cst_85 = arith.constant -1.000000e+00 : f32
      %cst_86 = arith.constant 1.000000e+00 : f32
      %597 = vector.broadcast %cst_85 : f32 to vector<8x128xf32>
      %598 = vector.broadcast %cst_86 : f32 to vector<8x128xf32>
      %599 = arith.select %596, %597, %598 : vector<8x128xi1>, vector<8x128xf32>
      %600 = vector.broadcast %32 : f32 to vector<8x128xf32>
      %601 = arith.mulf %600, %599 : vector<8x128xf32>
      %602 = vector.broadcast %33 : f32 to vector<8x128xf32>
      %603 = arith.mulf %602, %599 : vector<8x128xf32>
      %604 = vector.broadcast %34 : f32 to vector<8x128xf32>
      %605 = arith.mulf %604, %599 : vector<8x128xf32>
      %606 = math.absf %594 : vector<8x128xf32>
      %607 = arith.mulf %39, %39 : f32
      %608 = arith.mulf %606, %606 : vector<8x128xf32>
      %cst_87 = arith.constant 1.000000e+00 : f32
      %609 = vector.broadcast %cst_87 : f32 to vector<8x128xf32>
      %610 = arith.subf %609, %608 : vector<8x128xf32>
      %611 = vector.broadcast %607 : f32 to vector<8x128xf32>
      %612 = arith.mulf %611, %610 : vector<8x128xf32>
      %cst_88 = arith.constant 1.000000e+00 : f32
      %613 = vector.broadcast %cst_88 : f32 to vector<8x128xf32>
      %614 = arith.subf %613, %612 : vector<8x128xf32>
      %cst_89 = arith.constant 0.000000e+00 : f32
      %615 = vector.broadcast %cst_89 : f32 to vector<8x128xf32>
      %616 = arith.maximumf %614, %615 : vector<8x128xf32>
      %617 = math.sqrt %616 : vector<8x128xf32>
      %618 = vector.broadcast %39 : f32 to vector<8x128xf32>
      %619 = arith.mulf %294, %618 : vector<8x128xf32>
      %620 = vector.broadcast %39 : f32 to vector<8x128xf32>
      %621 = arith.mulf %295, %620 : vector<8x128xf32>
      %622 = vector.broadcast %39 : f32 to vector<8x128xf32>
      %623 = arith.mulf %296, %622 : vector<8x128xf32>
      %624 = vector.broadcast %39 : f32 to vector<8x128xf32>
      %625 = arith.mulf %624, %606 : vector<8x128xf32>
      %626 = arith.subf %625, %617 : vector<8x128xf32>
      %627 = arith.mulf %601, %626 : vector<8x128xf32>
      %628 = arith.mulf %603, %626 : vector<8x128xf32>
      %629 = arith.mulf %605, %626 : vector<8x128xf32>
      %630 = arith.addf %619, %627 : vector<8x128xf32>
      %631 = arith.addf %621, %628 : vector<8x128xf32>
      %632 = arith.addf %623, %629 : vector<8x128xf32>
      %633 = vector.broadcast %32 : f32 to vector<8x128xf32>
      %634 = arith.mulf %633, %630 : vector<8x128xf32>
      %635 = vector.broadcast %33 : f32 to vector<8x128xf32>
      %636 = arith.mulf %635, %631 : vector<8x128xf32>
      %637 = arith.addf %634, %636 : vector<8x128xf32>
      %638 = vector.broadcast %34 : f32 to vector<8x128xf32>
      %639 = arith.mulf %638, %632 : vector<8x128xf32>
      %640 = arith.addf %637, %639 : vector<8x128xf32>
      %cst_90 = arith.constant 0.000000e+00 : f32
      %641 = vector.broadcast %cst_90 : f32 to vector<8x128xf32>
      %642 = arith.cmpf olt, %640, %641 : vector<8x128xf32>
      %cst_91 = arith.constant -1.000000e+00 : f32
      %cst_92 = arith.constant 1.000000e+00 : f32
      %643 = vector.broadcast %cst_91 : f32 to vector<8x128xf32>
      %644 = vector.broadcast %cst_92 : f32 to vector<8x128xf32>
      %645 = arith.select %642, %643, %644 : vector<8x128xi1>, vector<8x128xf32>
      %646 = math.absf %640 : vector<8x128xf32>
      %cst_93 = arith.constant 9.99999971E-10 : f32
      %647 = vector.broadcast %cst_93 : f32 to vector<8x128xf32>
      %648 = arith.maximumf %646, %647 : vector<8x128xf32>
      %649 = tpu.reciprocal %648 {approx = true} : vector<8x128xf32> -> vector<8x128xf32>
      %650 = arith.mulf %648, %649 : vector<8x128xf32>
      %cst_94 = arith.constant 2.000000e+00 : f32
      %651 = vector.broadcast %cst_94 : f32 to vector<8x128xf32>
      %652 = arith.subf %651, %650 : vector<8x128xf32>
      %653 = arith.mulf %649, %652 : vector<8x128xf32>
      %654 = arith.mulf %645, %653 : vector<8x128xf32>
      %655 = vector.broadcast %57 : f32 to vector<8x128xf32>
      %656 = arith.subf %655, %580 : vector<8x128xf32>
      %657 = vector.broadcast %60 : f32 to vector<8x128xf32>
      %658 = arith.subf %657, %582 : vector<8x128xf32>
      %659 = vector.broadcast %63 : f32 to vector<8x128xf32>
      %660 = arith.subf %659, %584 : vector<8x128xf32>
      %661 = vector.broadcast %32 : f32 to vector<8x128xf32>
      %662 = arith.mulf %661, %656 : vector<8x128xf32>
      %663 = vector.broadcast %33 : f32 to vector<8x128xf32>
      %664 = arith.mulf %663, %658 : vector<8x128xf32>
      %665 = arith.addf %662, %664 : vector<8x128xf32>
      %666 = vector.broadcast %34 : f32 to vector<8x128xf32>
      %667 = arith.mulf %666, %660 : vector<8x128xf32>
      %668 = arith.addf %665, %667 : vector<8x128xf32>
      %669 = arith.mulf %668, %654 : vector<8x128xf32>
      %670 = arith.mulf %630, %669 : vector<8x128xf32>
      %671 = arith.mulf %631, %669 : vector<8x128xf32>
      %672 = arith.mulf %632, %669 : vector<8x128xf32>
      %673 = arith.addf %580, %670 : vector<8x128xf32>
      %674 = arith.addf %582, %671 : vector<8x128xf32>
      %675 = arith.addf %584, %672 : vector<8x128xf32>
      %676 = vector.broadcast %32 : f32 to vector<8x128xf32>
      %677 = arith.mulf %676, %630 : vector<8x128xf32>
      %678 = vector.broadcast %33 : f32 to vector<8x128xf32>
      %679 = arith.mulf %678, %631 : vector<8x128xf32>
      %680 = arith.addf %677, %679 : vector<8x128xf32>
      %681 = vector.broadcast %34 : f32 to vector<8x128xf32>
      %682 = arith.mulf %681, %632 : vector<8x128xf32>
      %683 = arith.addf %680, %682 : vector<8x128xf32>
      %cst_95 = arith.constant 0.000000e+00 : f32
      %684 = vector.broadcast %cst_95 : f32 to vector<8x128xf32>
      %685 = arith.subf %684, %683 : vector<8x128xf32>
      %cst_96 = arith.constant 0.000000e+00 : f32
      %686 = vector.broadcast %cst_96 : f32 to vector<8x128xf32>
      %687 = arith.cmpf olt, %685, %686 : vector<8x128xf32>
      %cst_97 = arith.constant -1.000000e+00 : f32
      %cst_98 = arith.constant 1.000000e+00 : f32
      %688 = vector.broadcast %cst_97 : f32 to vector<8x128xf32>
      %689 = vector.broadcast %cst_98 : f32 to vector<8x128xf32>
      %690 = arith.select %687, %688, %689 : vector<8x128xi1>, vector<8x128xf32>
      %691 = vector.broadcast %32 : f32 to vector<8x128xf32>
      %692 = arith.mulf %691, %690 : vector<8x128xf32>
      %693 = vector.broadcast %33 : f32 to vector<8x128xf32>
      %694 = arith.mulf %693, %690 : vector<8x128xf32>
      %695 = vector.broadcast %34 : f32 to vector<8x128xf32>
      %696 = arith.mulf %695, %690 : vector<8x128xf32>
      %697 = math.absf %685 : vector<8x128xf32>
      %698 = arith.mulf %38, %38 : f32
      %699 = arith.mulf %697, %697 : vector<8x128xf32>
      %cst_99 = arith.constant 1.000000e+00 : f32
      %700 = vector.broadcast %cst_99 : f32 to vector<8x128xf32>
      %701 = arith.subf %700, %699 : vector<8x128xf32>
      %702 = vector.broadcast %698 : f32 to vector<8x128xf32>
      %703 = arith.mulf %702, %701 : vector<8x128xf32>
      %cst_100 = arith.constant 1.000000e+00 : f32
      %704 = vector.broadcast %cst_100 : f32 to vector<8x128xf32>
      %705 = arith.subf %704, %703 : vector<8x128xf32>
      %cst_101 = arith.constant 0.000000e+00 : f32
      %706 = vector.broadcast %cst_101 : f32 to vector<8x128xf32>
      %707 = arith.maximumf %705, %706 : vector<8x128xf32>
      %708 = math.sqrt %707 : vector<8x128xf32>
      %709 = vector.broadcast %38 : f32 to vector<8x128xf32>
      %710 = arith.mulf %630, %709 : vector<8x128xf32>
      %711 = vector.broadcast %38 : f32 to vector<8x128xf32>
      %712 = arith.mulf %631, %711 : vector<8x128xf32>
      %713 = vector.broadcast %38 : f32 to vector<8x128xf32>
      %714 = arith.mulf %632, %713 : vector<8x128xf32>
      %715 = vector.broadcast %38 : f32 to vector<8x128xf32>
      %716 = arith.mulf %715, %697 : vector<8x128xf32>
      %717 = arith.subf %716, %708 : vector<8x128xf32>
      %718 = arith.mulf %692, %717 : vector<8x128xf32>
      %719 = arith.mulf %694, %717 : vector<8x128xf32>
      %720 = arith.mulf %696, %717 : vector<8x128xf32>
      %721 = arith.addf %710, %718 : vector<8x128xf32>
      %722 = arith.addf %712, %719 : vector<8x128xf32>
      %723 = arith.addf %714, %720 : vector<8x128xf32>
      %724 = vector.broadcast %29 : f32 to vector<8x128xf32>
      %725 = arith.subf %580, %724 : vector<8x128xf32>
      %726 = vector.broadcast %30 : f32 to vector<8x128xf32>
      %727 = arith.subf %582, %726 : vector<8x128xf32>
      %728 = vector.broadcast %31 : f32 to vector<8x128xf32>
      %729 = arith.subf %584, %728 : vector<8x128xf32>
      %730 = vector.broadcast %40 : f32 to vector<8x128xf32>
      %731 = arith.mulf %730, %725 : vector<8x128xf32>
      %732 = vector.broadcast %42 : f32 to vector<8x128xf32>
      %733 = arith.mulf %732, %727 : vector<8x128xf32>
      %734 = arith.addf %731, %733 : vector<8x128xf32>
      %735 = vector.broadcast %44 : f32 to vector<8x128xf32>
      %736 = arith.mulf %735, %729 : vector<8x128xf32>
      %737 = arith.addf %734, %736 : vector<8x128xf32>
      %738 = vector.broadcast %41 : f32 to vector<8x128xf32>
      %739 = arith.mulf %738, %725 : vector<8x128xf32>
      %740 = vector.broadcast %43 : f32 to vector<8x128xf32>
      %741 = arith.mulf %740, %727 : vector<8x128xf32>
      %742 = arith.addf %739, %741 : vector<8x128xf32>
      %743 = vector.broadcast %45 : f32 to vector<8x128xf32>
      %744 = arith.mulf %743, %729 : vector<8x128xf32>
      %745 = arith.addf %742, %744 : vector<8x128xf32>
      %746 = math.absf %737 : vector<8x128xf32>
      %747 = vector.broadcast %36 : f32 to vector<8x128xf32>
      %748 = arith.subf %746, %747 : vector<8x128xf32>
      %cst_102 = arith.constant 0.000000e+00 : f32
      %749 = vector.broadcast %cst_102 : f32 to vector<8x128xf32>
      %750 = arith.maximumf %748, %749 : vector<8x128xf32>
      %751 = math.absf %745 : vector<8x128xf32>
      %752 = vector.broadcast %37 : f32 to vector<8x128xf32>
      %753 = arith.subf %751, %752 : vector<8x128xf32>
      %cst_103 = arith.constant 0.000000e+00 : f32
      %754 = vector.broadcast %cst_103 : f32 to vector<8x128xf32>
      %755 = arith.maximumf %753, %754 : vector<8x128xf32>
      %756 = arith.addf %750, %755 : vector<8x128xf32>
      %757 = vector.broadcast %29 : f32 to vector<8x128xf32>
      %758 = arith.subf %673, %757 : vector<8x128xf32>
      %759 = vector.broadcast %30 : f32 to vector<8x128xf32>
      %760 = arith.subf %674, %759 : vector<8x128xf32>
      %761 = vector.broadcast %31 : f32 to vector<8x128xf32>
      %762 = arith.subf %675, %761 : vector<8x128xf32>
      %763 = vector.broadcast %40 : f32 to vector<8x128xf32>
      %764 = arith.mulf %763, %758 : vector<8x128xf32>
      %765 = vector.broadcast %42 : f32 to vector<8x128xf32>
      %766 = arith.mulf %765, %760 : vector<8x128xf32>
      %767 = arith.addf %764, %766 : vector<8x128xf32>
      %768 = vector.broadcast %44 : f32 to vector<8x128xf32>
      %769 = arith.mulf %768, %762 : vector<8x128xf32>
      %770 = arith.addf %767, %769 : vector<8x128xf32>
      %771 = vector.broadcast %41 : f32 to vector<8x128xf32>
      %772 = arith.mulf %771, %758 : vector<8x128xf32>
      %773 = vector.broadcast %43 : f32 to vector<8x128xf32>
      %774 = arith.mulf %773, %760 : vector<8x128xf32>
      %775 = arith.addf %772, %774 : vector<8x128xf32>
      %776 = vector.broadcast %45 : f32 to vector<8x128xf32>
      %777 = arith.mulf %776, %762 : vector<8x128xf32>
      %778 = arith.addf %775, %777 : vector<8x128xf32>
      %779 = math.absf %770 : vector<8x128xf32>
      %780 = vector.broadcast %36 : f32 to vector<8x128xf32>
      %781 = arith.subf %779, %780 : vector<8x128xf32>
      %cst_104 = arith.constant 0.000000e+00 : f32
      %782 = vector.broadcast %cst_104 : f32 to vector<8x128xf32>
      %783 = arith.maximumf %781, %782 : vector<8x128xf32>
      %784 = math.absf %778 : vector<8x128xf32>
      %785 = vector.broadcast %37 : f32 to vector<8x128xf32>
      %786 = arith.subf %784, %785 : vector<8x128xf32>
      %cst_105 = arith.constant 0.000000e+00 : f32
      %787 = vector.broadcast %cst_105 : f32 to vector<8x128xf32>
      %788 = arith.maximumf %786, %787 : vector<8x128xf32>
      %789 = arith.addf %783, %788 : vector<8x128xf32>
      %790 = arith.addf %756, %789 : vector<8x128xf32>
      %c35_106 = arith.constant 35 : index
      %791 = arith.index_cast %66 : i32 to index
      %c0_107 = arith.constant 0 : index
      %792 = vector.load %arg3[%c35_106, %791, %c0_107] : memref<39x16x128xf32, #tpu.memory_space<vmem>>, vector<1x8x128xf32>
      %793 = vector.shape_cast %792 : vector<1x8x128xf32> to vector<8x128xf32>
      %794 = vector.shape_cast %543 : vector<8x128xf32> to vector<1x8x128xf32>
      tpu.vector_store %arg3[%c35_106, %791, %c0_107], %794 {strides = array<i32>} : memref<39x16x128xf32, #tpu.memory_space<vmem>>, vector<1x8x128xf32>,
      %c36_108 = arith.constant 36 : index
      %795 = arith.index_cast %66 : i32 to index
      %c0_109 = arith.constant 0 : index
      %796 = vector.load %arg3[%c36_108, %795, %c0_109] : memref<39x16x128xf32, #tpu.memory_space<vmem>>, vector<1x8x128xf32>
      %797 = vector.shape_cast %796 : vector<1x8x128xf32> to vector<8x128xf32>
      %798 = vector.shape_cast %790 : vector<8x128xf32> to vector<1x8x128xf32>
      tpu.vector_store %arg3[%c36_108, %795, %c0_109], %798 {strides = array<i32>} : memref<39x16x128xf32, #tpu.memory_space<vmem>>, vector<1x8x128xf32>,
      %cst_110 = arith.constant 0.000000e+00 : f32
      %799 = arith.subf %cst_110, %26 : f32
      %cst_111 = arith.constant 0.000000e+00 : f32
      %800 = arith.subf %cst_111, %27 : f32
      %cst_112 = arith.constant 0.000000e+00 : f32
      %801 = arith.subf %cst_112, %28 : f32
      %802 = arith.mulf %211, %247 : vector<8x128xf32>
      %803 = arith.mulf %212, %248 : vector<8x128xf32>
      %804 = arith.addf %802, %803 : vector<8x128xf32>
      %805 = arith.mulf %214, %249 : vector<8x128xf32>
      %806 = arith.addf %804, %805 : vector<8x128xf32>
      %807 = vector.broadcast %799 : f32 to vector<8x128xf32>
      %808 = arith.mulf %211, %807 : vector<8x128xf32>
      %809 = vector.broadcast %800 : f32 to vector<8x128xf32>
      %810 = arith.mulf %212, %809 : vector<8x128xf32>
      %811 = arith.addf %808, %810 : vector<8x128xf32>
      %812 = vector.broadcast %801 : f32 to vector<8x128xf32>
      %813 = arith.mulf %214, %812 : vector<8x128xf32>
      %814 = arith.addf %811, %813 : vector<8x128xf32>
      %815 = vector.broadcast %799 : f32 to vector<8x128xf32>
      %816 = arith.mulf %247, %815 : vector<8x128xf32>
      %817 = vector.broadcast %800 : f32 to vector<8x128xf32>
      %818 = arith.mulf %248, %817 : vector<8x128xf32>
      %819 = arith.addf %816, %818 : vector<8x128xf32>
      %820 = vector.broadcast %801 : f32 to vector<8x128xf32>
      %821 = arith.mulf %249, %820 : vector<8x128xf32>
      %822 = arith.addf %819, %821 : vector<8x128xf32>
      %823 = arith.mulf %806, %806 : vector<8x128xf32>
      %cst_113 = arith.constant 1.000000e+00 : f32
      %824 = vector.broadcast %cst_113 : f32 to vector<8x128xf32>
      %825 = arith.subf %824, %823 : vector<8x128xf32>
      %cst_114 = arith.constant 0.000000e+00 : f32
      %826 = vector.broadcast %cst_114 : f32 to vector<8x128xf32>
      %827 = arith.cmpf olt, %825, %826 : vector<8x128xf32>
      %cst_115 = arith.constant -1.000000e+00 : f32
      %cst_116 = arith.constant 1.000000e+00 : f32
      %828 = vector.broadcast %cst_115 : f32 to vector<8x128xf32>
      %829 = vector.broadcast %cst_116 : f32 to vector<8x128xf32>
      %830 = arith.select %827, %828, %829 : vector<8x128xi1>, vector<8x128xf32>
      %831 = math.absf %825 : vector<8x128xf32>
      %cst_117 = arith.constant 9.99999971E-10 : f32
      %832 = vector.broadcast %cst_117 : f32 to vector<8x128xf32>
      %833 = arith.maximumf %831, %832 : vector<8x128xf32>
      %834 = tpu.reciprocal %833 {approx = true} : vector<8x128xf32> -> vector<8x128xf32>
      %835 = arith.mulf %833, %834 : vector<8x128xf32>
      %cst_118 = arith.constant 2.000000e+00 : f32
      %836 = vector.broadcast %cst_118 : f32 to vector<8x128xf32>
      %837 = arith.subf %836, %835 : vector<8x128xf32>
      %838 = arith.mulf %834, %837 : vector<8x128xf32>
      %839 = arith.mulf %830, %838 : vector<8x128xf32>
      %840 = arith.mulf %806, %822 : vector<8x128xf32>
      %841 = arith.subf %840, %814 : vector<8x128xf32>
      %842 = arith.mulf %841, %839 : vector<8x128xf32>
      %843 = arith.mulf %806, %814 : vector<8x128xf32>
      %844 = arith.subf %822, %843 : vector<8x128xf32>
      %845 = arith.mulf %844, %839 : vector<8x128xf32>
      %846 = arith.mulf %211, %842 : vector<8x128xf32>
      %847 = arith.mulf %212, %842 : vector<8x128xf32>
      %848 = arith.mulf %214, %842 : vector<8x128xf32>
      %cst_119 = arith.constant 0.000000e+00 : f32
      %849 = vector.broadcast %cst_119 : f32 to vector<8x128xf32>
      %850 = arith.addf %849, %846 : vector<8x128xf32>
      %cst_120 = arith.constant 0.000000e+00 : f32
      %851 = vector.broadcast %cst_120 : f32 to vector<8x128xf32>
      %852 = arith.addf %851, %847 : vector<8x128xf32>
      %cst_121 = arith.constant 0.000000e+00 : f32
      %853 = vector.broadcast %cst_121 : f32 to vector<8x128xf32>
      %854 = arith.addf %853, %848 : vector<8x128xf32>
      %855 = arith.mulf %247, %845 : vector<8x128xf32>
      %856 = arith.mulf %248, %845 : vector<8x128xf32>
      %857 = arith.mulf %249, %845 : vector<8x128xf32>
      %858 = vector.broadcast %26 : f32 to vector<8x128xf32>
      %859 = arith.addf %858, %855 : vector<8x128xf32>
      %860 = vector.broadcast %27 : f32 to vector<8x128xf32>
      %861 = arith.addf %860, %856 : vector<8x128xf32>
      %862 = vector.broadcast %28 : f32 to vector<8x128xf32>
      %863 = arith.addf %862, %857 : vector<8x128xf32>
      %864 = arith.addf %850, %859 : vector<8x128xf32>
      %865 = arith.addf %852, %861 : vector<8x128xf32>
      %866 = arith.addf %854, %863 : vector<8x128xf32>
      %cst_122 = arith.constant 5.000000e-01 : f32
      %867 = vector.broadcast %cst_122 : f32 to vector<8x128xf32>
      %868 = arith.mulf %864, %867 : vector<8x128xf32>
      %cst_123 = arith.constant 5.000000e-01 : f32
      %869 = vector.broadcast %cst_123 : f32 to vector<8x128xf32>
      %870 = arith.mulf %865, %869 : vector<8x128xf32>
      %cst_124 = arith.constant 5.000000e-01 : f32
      %871 = vector.broadcast %cst_124 : f32 to vector<8x128xf32>
      %872 = arith.mulf %866, %871 : vector<8x128xf32>
      %873 = arith.subf %850, %859 : vector<8x128xf32>
      %874 = arith.subf %852, %861 : vector<8x128xf32>
      %875 = arith.subf %854, %863 : vector<8x128xf32>
      %876 = arith.mulf %873, %873 : vector<8x128xf32>
      %877 = arith.mulf %874, %874 : vector<8x128xf32>
      %878 = arith.addf %876, %877 : vector<8x128xf32>
      %879 = arith.mulf %875, %875 : vector<8x128xf32>
      %880 = arith.addf %878, %879 : vector<8x128xf32>
      %881 = math.sqrt %880 : vector<8x128xf32>
      %c3_125 = arith.constant 3 : index
      %882 = arith.index_cast %66 : i32 to index
      %c0_126 = arith.constant 0 : index
      %883 = vector.load %arg3[%c3_125, %882, %c0_126] : memref<39x16x128xf32, #tpu.memory_space<vmem>>, vector<1x8x128xf32>
      %884 = vector.shape_cast %883 : vector<1x8x128xf32> to vector<8x128xf32>
      %885 = vector.shape_cast %868 : vector<8x128xf32> to vector<1x8x128xf32>
      tpu.vector_store %arg3[%c3_125, %882, %c0_126], %885 {strides = array<i32>} : memref<39x16x128xf32, #tpu.memory_space<vmem>>, vector<1x8x128xf32>,
      %c4_127 = arith.constant 4 : index
      %886 = arith.index_cast %66 : i32 to index
      %c0_128 = arith.constant 0 : index
      %887 = vector.load %arg3[%c4_127, %886, %c0_128] : memref<39x16x128xf32, #tpu.memory_space<vmem>>, vector<1x8x128xf32>
      %888 = vector.shape_cast %887 : vector<1x8x128xf32> to vector<8x128xf32>
      %889 = vector.shape_cast %870 : vector<8x128xf32> to vector<1x8x128xf32>
      tpu.vector_store %arg3[%c4_127, %886, %c0_128], %889 {strides = array<i32>} : memref<39x16x128xf32, #tpu.memory_space<vmem>>, vector<1x8x128xf32>,
      %c5_129 = arith.constant 5 : index
      %890 = arith.index_cast %66 : i32 to index
      %c0_130 = arith.constant 0 : index
      %891 = vector.load %arg3[%c5_129, %890, %c0_130] : memref<39x16x128xf32, #tpu.memory_space<vmem>>, vector<1x8x128xf32>
      %892 = vector.shape_cast %891 : vector<1x8x128xf32> to vector<8x128xf32>
      %893 = vector.shape_cast %872 : vector<8x128xf32> to vector<1x8x128xf32>
      tpu.vector_store %arg3[%c5_129, %890, %c0_130], %893 {strides = array<i32>} : memref<39x16x128xf32, #tpu.memory_space<vmem>>, vector<1x8x128xf32>,
      %c21_131 = arith.constant 21 : index
      %894 = arith.index_cast %66 : i32 to index
      %c0_132 = arith.constant 0 : index
      %895 = vector.load %arg3[%c21_131, %894, %c0_132] : memref<39x16x128xf32, #tpu.memory_space<vmem>>, vector<1x8x128xf32>
      %896 = vector.shape_cast %895 : vector<1x8x128xf32> to vector<8x128xf32>
      %897 = vector.shape_cast %881 : vector<8x128xf32> to vector<1x8x128xf32>
      tpu.vector_store %arg3[%c21_131, %894, %c0_132], %897 {strides = array<i32>} : memref<39x16x128xf32, #tpu.memory_space<vmem>>, vector<1x8x128xf32>,
      %898 = arith.subf %426, %673 : vector<8x128xf32>
      %899 = arith.subf %427, %674 : vector<8x128xf32>
      %900 = arith.subf %428, %675 : vector<8x128xf32>
      %901 = arith.mulf %474, %721 : vector<8x128xf32>
      %902 = arith.mulf %475, %722 : vector<8x128xf32>
      %903 = arith.addf %901, %902 : vector<8x128xf32>
      %904 = arith.mulf %476, %723 : vector<8x128xf32>
      %905 = arith.addf %903, %904 : vector<8x128xf32>
      %906 = arith.mulf %474, %898 : vector<8x128xf32>
      %907 = arith.mulf %475, %899 : vector<8x128xf32>
      %908 = arith.addf %906, %907 : vector<8x128xf32>
      %909 = arith.mulf %476, %900 : vector<8x128xf32>
      %910 = arith.addf %908, %909 : vector<8x128xf32>
      %911 = arith.mulf %721, %898 : vector<8x128xf32>
      %912 = arith.mulf %722, %899 : vector<8x128xf32>
      %913 = arith.addf %911, %912 : vector<8x128xf32>
      %914 = arith.mulf %723, %900 : vector<8x128xf32>
      %915 = arith.addf %913, %914 : vector<8x128xf32>
      %916 = arith.mulf %905, %905 : vector<8x128xf32>
      %cst_133 = arith.constant 1.000000e+00 : f32
      %917 = vector.broadcast %cst_133 : f32 to vector<8x128xf32>
      %918 = arith.subf %917, %916 : vector<8x128xf32>
      %cst_134 = arith.constant 0.000000e+00 : f32
      %919 = vector.broadcast %cst_134 : f32 to vector<8x128xf32>
      %920 = arith.cmpf olt, %918, %919 : vector<8x128xf32>
      %cst_135 = arith.constant -1.000000e+00 : f32
      %cst_136 = arith.constant 1.000000e+00 : f32
      %921 = vector.broadcast %cst_135 : f32 to vector<8x128xf32>
      %922 = vector.broadcast %cst_136 : f32 to vector<8x128xf32>
      %923 = arith.select %920, %921, %922 : vector<8x128xi1>, vector<8x128xf32>
      %924 = math.absf %918 : vector<8x128xf32>
      %cst_137 = arith.constant 9.99999971E-10 : f32
      %925 = vector.broadcast %cst_137 : f32 to vector<8x128xf32>
      %926 = arith.maximumf %924, %925 : vector<8x128xf32>
      %927 = tpu.reciprocal %926 {approx = true} : vector<8x128xf32> -> vector<8x128xf32>
      %928 = arith.mulf %926, %927 : vector<8x128xf32>
      %cst_138 = arith.constant 2.000000e+00 : f32
      %929 = vector.broadcast %cst_138 : f32 to vector<8x128xf32>
      %930 = arith.subf %929, %928 : vector<8x128xf32>
      %931 = arith.mulf %927, %930 : vector<8x128xf32>
      %932 = arith.mulf %923, %931 : vector<8x128xf32>
      %933 = arith.mulf %905, %915 : vector<8x128xf32>
      %934 = arith.subf %933, %910 : vector<8x128xf32>
      %935 = arith.mulf %934, %932 : vector<8x128xf32>
      %936 = arith.mulf %905, %910 : vector<8x128xf32>
      %937 = arith.subf %915, %936 : vector<8x128xf32>
      %938 = arith.mulf %937, %932 : vector<8x128xf32>
      %939 = arith.mulf %474, %935 : vector<8x128xf32>
      %940 = arith.mulf %475, %935 : vector<8x128xf32>
      %941 = arith.mulf %476, %935 : vector<8x128xf32>
      %942 = arith.addf %426, %939 : vector<8x128xf32>
      %943 = arith.addf %427, %940 : vector<8x128xf32>
      %944 = arith.addf %428, %941 : vector<8x128xf32>
      %945 = arith.mulf %721, %938 : vector<8x128xf32>
      %946 = arith.mulf %722, %938 : vector<8x128xf32>
      %947 = arith.mulf %723, %938 : vector<8x128xf32>
      %948 = arith.addf %673, %945 : vector<8x128xf32>
      %949 = arith.addf %674, %946 : vector<8x128xf32>
      %950 = arith.addf %675, %947 : vector<8x128xf32>
      %951 = arith.addf %942, %948 : vector<8x128xf32>
      %952 = arith.addf %943, %949 : vector<8x128xf32>
      %953 = arith.addf %944, %950 : vector<8x128xf32>
      %cst_139 = arith.constant 5.000000e-01 : f32
      %954 = vector.broadcast %cst_139 : f32 to vector<8x128xf32>
      %955 = arith.mulf %951, %954 : vector<8x128xf32>
      %cst_140 = arith.constant 5.000000e-01 : f32
      %956 = vector.broadcast %cst_140 : f32 to vector<8x128xf32>
      %957 = arith.mulf %952, %956 : vector<8x128xf32>
      %cst_141 = arith.constant 5.000000e-01 : f32
      %958 = vector.broadcast %cst_141 : f32 to vector<8x128xf32>
      %959 = arith.mulf %953, %958 : vector<8x128xf32>
      %960 = arith.subf %942, %948 : vector<8x128xf32>
      %961 = arith.subf %943, %949 : vector<8x128xf32>
      %962 = arith.subf %944, %950 : vector<8x128xf32>
      %963 = arith.mulf %960, %960 : vector<8x128xf32>
      %964 = arith.mulf %961, %961 : vector<8x128xf32>
      %965 = arith.addf %963, %964 : vector<8x128xf32>
      %966 = arith.mulf %962, %962 : vector<8x128xf32>
      %967 = arith.addf %965, %966 : vector<8x128xf32>
      %968 = math.sqrt %967 : vector<8x128xf32>
      %c6_142 = arith.constant 6 : index
      %969 = arith.index_cast %66 : i32 to index
      %c0_143 = arith.constant 0 : index
      %970 = vector.load %arg3[%c6_142, %969, %c0_143] : memref<39x16x128xf32, #tpu.memory_space<vmem>>, vector<1x8x128xf32>
      %971 = vector.shape_cast %970 : vector<1x8x128xf32> to vector<8x128xf32>
      %972 = vector.shape_cast %955 : vector<8x128xf32> to vector<1x8x128xf32>
      tpu.vector_store %arg3[%c6_142, %969, %c0_143], %972 {strides = array<i32>} : memref<39x16x128xf32, #tpu.memory_space<vmem>>, vector<1x8x128xf32>,
      %c7_144 = arith.constant 7 : index
      %973 = arith.index_cast %66 : i32 to index
      %c0_145 = arith.constant 0 : index
      %974 = vector.load %arg3[%c7_144, %973, %c0_145] : memref<39x16x128xf32, #tpu.memory_space<vmem>>, vector<1x8x128xf32>
      %975 = vector.shape_cast %974 : vector<1x8x128xf32> to vector<8x128xf32>
      %976 = vector.shape_cast %957 : vector<8x128xf32> to vector<1x8x128xf32>
      tpu.vector_store %arg3[%c7_144, %973, %c0_145], %976 {strides = array<i32>} : memref<39x16x128xf32, #tpu.memory_space<vmem>>, vector<1x8x128xf32>,
      %c8_146 = arith.constant 8 : index
      %977 = arith.index_cast %66 : i32 to index
      %c0_147 = arith.constant 0 : index
      %978 = vector.load %arg3[%c8_146, %977, %c0_147] : memref<39x16x128xf32, #tpu.memory_space<vmem>>, vector<1x8x128xf32>
      %979 = vector.shape_cast %978 : vector<1x8x128xf32> to vector<8x128xf32>
      %980 = vector.shape_cast %959 : vector<8x128xf32> to vector<1x8x128xf32>
      tpu.vector_store %arg3[%c8_146, %977, %c0_147], %980 {strides = array<i32>} : memref<39x16x128xf32, #tpu.memory_space<vmem>>, vector<1x8x128xf32>,
      %c22_148 = arith.constant 22 : index
      %981 = arith.index_cast %66 : i32 to index
      %c0_149 = arith.constant 0 : index
      %982 = vector.load %arg3[%c22_148, %981, %c0_149] : memref<39x16x128xf32, #tpu.memory_space<vmem>>, vector<1x8x128xf32>
      %983 = vector.shape_cast %982 : vector<1x8x128xf32> to vector<8x128xf32>
      %984 = vector.shape_cast %968 : vector<8x128xf32> to vector<1x8x128xf32>
      tpu.vector_store %arg3[%c22_148, %981, %c0_149], %984 {strides = array<i32>} : memref<39x16x128xf32, #tpu.memory_space<vmem>>, vector<1x8x128xf32>,
      %985 = arith.addf %868, %955 : vector<8x128xf32>
      %986 = arith.addf %870, %957 : vector<8x128xf32>
      %987 = arith.addf %872, %959 : vector<8x128xf32>
      %cst_150 = arith.constant 0.000000e+00 : f32
      %988 = vector.broadcast %cst_150 : f32 to vector<8x128xf32>
      %989 = arith.subf %426, %988 : vector<8x128xf32>
      %cst_151 = arith.constant 0.000000e+00 : f32
      %990 = vector.broadcast %cst_151 : f32 to vector<8x128xf32>
      %991 = arith.subf %427, %990 : vector<8x128xf32>
      %cst_152 = arith.constant 0.000000e+00 : f32
      %992 = vector.broadcast %cst_152 : f32 to vector<8x128xf32>
      %993 = arith.subf %428, %992 : vector<8x128xf32>
      %994 = arith.mulf %474, %211 : vector<8x128xf32>
      %995 = arith.mulf %475, %212 : vector<8x128xf32>
      %996 = arith.addf %994, %995 : vector<8x128xf32>
      %997 = arith.mulf %476, %214 : vector<8x128xf32>
      %998 = arith.addf %996, %997 : vector<8x128xf32>
      %999 = arith.mulf %474, %989 : vector<8x128xf32>
      %1000 = arith.mulf %475, %991 : vector<8x128xf32>
      %1001 = arith.addf %999, %1000 : vector<8x128xf32>
      %1002 = arith.mulf %476, %993 : vector<8x128xf32>
      %1003 = arith.addf %1001, %1002 : vector<8x128xf32>
      %1004 = arith.mulf %211, %989 : vector<8x128xf32>
      %1005 = arith.mulf %212, %991 : vector<8x128xf32>
      %1006 = arith.addf %1004, %1005 : vector<8x128xf32>
      %1007 = arith.mulf %214, %993 : vector<8x128xf32>
      %1008 = arith.addf %1006, %1007 : vector<8x128xf32>
      %1009 = arith.mulf %998, %998 : vector<8x128xf32>
      %cst_153 = arith.constant 1.000000e+00 : f32
      %1010 = vector.broadcast %cst_153 : f32 to vector<8x128xf32>
      %1011 = arith.subf %1010, %1009 : vector<8x128xf32>
      %cst_154 = arith.constant 0.000000e+00 : f32
      %1012 = vector.broadcast %cst_154 : f32 to vector<8x128xf32>
      %1013 = arith.cmpf olt, %1011, %1012 : vector<8x128xf32>
      %cst_155 = arith.constant -1.000000e+00 : f32
      %cst_156 = arith.constant 1.000000e+00 : f32
      %1014 = vector.broadcast %cst_155 : f32 to vector<8x128xf32>
      %1015 = vector.broadcast %cst_156 : f32 to vector<8x128xf32>
      %1016 = arith.select %1013, %1014, %1015 : vector<8x128xi1>, vector<8x128xf32>
      %1017 = math.absf %1011 : vector<8x128xf32>
      %cst_157 = arith.constant 9.99999971E-10 : f32
      %1018 = vector.broadcast %cst_157 : f32 to vector<8x128xf32>
      %1019 = arith.maximumf %1017, %1018 : vector<8x128xf32>
      %1020 = tpu.reciprocal %1019 {approx = true} : vector<8x128xf32> -> vector<8x128xf32>
      %1021 = arith.mulf %1019, %1020 : vector<8x128xf32>
      %cst_158 = arith.constant 2.000000e+00 : f32
      %1022 = vector.broadcast %cst_158 : f32 to vector<8x128xf32>
      %1023 = arith.subf %1022, %1021 : vector<8x128xf32>
      %1024 = arith.mulf %1020, %1023 : vector<8x128xf32>
      %1025 = arith.mulf %1016, %1024 : vector<8x128xf32>
      %1026 = arith.mulf %998, %1008 : vector<8x128xf32>
      %1027 = arith.subf %1026, %1003 : vector<8x128xf32>
      %1028 = arith.mulf %1027, %1025 : vector<8x128xf32>
      %1029 = arith.mulf %998, %1003 : vector<8x128xf32>
      %1030 = arith.subf %1008, %1029 : vector<8x128xf32>
      %1031 = arith.mulf %1030, %1025 : vector<8x128xf32>
      %1032 = arith.mulf %474, %1028 : vector<8x128xf32>
      %1033 = arith.mulf %475, %1028 : vector<8x128xf32>
      %1034 = arith.mulf %476, %1028 : vector<8x128xf32>
      %1035 = arith.addf %426, %1032 : vector<8x128xf32>
      %1036 = arith.addf %427, %1033 : vector<8x128xf32>
      %1037 = arith.addf %428, %1034 : vector<8x128xf32>
      %1038 = arith.mulf %211, %1031 : vector<8x128xf32>
      %1039 = arith.mulf %212, %1031 : vector<8x128xf32>
      %1040 = arith.mulf %214, %1031 : vector<8x128xf32>
      %cst_159 = arith.constant 0.000000e+00 : f32
      %1041 = vector.broadcast %cst_159 : f32 to vector<8x128xf32>
      %1042 = arith.addf %1041, %1038 : vector<8x128xf32>
      %cst_160 = arith.constant 0.000000e+00 : f32
      %1043 = vector.broadcast %cst_160 : f32 to vector<8x128xf32>
      %1044 = arith.addf %1043, %1039 : vector<8x128xf32>
      %cst_161 = arith.constant 0.000000e+00 : f32
      %1045 = vector.broadcast %cst_161 : f32 to vector<8x128xf32>
      %1046 = arith.addf %1045, %1040 : vector<8x128xf32>
      %1047 = arith.addf %1035, %1042 : vector<8x128xf32>
      %1048 = arith.addf %1036, %1044 : vector<8x128xf32>
      %1049 = arith.addf %1037, %1046 : vector<8x128xf32>
      %cst_162 = arith.constant 5.000000e-01 : f32
      %1050 = vector.broadcast %cst_162 : f32 to vector<8x128xf32>
      %1051 = arith.mulf %1047, %1050 : vector<8x128xf32>
      %cst_163 = arith.constant 5.000000e-01 : f32
      %1052 = vector.broadcast %cst_163 : f32 to vector<8x128xf32>
      %1053 = arith.mulf %1048, %1052 : vector<8x128xf32>
      %cst_164 = arith.constant 5.000000e-01 : f32
      %1054 = vector.broadcast %cst_164 : f32 to vector<8x128xf32>
      %1055 = arith.mulf %1049, %1054 : vector<8x128xf32>
      %1056 = arith.subf %1035, %1042 : vector<8x128xf32>
      %1057 = arith.subf %1036, %1044 : vector<8x128xf32>
      %1058 = arith.subf %1037, %1046 : vector<8x128xf32>
      %1059 = arith.mulf %1056, %1056 : vector<8x128xf32>
      %1060 = arith.mulf %1057, %1057 : vector<8x128xf32>
      %1061 = arith.addf %1059, %1060 : vector<8x128xf32>
      %1062 = arith.mulf %1058, %1058 : vector<8x128xf32>
      %1063 = arith.addf %1061, %1062 : vector<8x128xf32>
      %1064 = math.sqrt %1063 : vector<8x128xf32>
      %c9_165 = arith.constant 9 : index
      %1065 = arith.index_cast %66 : i32 to index
      %c0_166 = arith.constant 0 : index
      %1066 = vector.load %arg3[%c9_165, %1065, %c0_166] : memref<39x16x128xf32, #tpu.memory_space<vmem>>, vector<1x8x128xf32>
      %1067 = vector.shape_cast %1066 : vector<1x8x128xf32> to vector<8x128xf32>
      %1068 = vector.shape_cast %1051 : vector<8x128xf32> to vector<1x8x128xf32>
      tpu.vector_store %arg3[%c9_165, %1065, %c0_166], %1068 {strides = array<i32>} : memref<39x16x128xf32, #tpu.memory_space<vmem>>, vector<1x8x128xf32>,
      %c10_167 = arith.constant 10 : index
      %1069 = arith.index_cast %66 : i32 to index
      %c0_168 = arith.constant 0 : index
      %1070 = vector.load %arg3[%c10_167, %1069, %c0_168] : memref<39x16x128xf32, #tpu.memory_space<vmem>>, vector<1x8x128xf32>
      %1071 = vector.shape_cast %1070 : vector<1x8x128xf32> to vector<8x128xf32>
      %1072 = vector.shape_cast %1053 : vector<8x128xf32> to vector<1x8x128xf32>
      tpu.vector_store %arg3[%c10_167, %1069, %c0_168], %1072 {strides = array<i32>} : memref<39x16x128xf32, #tpu.memory_space<vmem>>, vector<1x8x128xf32>,
      %c11_169 = arith.constant 11 : index
      %1073 = arith.index_cast %66 : i32 to index
      %c0_170 = arith.constant 0 : index
      %1074 = vector.load %arg3[%c11_169, %1073, %c0_170] : memref<39x16x128xf32, #tpu.memory_space<vmem>>, vector<1x8x128xf32>
      %1075 = vector.shape_cast %1074 : vector<1x8x128xf32> to vector<8x128xf32>
      %1076 = vector.shape_cast %1055 : vector<8x128xf32> to vector<1x8x128xf32>
      tpu.vector_store %arg3[%c11_169, %1073, %c0_170], %1076 {strides = array<i32>} : memref<39x16x128xf32, #tpu.memory_space<vmem>>, vector<1x8x128xf32>,
      %c23_171 = arith.constant 23 : index
      %1077 = arith.index_cast %66 : i32 to index
      %c0_172 = arith.constant 0 : index
      %1078 = vector.load %arg3[%c23_171, %1077, %c0_172] : memref<39x16x128xf32, #tpu.memory_space<vmem>>, vector<1x8x128xf32>
      %1079 = vector.shape_cast %1078 : vector<1x8x128xf32> to vector<8x128xf32>
      %1080 = vector.shape_cast %1064 : vector<8x128xf32> to vector<1x8x128xf32>
      tpu.vector_store %arg3[%c23_171, %1077, %c0_172], %1080 {strides = array<i32>} : memref<39x16x128xf32, #tpu.memory_space<vmem>>, vector<1x8x128xf32>,
      %1081 = arith.addf %985, %1051 : vector<8x128xf32>
      %1082 = arith.addf %986, %1053 : vector<8x128xf32>
      %1083 = arith.addf %987, %1055 : vector<8x128xf32>
      %1084 = vector.broadcast %26 : f32 to vector<8x128xf32>
      %1085 = arith.subf %673, %1084 : vector<8x128xf32>
      %1086 = vector.broadcast %27 : f32 to vector<8x128xf32>
      %1087 = arith.subf %674, %1086 : vector<8x128xf32>
      %1088 = vector.broadcast %28 : f32 to vector<8x128xf32>
      %1089 = arith.subf %675, %1088 : vector<8x128xf32>
      %1090 = arith.mulf %721, %247 : vector<8x128xf32>
      %1091 = arith.mulf %722, %248 : vector<8x128xf32>
      %1092 = arith.addf %1090, %1091 : vector<8x128xf32>
      %1093 = arith.mulf %723, %249 : vector<8x128xf32>
      %1094 = arith.addf %1092, %1093 : vector<8x128xf32>
      %1095 = arith.mulf %721, %1085 : vector<8x128xf32>
      %1096 = arith.mulf %722, %1087 : vector<8x128xf32>
      %1097 = arith.addf %1095, %1096 : vector<8x128xf32>
      %1098 = arith.mulf %723, %1089 : vector<8x128xf32>
      %1099 = arith.addf %1097, %1098 : vector<8x128xf32>
      %1100 = arith.mulf %247, %1085 : vector<8x128xf32>
      %1101 = arith.mulf %248, %1087 : vector<8x128xf32>
      %1102 = arith.addf %1100, %1101 : vector<8x128xf32>
      %1103 = arith.mulf %249, %1089 : vector<8x128xf32>
      %1104 = arith.addf %1102, %1103 : vector<8x128xf32>
      %1105 = arith.mulf %1094, %1094 : vector<8x128xf32>
      %cst_173 = arith.constant 1.000000e+00 : f32
      %1106 = vector.broadcast %cst_173 : f32 to vector<8x128xf32>
      %1107 = arith.subf %1106, %1105 : vector<8x128xf32>
      %cst_174 = arith.constant 0.000000e+00 : f32
      %1108 = vector.broadcast %cst_174 : f32 to vector<8x128xf32>
      %1109 = arith.cmpf olt, %1107, %1108 : vector<8x128xf32>
      %cst_175 = arith.constant -1.000000e+00 : f32
      %cst_176 = arith.constant 1.000000e+00 : f32
      %1110 = vector.broadcast %cst_175 : f32 to vector<8x128xf32>
      %1111 = vector.broadcast %cst_176 : f32 to vector<8x128xf32>
      %1112 = arith.select %1109, %1110, %1111 : vector<8x128xi1>, vector<8x128xf32>
      %1113 = math.absf %1107 : vector<8x128xf32>
      %cst_177 = arith.constant 9.99999971E-10 : f32
      %1114 = vector.broadcast %cst_177 : f32 to vector<8x128xf32>
      %1115 = arith.maximumf %1113, %1114 : vector<8x128xf32>
      %1116 = tpu.reciprocal %1115 {approx = true} : vector<8x128xf32> -> vector<8x128xf32>
      %1117 = arith.mulf %1115, %1116 : vector<8x128xf32>
      %cst_178 = arith.constant 2.000000e+00 : f32
      %1118 = vector.broadcast %cst_178 : f32 to vector<8x128xf32>
      %1119 = arith.subf %1118, %1117 : vector<8x128xf32>
      %1120 = arith.mulf %1116, %1119 : vector<8x128xf32>
      %1121 = arith.mulf %1112, %1120 : vector<8x128xf32>
      %1122 = arith.mulf %1094, %1104 : vector<8x128xf32>
      %1123 = arith.subf %1122, %1099 : vector<8x128xf32>
      %1124 = arith.mulf %1123, %1121 : vector<8x128xf32>
      %1125 = arith.mulf %1094, %1099 : vector<8x128xf32>
      %1126 = arith.subf %1104, %1125 : vector<8x128xf32>
      %1127 = arith.mulf %1126, %1121 : vector<8x128xf32>
      %1128 = arith.mulf %721, %1124 : vector<8x128xf32>
      %1129 = arith.mulf %722, %1124 : vector<8x128xf32>
      %1130 = arith.mulf %723, %1124 : vector<8x128xf32>
      %1131 = arith.addf %673, %1128 : vector<8x128xf32>
      %1132 = arith.addf %674, %1129 : vector<8x128xf32>
      %1133 = arith.addf %675, %1130 : vector<8x128xf32>
      %1134 = arith.mulf %247, %1127 : vector<8x128xf32>
      %1135 = arith.mulf %248, %1127 : vector<8x128xf32>
      %1136 = arith.mulf %249, %1127 : vector<8x128xf32>
      %1137 = vector.broadcast %26 : f32 to vector<8x128xf32>
      %1138 = arith.addf %1137, %1134 : vector<8x128xf32>
      %1139 = vector.broadcast %27 : f32 to vector<8x128xf32>
      %1140 = arith.addf %1139, %1135 : vector<8x128xf32>
      %1141 = vector.broadcast %28 : f32 to vector<8x128xf32>
      %1142 = arith.addf %1141, %1136 : vector<8x128xf32>
      %1143 = arith.addf %1131, %1138 : vector<8x128xf32>
      %1144 = arith.addf %1132, %1140 : vector<8x128xf32>
      %1145 = arith.addf %1133, %1142 : vector<8x128xf32>
      %cst_179 = arith.constant 5.000000e-01 : f32
      %1146 = vector.broadcast %cst_179 : f32 to vector<8x128xf32>
      %1147 = arith.mulf %1143, %1146 : vector<8x128xf32>
      %cst_180 = arith.constant 5.000000e-01 : f32
      %1148 = vector.broadcast %cst_180 : f32 to vector<8x128xf32>
      %1149 = arith.mulf %1144, %1148 : vector<8x128xf32>
      %cst_181 = arith.constant 5.000000e-01 : f32
      %1150 = vector.broadcast %cst_181 : f32 to vector<8x128xf32>
      %1151 = arith.mulf %1145, %1150 : vector<8x128xf32>
      %1152 = arith.subf %1131, %1138 : vector<8x128xf32>
      %1153 = arith.subf %1132, %1140 : vector<8x128xf32>
      %1154 = arith.subf %1133, %1142 : vector<8x128xf32>
      %1155 = arith.mulf %1152, %1152 : vector<8x128xf32>
      %1156 = arith.mulf %1153, %1153 : vector<8x128xf32>
      %1157 = arith.addf %1155, %1156 : vector<8x128xf32>
      %1158 = arith.mulf %1154, %1154 : vector<8x128xf32>
      %1159 = arith.addf %1157, %1158 : vector<8x128xf32>
      %1160 = math.sqrt %1159 : vector<8x128xf32>
      %c12_182 = arith.constant 12 : index
      %1161 = arith.index_cast %66 : i32 to index
      %c0_183 = arith.constant 0 : index
      %1162 = vector.load %arg3[%c12_182, %1161, %c0_183] : memref<39x16x128xf32, #tpu.memory_space<vmem>>, vector<1x8x128xf32>
      %1163 = vector.shape_cast %1162 : vector<1x8x128xf32> to vector<8x128xf32>
      %1164 = vector.shape_cast %1147 : vector<8x128xf32> to vector<1x8x128xf32>
      tpu.vector_store %arg3[%c12_182, %1161, %c0_183], %1164 {strides = array<i32>} : memref<39x16x128xf32, #tpu.memory_space<vmem>>, vector<1x8x128xf32>,
      %c13_184 = arith.constant 13 : index
      %1165 = arith.index_cast %66 : i32 to index
      %c0_185 = arith.constant 0 : index
      %1166 = vector.load %arg3[%c13_184, %1165, %c0_185] : memref<39x16x128xf32, #tpu.memory_space<vmem>>, vector<1x8x128xf32>
      %1167 = vector.shape_cast %1166 : vector<1x8x128xf32> to vector<8x128xf32>
      %1168 = vector.shape_cast %1149 : vector<8x128xf32> to vector<1x8x128xf32>
      tpu.vector_store %arg3[%c13_184, %1165, %c0_185], %1168 {strides = array<i32>} : memref<39x16x128xf32, #tpu.memory_space<vmem>>, vector<1x8x128xf32>,
      %c14_186 = arith.constant 14 : index
      %1169 = arith.index_cast %66 : i32 to index
      %c0_187 = arith.constant 0 : index
      %1170 = vector.load %arg3[%c14_186, %1169, %c0_187] : memref<39x16x128xf32, #tpu.memory_space<vmem>>, vector<1x8x128xf32>
      %1171 = vector.shape_cast %1170 : vector<1x8x128xf32> to vector<8x128xf32>
      %1172 = vector.shape_cast %1151 : vector<8x128xf32> to vector<1x8x128xf32>
      tpu.vector_store %arg3[%c14_186, %1169, %c0_187], %1172 {strides = array<i32>} : memref<39x16x128xf32, #tpu.memory_space<vmem>>, vector<1x8x128xf32>,
      %c24_188 = arith.constant 24 : index
      %1173 = arith.index_cast %66 : i32 to index
      %c0_189 = arith.constant 0 : index
      %1174 = vector.load %arg3[%c24_188, %1173, %c0_189] : memref<39x16x128xf32, #tpu.memory_space<vmem>>, vector<1x8x128xf32>
      %1175 = vector.shape_cast %1174 : vector<1x8x128xf32> to vector<8x128xf32>
      %1176 = vector.shape_cast %1160 : vector<8x128xf32> to vector<1x8x128xf32>
      tpu.vector_store %arg3[%c24_188, %1173, %c0_189], %1176 {strides = array<i32>} : memref<39x16x128xf32, #tpu.memory_space<vmem>>, vector<1x8x128xf32>,
      %1177 = arith.addf %1081, %1147 : vector<8x128xf32>
      %1178 = arith.addf %1082, %1149 : vector<8x128xf32>
      %1179 = arith.addf %1083, %1151 : vector<8x128xf32>
      %1180 = vector.broadcast %26 : f32 to vector<8x128xf32>
      %1181 = arith.subf %426, %1180 : vector<8x128xf32>
      %1182 = vector.broadcast %27 : f32 to vector<8x128xf32>
      %1183 = arith.subf %427, %1182 : vector<8x128xf32>
      %1184 = vector.broadcast %28 : f32 to vector<8x128xf32>
      %1185 = arith.subf %428, %1184 : vector<8x128xf32>
      %1186 = arith.mulf %474, %247 : vector<8x128xf32>
      %1187 = arith.mulf %475, %248 : vector<8x128xf32>
      %1188 = arith.addf %1186, %1187 : vector<8x128xf32>
      %1189 = arith.mulf %476, %249 : vector<8x128xf32>
      %1190 = arith.addf %1188, %1189 : vector<8x128xf32>
      %1191 = arith.mulf %474, %1181 : vector<8x128xf32>
      %1192 = arith.mulf %475, %1183 : vector<8x128xf32>
      %1193 = arith.addf %1191, %1192 : vector<8x128xf32>
      %1194 = arith.mulf %476, %1185 : vector<8x128xf32>
      %1195 = arith.addf %1193, %1194 : vector<8x128xf32>
      %1196 = arith.mulf %247, %1181 : vector<8x128xf32>
      %1197 = arith.mulf %248, %1183 : vector<8x128xf32>
      %1198 = arith.addf %1196, %1197 : vector<8x128xf32>
      %1199 = arith.mulf %249, %1185 : vector<8x128xf32>
      %1200 = arith.addf %1198, %1199 : vector<8x128xf32>
      %1201 = arith.mulf %1190, %1190 : vector<8x128xf32>
      %cst_190 = arith.constant 1.000000e+00 : f32
      %1202 = vector.broadcast %cst_190 : f32 to vector<8x128xf32>
      %1203 = arith.subf %1202, %1201 : vector<8x128xf32>
      %cst_191 = arith.constant 0.000000e+00 : f32
      %1204 = vector.broadcast %cst_191 : f32 to vector<8x128xf32>
      %1205 = arith.cmpf olt, %1203, %1204 : vector<8x128xf32>
      %cst_192 = arith.constant -1.000000e+00 : f32
      %cst_193 = arith.constant 1.000000e+00 : f32
      %1206 = vector.broadcast %cst_192 : f32 to vector<8x128xf32>
      %1207 = vector.broadcast %cst_193 : f32 to vector<8x128xf32>
      %1208 = arith.select %1205, %1206, %1207 : vector<8x128xi1>, vector<8x128xf32>
      %1209 = math.absf %1203 : vector<8x128xf32>
      %cst_194 = arith.constant 9.99999971E-10 : f32
      %1210 = vector.broadcast %cst_194 : f32 to vector<8x128xf32>
      %1211 = arith.maximumf %1209, %1210 : vector<8x128xf32>
      %1212 = tpu.reciprocal %1211 {approx = true} : vector<8x128xf32> -> vector<8x128xf32>
      %1213 = arith.mulf %1211, %1212 : vector<8x128xf32>
      %cst_195 = arith.constant 2.000000e+00 : f32
      %1214 = vector.broadcast %cst_195 : f32 to vector<8x128xf32>
      %1215 = arith.subf %1214, %1213 : vector<8x128xf32>
      %1216 = arith.mulf %1212, %1215 : vector<8x128xf32>
      %1217 = arith.mulf %1208, %1216 : vector<8x128xf32>
      %1218 = arith.mulf %1190, %1200 : vector<8x128xf32>
      %1219 = arith.subf %1218, %1195 : vector<8x128xf32>
      %1220 = arith.mulf %1219, %1217 : vector<8x128xf32>
      %1221 = arith.mulf %1190, %1195 : vector<8x128xf32>
      %1222 = arith.subf %1200, %1221 : vector<8x128xf32>
      %1223 = arith.mulf %1222, %1217 : vector<8x128xf32>
      %1224 = arith.mulf %474, %1220 : vector<8x128xf32>
      %1225 = arith.mulf %475, %1220 : vector<8x128xf32>
      %1226 = arith.mulf %476, %1220 : vector<8x128xf32>
      %1227 = arith.addf %426, %1224 : vector<8x128xf32>
      %1228 = arith.addf %427, %1225 : vector<8x128xf32>
      %1229 = arith.addf %428, %1226 : vector<8x128xf32>
      %1230 = arith.mulf %247, %1223 : vector<8x128xf32>
      %1231 = arith.mulf %248, %1223 : vector<8x128xf32>
      %1232 = arith.mulf %249, %1223 : vector<8x128xf32>
      %1233 = vector.broadcast %26 : f32 to vector<8x128xf32>
      %1234 = arith.addf %1233, %1230 : vector<8x128xf32>
      %1235 = vector.broadcast %27 : f32 to vector<8x128xf32>
      %1236 = arith.addf %1235, %1231 : vector<8x128xf32>
      %1237 = vector.broadcast %28 : f32 to vector<8x128xf32>
      %1238 = arith.addf %1237, %1232 : vector<8x128xf32>
      %1239 = arith.addf %1227, %1234 : vector<8x128xf32>
      %1240 = arith.addf %1228, %1236 : vector<8x128xf32>
      %1241 = arith.addf %1229, %1238 : vector<8x128xf32>
      %cst_196 = arith.constant 5.000000e-01 : f32
      %1242 = vector.broadcast %cst_196 : f32 to vector<8x128xf32>
      %1243 = arith.mulf %1239, %1242 : vector<8x128xf32>
      %cst_197 = arith.constant 5.000000e-01 : f32
      %1244 = vector.broadcast %cst_197 : f32 to vector<8x128xf32>
      %1245 = arith.mulf %1240, %1244 : vector<8x128xf32>
      %cst_198 = arith.constant 5.000000e-01 : f32
      %1246 = vector.broadcast %cst_198 : f32 to vector<8x128xf32>
      %1247 = arith.mulf %1241, %1246 : vector<8x128xf32>
      %1248 = arith.subf %1227, %1234 : vector<8x128xf32>
      %1249 = arith.subf %1228, %1236 : vector<8x128xf32>
      %1250 = arith.subf %1229, %1238 : vector<8x128xf32>
      %1251 = arith.mulf %1248, %1248 : vector<8x128xf32>
      %1252 = arith.mulf %1249, %1249 : vector<8x128xf32>
      %1253 = arith.addf %1251, %1252 : vector<8x128xf32>
      %1254 = arith.mulf %1250, %1250 : vector<8x128xf32>
      %1255 = arith.addf %1253, %1254 : vector<8x128xf32>
      %1256 = math.sqrt %1255 : vector<8x128xf32>
      %c15_199 = arith.constant 15 : index
      %1257 = arith.index_cast %66 : i32 to index
      %c0_200 = arith.constant 0 : index
      %1258 = vector.load %arg3[%c15_199, %1257, %c0_200] : memref<39x16x128xf32, #tpu.memory_space<vmem>>, vector<1x8x128xf32>
      %1259 = vector.shape_cast %1258 : vector<1x8x128xf32> to vector<8x128xf32>
      %1260 = vector.shape_cast %1243 : vector<8x128xf32> to vector<1x8x128xf32>
      tpu.vector_store %arg3[%c15_199, %1257, %c0_200], %1260 {strides = array<i32>} : memref<39x16x128xf32, #tpu.memory_space<vmem>>, vector<1x8x128xf32>,
      %c16_201 = arith.constant 16 : index
      %1261 = arith.index_cast %66 : i32 to index
      %c0_202 = arith.constant 0 : index
      %1262 = vector.load %arg3[%c16_201, %1261, %c0_202] : memref<39x16x128xf32, #tpu.memory_space<vmem>>, vector<1x8x128xf32>
      %1263 = vector.shape_cast %1262 : vector<1x8x128xf32> to vector<8x128xf32>
      %1264 = vector.shape_cast %1245 : vector<8x128xf32> to vector<1x8x128xf32>
      tpu.vector_store %arg3[%c16_201, %1261, %c0_202], %1264 {strides = array<i32>} : memref<39x16x128xf32, #tpu.memory_space<vmem>>, vector<1x8x128xf32>,
      %c17_203 = arith.constant 17 : index
      %1265 = arith.index_cast %66 : i32 to index
      %c0_204 = arith.constant 0 : index
      %1266 = vector.load %arg3[%c17_203, %1265, %c0_204] : memref<39x16x128xf32, #tpu.memory_space<vmem>>, vector<1x8x128xf32>
      %1267 = vector.shape_cast %1266 : vector<1x8x128xf32> to vector<8x128xf32>
      %1268 = vector.shape_cast %1247 : vector<8x128xf32> to vector<1x8x128xf32>
      tpu.vector_store %arg3[%c17_203, %1265, %c0_204], %1268 {strides = array<i32>} : memref<39x16x128xf32, #tpu.memory_space<vmem>>, vector<1x8x128xf32>,
      %c25_205 = arith.constant 25 : index
      %1269 = arith.index_cast %66 : i32 to index
      %c0_206 = arith.constant 0 : index
      %1270 = vector.load %arg3[%c25_205, %1269, %c0_206] : memref<39x16x128xf32, #tpu.memory_space<vmem>>, vector<1x8x128xf32>
      %1271 = vector.shape_cast %1270 : vector<1x8x128xf32> to vector<8x128xf32>
      %1272 = vector.shape_cast %1256 : vector<8x128xf32> to vector<1x8x128xf32>
      tpu.vector_store %arg3[%c25_205, %1269, %c0_206], %1272 {strides = array<i32>} : memref<39x16x128xf32, #tpu.memory_space<vmem>>, vector<1x8x128xf32>,
      %1273 = arith.addf %1177, %1243 : vector<8x128xf32>
      %1274 = arith.addf %1178, %1245 : vector<8x128xf32>
      %1275 = arith.addf %1179, %1247 : vector<8x128xf32>
      %cst_207 = arith.constant 0.000000e+00 : f32
      %1276 = vector.broadcast %cst_207 : f32 to vector<8x128xf32>
      %1277 = arith.subf %673, %1276 : vector<8x128xf32>
      %cst_208 = arith.constant 0.000000e+00 : f32
      %1278 = vector.broadcast %cst_208 : f32 to vector<8x128xf32>
      %1279 = arith.subf %674, %1278 : vector<8x128xf32>
      %cst_209 = arith.constant 0.000000e+00 : f32
      %1280 = vector.broadcast %cst_209 : f32 to vector<8x128xf32>
      %1281 = arith.subf %675, %1280 : vector<8x128xf32>
      %1282 = arith.mulf %721, %211 : vector<8x128xf32>
      %1283 = arith.mulf %722, %212 : vector<8x128xf32>
      %1284 = arith.addf %1282, %1283 : vector<8x128xf32>
      %1285 = arith.mulf %723, %214 : vector<8x128xf32>
      %1286 = arith.addf %1284, %1285 : vector<8x128xf32>
      %1287 = arith.mulf %721, %1277 : vector<8x128xf32>
      %1288 = arith.mulf %722, %1279 : vector<8x128xf32>
      %1289 = arith.addf %1287, %1288 : vector<8x128xf32>
      %1290 = arith.mulf %723, %1281 : vector<8x128xf32>
      %1291 = arith.addf %1289, %1290 : vector<8x128xf32>
      %1292 = arith.mulf %211, %1277 : vector<8x128xf32>
      %1293 = arith.mulf %212, %1279 : vector<8x128xf32>
      %1294 = arith.addf %1292, %1293 : vector<8x128xf32>
      %1295 = arith.mulf %214, %1281 : vector<8x128xf32>
      %1296 = arith.addf %1294, %1295 : vector<8x128xf32>
      %1297 = arith.mulf %1286, %1286 : vector<8x128xf32>
      %cst_210 = arith.constant 1.000000e+00 : f32
      %1298 = vector.broadcast %cst_210 : f32 to vector<8x128xf32>
      %1299 = arith.subf %1298, %1297 : vector<8x128xf32>
      %cst_211 = arith.constant 0.000000e+00 : f32
      %1300 = vector.broadcast %cst_211 : f32 to vector<8x128xf32>
      %1301 = arith.cmpf olt, %1299, %1300 : vector<8x128xf32>
      %cst_212 = arith.constant -1.000000e+00 : f32
      %cst_213 = arith.constant 1.000000e+00 : f32
      %1302 = vector.broadcast %cst_212 : f32 to vector<8x128xf32>
      %1303 = vector.broadcast %cst_213 : f32 to vector<8x128xf32>
      %1304 = arith.select %1301, %1302, %1303 : vector<8x128xi1>, vector<8x128xf32>
      %1305 = math.absf %1299 : vector<8x128xf32>
      %cst_214 = arith.constant 9.99999971E-10 : f32
      %1306 = vector.broadcast %cst_214 : f32 to vector<8x128xf32>
      %1307 = arith.maximumf %1305, %1306 : vector<8x128xf32>
      %1308 = tpu.reciprocal %1307 {approx = true} : vector<8x128xf32> -> vector<8x128xf32>
      %1309 = arith.mulf %1307, %1308 : vector<8x128xf32>
      %cst_215 = arith.constant 2.000000e+00 : f32
      %1310 = vector.broadcast %cst_215 : f32 to vector<8x128xf32>
      %1311 = arith.subf %1310, %1309 : vector<8x128xf32>
      %1312 = arith.mulf %1308, %1311 : vector<8x128xf32>
      %1313 = arith.mulf %1304, %1312 : vector<8x128xf32>
      %1314 = arith.mulf %1286, %1296 : vector<8x128xf32>
      %1315 = arith.subf %1314, %1291 : vector<8x128xf32>
      %1316 = arith.mulf %1315, %1313 : vector<8x128xf32>
      %1317 = arith.mulf %1286, %1291 : vector<8x128xf32>
      %1318 = arith.subf %1296, %1317 : vector<8x128xf32>
      %1319 = arith.mulf %1318, %1313 : vector<8x128xf32>
      %1320 = arith.mulf %721, %1316 : vector<8x128xf32>
      %1321 = arith.mulf %722, %1316 : vector<8x128xf32>
      %1322 = arith.mulf %723, %1316 : vector<8x128xf32>
      %1323 = arith.addf %673, %1320 : vector<8x128xf32>
      %1324 = arith.addf %674, %1321 : vector<8x128xf32>
      %1325 = arith.addf %675, %1322 : vector<8x128xf32>
      %1326 = arith.mulf %211, %1319 : vector<8x128xf32>
      %1327 = arith.mulf %212, %1319 : vector<8x128xf32>
      %1328 = arith.mulf %214, %1319 : vector<8x128xf32>
      %cst_216 = arith.constant 0.000000e+00 : f32
      %1329 = vector.broadcast %cst_216 : f32 to vector<8x128xf32>
      %1330 = arith.addf %1329, %1326 : vector<8x128xf32>
      %cst_217 = arith.constant 0.000000e+00 : f32
      %1331 = vector.broadcast %cst_217 : f32 to vector<8x128xf32>
      %1332 = arith.addf %1331, %1327 : vector<8x128xf32>
      %cst_218 = arith.constant 0.000000e+00 : f32
      %1333 = vector.broadcast %cst_218 : f32 to vector<8x128xf32>
      %1334 = arith.addf %1333, %1328 : vector<8x128xf32>
      %1335 = arith.addf %1323, %1330 : vector<8x128xf32>
      %1336 = arith.addf %1324, %1332 : vector<8x128xf32>
      %1337 = arith.addf %1325, %1334 : vector<8x128xf32>
      %cst_219 = arith.constant 5.000000e-01 : f32
      %1338 = vector.broadcast %cst_219 : f32 to vector<8x128xf32>
      %1339 = arith.mulf %1335, %1338 : vector<8x128xf32>
      %cst_220 = arith.constant 5.000000e-01 : f32
      %1340 = vector.broadcast %cst_220 : f32 to vector<8x128xf32>
      %1341 = arith.mulf %1336, %1340 : vector<8x128xf32>
      %cst_221 = arith.constant 5.000000e-01 : f32
      %1342 = vector.broadcast %cst_221 : f32 to vector<8x128xf32>
      %1343 = arith.mulf %1337, %1342 : vector<8x128xf32>
      %1344 = arith.subf %1323, %1330 : vector<8x128xf32>
      %1345 = arith.subf %1324, %1332 : vector<8x128xf32>
      %1346 = arith.subf %1325, %1334 : vector<8x128xf32>
      %1347 = arith.mulf %1344, %1344 : vector<8x128xf32>
      %1348 = arith.mulf %1345, %1345 : vector<8x128xf32>
      %1349 = arith.addf %1347, %1348 : vector<8x128xf32>
      %1350 = arith.mulf %1346, %1346 : vector<8x128xf32>
      %1351 = arith.addf %1349, %1350 : vector<8x128xf32>
      %1352 = math.sqrt %1351 : vector<8x128xf32>
      %c18_222 = arith.constant 18 : index
      %1353 = arith.index_cast %66 : i32 to index
      %c0_223 = arith.constant 0 : index
      %1354 = vector.load %arg3[%c18_222, %1353, %c0_223] : memref<39x16x128xf32, #tpu.memory_space<vmem>>, vector<1x8x128xf32>
      %1355 = vector.shape_cast %1354 : vector<1x8x128xf32> to vector<8x128xf32>
      %1356 = vector.shape_cast %1339 : vector<8x128xf32> to vector<1x8x128xf32>
      tpu.vector_store %arg3[%c18_222, %1353, %c0_223], %1356 {strides = array<i32>} : memref<39x16x128xf32, #tpu.memory_space<vmem>>, vector<1x8x128xf32>,
      %c19_224 = arith.constant 19 : index
      %1357 = arith.index_cast %66 : i32 to index
      %c0_225 = arith.constant 0 : index
      %1358 = vector.load %arg3[%c19_224, %1357, %c0_225] : memref<39x16x128xf32, #tpu.memory_space<vmem>>, vector<1x8x128xf32>
      %1359 = vector.shape_cast %1358 : vector<1x8x128xf32> to vector<8x128xf32>
      %1360 = vector.shape_cast %1341 : vector<8x128xf32> to vector<1x8x128xf32>
      tpu.vector_store %arg3[%c19_224, %1357, %c0_225], %1360 {strides = array<i32>} : memref<39x16x128xf32, #tpu.memory_space<vmem>>, vector<1x8x128xf32>,
      %c20_226 = arith.constant 20 : index
      %1361 = arith.index_cast %66 : i32 to index
      %c0_227 = arith.constant 0 : index
      %1362 = vector.load %arg3[%c20_226, %1361, %c0_227] : memref<39x16x128xf32, #tpu.memory_space<vmem>>, vector<1x8x128xf32>
      %1363 = vector.shape_cast %1362 : vector<1x8x128xf32> to vector<8x128xf32>
      %1364 = vector.shape_cast %1343 : vector<8x128xf32> to vector<1x8x128xf32>
      tpu.vector_store %arg3[%c20_226, %1361, %c0_227], %1364 {strides = array<i32>} : memref<39x16x128xf32, #tpu.memory_space<vmem>>, vector<1x8x128xf32>,
      %c26_228 = arith.constant 26 : index
      %1365 = arith.index_cast %66 : i32 to index
      %c0_229 = arith.constant 0 : index
      %1366 = vector.load %arg3[%c26_228, %1365, %c0_229] : memref<39x16x128xf32, #tpu.memory_space<vmem>>, vector<1x8x128xf32>
      %1367 = vector.shape_cast %1366 : vector<1x8x128xf32> to vector<8x128xf32>
      %1368 = vector.shape_cast %1352 : vector<8x128xf32> to vector<1x8x128xf32>
      tpu.vector_store %arg3[%c26_228, %1365, %c0_229], %1368 {strides = array<i32>} : memref<39x16x128xf32, #tpu.memory_space<vmem>>, vector<1x8x128xf32>,
      %1369 = arith.addf %1273, %1339 : vector<8x128xf32>
      %1370 = arith.addf %1274, %1341 : vector<8x128xf32>
      %1371 = arith.addf %1275, %1343 : vector<8x128xf32>
      %cst_230 = arith.constant 0.166666672 : f32
      %1372 = vector.broadcast %cst_230 : f32 to vector<8x128xf32>
      %1373 = arith.mulf %1369, %1372 : vector<8x128xf32>
      %cst_231 = arith.constant 0.166666672 : f32
      %1374 = vector.broadcast %cst_231 : f32 to vector<8x128xf32>
      %1375 = arith.mulf %1370, %1374 : vector<8x128xf32>
      %cst_232 = arith.constant 0.166666672 : f32
      %1376 = vector.broadcast %cst_232 : f32 to vector<8x128xf32>
      %1377 = arith.mulf %1371, %1376 : vector<8x128xf32>
      %c0_233 = arith.constant 0 : index
      %1378 = arith.index_cast %66 : i32 to index
      %c0_234 = arith.constant 0 : index
      %1379 = vector.load %arg3[%c0_233, %1378, %c0_234] : memref<39x16x128xf32, #tpu.memory_space<vmem>>, vector<1x8x128xf32>
      %1380 = vector.shape_cast %1379 : vector<1x8x128xf32> to vector<8x128xf32>
      %1381 = vector.shape_cast %1373 : vector<8x128xf32> to vector<1x8x128xf32>
      tpu.vector_store %arg3[%c0_233, %1378, %c0_234], %1381 {strides = array<i32>} : memref<39x16x128xf32, #tpu.memory_space<vmem>>, vector<1x8x128xf32>,
      %c1_235 = arith.constant 1 : index
      %1382 = arith.index_cast %66 : i32 to index
      %c0_236 = arith.constant 0 : index
      %1383 = vector.load %arg3[%c1_235, %1382, %c0_236] : memref<39x16x128xf32, #tpu.memory_space<vmem>>, vector<1x8x128xf32>
      %1384 = vector.shape_cast %1383 : vector<1x8x128xf32> to vector<8x128xf32>
      %1385 = vector.shape_cast %1375 : vector<8x128xf32> to vector<1x8x128xf32>
      tpu.vector_store %arg3[%c1_235, %1382, %c0_236], %1385 {strides = array<i32>} : memref<39x16x128xf32, #tpu.memory_space<vmem>>, vector<1x8x128xf32>,
      %c2_237 = arith.constant 2 : index
      %1386 = arith.index_cast %66 : i32 to index
      %c0_238 = arith.constant 0 : index
      %1387 = vector.load %arg3[%c2_237, %1386, %c0_238] : memref<39x16x128xf32, #tpu.memory_space<vmem>>, vector<1x8x128xf32>
      %1388 = vector.shape_cast %1387 : vector<1x8x128xf32> to vector<8x128xf32>
      %1389 = vector.shape_cast %1377 : vector<8x128xf32> to vector<1x8x128xf32>
      tpu.vector_store %arg3[%c2_237, %1386, %c0_238], %1389 {strides = array<i32>} : memref<39x16x128xf32, #tpu.memory_space<vmem>>, vector<1x8x128xf32>,
      %cst_239 = arith.constant 0.000000e+00 : f32
      %1390 = vector.broadcast %cst_239 : f32 to vector<8x128xf32>
      %1391 = arith.cmpf olt, %1377, %1390 : vector<8x128xf32>
      %cst_240 = arith.constant -1.000000e+00 : f32
      %cst_241 = arith.constant 1.000000e+00 : f32
      %1392 = vector.broadcast %cst_240 : f32 to vector<8x128xf32>
      %1393 = vector.broadcast %cst_241 : f32 to vector<8x128xf32>
      %1394 = arith.select %1391, %1392, %1393 : vector<8x128xi1>, vector<8x128xf32>
      %1395 = math.absf %1377 : vector<8x128xf32>
      %cst_242 = arith.constant 9.99999971E-10 : f32
      %1396 = vector.broadcast %cst_242 : f32 to vector<8x128xf32>
      %1397 = arith.maximumf %1395, %1396 : vector<8x128xf32>
      %1398 = tpu.reciprocal %1397 {approx = true} : vector<8x128xf32> -> vector<8x128xf32>
      %1399 = arith.mulf %1397, %1398 : vector<8x128xf32>
      %cst_243 = arith.constant 2.000000e+00 : f32
      %1400 = vector.broadcast %cst_243 : f32 to vector<8x128xf32>
      %1401 = arith.subf %1400, %1399 : vector<8x128xf32>
      %1402 = arith.mulf %1398, %1401 : vector<8x128xf32>
      %1403 = arith.mulf %1394, %1402 : vector<8x128xf32>
      %1404 = arith.mulf %1373, %1403 : vector<8x128xf32>
      %1405 = arith.mulf %1375, %1403 : vector<8x128xf32>
      %1406 = arith.mulf %1404, %1404 : vector<8x128xf32>
      %1407 = arith.mulf %1405, %1405 : vector<8x128xf32>
      %1408 = arith.addf %1406, %1407 : vector<8x128xf32>
      %1409 = vector.broadcast %6 : f32 to vector<8x128xf32>
      %1410 = arith.mulf %1408, %1409 : vector<8x128xf32>
      %1411 = vector.broadcast %5 : f32 to vector<8x128xf32>
      %1412 = arith.addf %1411, %1410 : vector<8x128xf32>
      %1413 = arith.mulf %1408, %1412 : vector<8x128xf32>
      %1414 = vector.broadcast %4 : f32 to vector<8x128xf32>
      %1415 = arith.addf %1414, %1413 : vector<8x128xf32>
      %1416 = arith.mulf %1408, %1415 : vector<8x128xf32>
      %cst_244 = arith.constant 1.000000e+00 : f32
      %1417 = vector.broadcast %cst_244 : f32 to vector<8x128xf32>
      %1418 = arith.addf %1417, %1416 : vector<8x128xf32>
      %1419 = arith.mulf %1404, %1418 : vector<8x128xf32>
      %1420 = arith.mulf %1405, %1418 : vector<8x128xf32>
      %1421 = vector.broadcast %2 : f32 to vector<8x128xf32>
      %1422 = arith.mulf %1419, %1421 : vector<8x128xf32>
      %1423 = vector.broadcast %0 : f32 to vector<8x128xf32>
      %1424 = arith.addf %1422, %1423 : vector<8x128xf32>
      %1425 = vector.broadcast %2 : f32 to vector<8x128xf32>
      %1426 = arith.mulf %1420, %1425 : vector<8x128xf32>
      %1427 = vector.broadcast %1 : f32 to vector<8x128xf32>
      %1428 = arith.addf %1426, %1427 : vector<8x128xf32>
      %c27_245 = arith.constant 27 : index
      %1429 = arith.index_cast %66 : i32 to index
      %c0_246 = arith.constant 0 : index
      %1430 = vector.load %arg3[%c27_245, %1429, %c0_246] : memref<39x16x128xf32, #tpu.memory_space<vmem>>, vector<1x8x128xf32>
      %1431 = vector.shape_cast %1430 : vector<1x8x128xf32> to vector<8x128xf32>
      %1432 = vector.shape_cast %1424 : vector<8x128xf32> to vector<1x8x128xf32>
      tpu.vector_store %arg3[%c27_245, %1429, %c0_246], %1432 {strides = array<i32>} : memref<39x16x128xf32, #tpu.memory_space<vmem>>, vector<1x8x128xf32>,
      %c28_247 = arith.constant 28 : index
      %1433 = arith.index_cast %66 : i32 to index
      %c0_248 = arith.constant 0 : index
      %1434 = vector.load %arg3[%c28_247, %1433, %c0_248] : memref<39x16x128xf32, #tpu.memory_space<vmem>>, vector<1x8x128xf32>
      %1435 = vector.shape_cast %1434 : vector<1x8x128xf32> to vector<8x128xf32>
      %1436 = vector.shape_cast %1428 : vector<8x128xf32> to vector<1x8x128xf32>
      tpu.vector_store %arg3[%c28_247, %1433, %c0_248], %1436 {strides = array<i32>} : memref<39x16x128xf32, #tpu.memory_space<vmem>>, vector<1x8x128xf32>,
      %1437 = arith.mulf %1419, %1419 : vector<8x128xf32>
      %1438 = arith.mulf %1420, %1420 : vector<8x128xf32>
      %1439 = arith.addf %1437, %1438 : vector<8x128xf32>
      %1440 = vector.broadcast %6 : f32 to vector<8x128xf32>
      %1441 = arith.mulf %1439, %1440 : vector<8x128xf32>
      %1442 = vector.broadcast %5 : f32 to vector<8x128xf32>
      %1443 = arith.addf %1442, %1441 : vector<8x128xf32>
      %1444 = arith.mulf %1439, %1443 : vector<8x128xf32>
      %1445 = vector.broadcast %4 : f32 to vector<8x128xf32>
      %1446 = arith.addf %1445, %1444 : vector<8x128xf32>
      %1447 = arith.mulf %1439, %1446 : vector<8x128xf32>
      %1448 = arith.mulf %1447, %1447 : vector<8x128xf32>
      %c37_249 = arith.constant 37 : index
      %1449 = arith.index_cast %66 : i32 to index
      %c0_250 = arith.constant 0 : index
      %1450 = vector.load %arg3[%c37_249, %1449, %c0_250] : memref<39x16x128xf32, #tpu.memory_space<vmem>>, vector<1x8x128xf32>
      %1451 = vector.shape_cast %1450 : vector<1x8x128xf32> to vector<8x128xf32>
      %1452 = vector.shape_cast %1448 : vector<8x128xf32> to vector<1x8x128xf32>
      tpu.vector_store %arg3[%c37_249, %1449, %c0_250], %1452 {strides = array<i32>} : memref<39x16x128xf32, #tpu.memory_space<vmem>>, vector<1x8x128xf32>,
      %1453 = vector.broadcast %14 : f32 to vector<8x128xf32>
      %1454 = arith.mulf %1453, %1373 : vector<8x128xf32>
      %1455 = vector.broadcast %15 : f32 to vector<8x128xf32>
      %1456 = arith.mulf %1455, %1375 : vector<8x128xf32>
      %1457 = arith.addf %1454, %1456 : vector<8x128xf32>
      %1458 = vector.broadcast %16 : f32 to vector<8x128xf32>
      %1459 = arith.mulf %1458, %1377 : vector<8x128xf32>
      %1460 = arith.addf %1457, %1459 : vector<8x128xf32>
      %1461 = vector.broadcast %17 : f32 to vector<8x128xf32>
      %1462 = arith.mulf %1461, %1373 : vector<8x128xf32>
      %1463 = vector.broadcast %18 : f32 to vector<8x128xf32>
      %1464 = arith.mulf %1463, %1375 : vector<8x128xf32>
      %1465 = arith.addf %1462, %1464 : vector<8x128xf32>
      %1466 = vector.broadcast %19 : f32 to vector<8x128xf32>
      %1467 = arith.mulf %1466, %1377 : vector<8x128xf32>
      %1468 = arith.addf %1465, %1467 : vector<8x128xf32>
      %1469 = vector.broadcast %20 : f32 to vector<8x128xf32>
      %1470 = arith.mulf %1469, %1373 : vector<8x128xf32>
      %1471 = vector.broadcast %21 : f32 to vector<8x128xf32>
      %1472 = arith.mulf %1471, %1375 : vector<8x128xf32>
      %1473 = arith.addf %1470, %1472 : vector<8x128xf32>
      %1474 = vector.broadcast %22 : f32 to vector<8x128xf32>
      %1475 = arith.mulf %1474, %1377 : vector<8x128xf32>
      %1476 = arith.addf %1473, %1475 : vector<8x128xf32>
      %1477 = vector.broadcast %23 : f32 to vector<8x128xf32>
      %1478 = arith.addf %1460, %1477 : vector<8x128xf32>
      %1479 = vector.broadcast %24 : f32 to vector<8x128xf32>
      %1480 = arith.addf %1468, %1479 : vector<8x128xf32>
      %1481 = vector.broadcast %25 : f32 to vector<8x128xf32>
      %1482 = arith.addf %1476, %1481 : vector<8x128xf32>
      %cst_251 = arith.constant 0.000000e+00 : f32
      %1483 = vector.broadcast %cst_251 : f32 to vector<8x128xf32>
      %1484 = arith.cmpf olt, %1482, %1483 : vector<8x128xf32>
      %cst_252 = arith.constant -1.000000e+00 : f32
      %cst_253 = arith.constant 1.000000e+00 : f32
      %1485 = vector.broadcast %cst_252 : f32 to vector<8x128xf32>
      %1486 = vector.broadcast %cst_253 : f32 to vector<8x128xf32>
      %1487 = arith.select %1484, %1485, %1486 : vector<8x128xi1>, vector<8x128xf32>
      %1488 = math.absf %1482 : vector<8x128xf32>
      %cst_254 = arith.constant 9.99999971E-10 : f32
      %1489 = vector.broadcast %cst_254 : f32 to vector<8x128xf32>
      %1490 = arith.maximumf %1488, %1489 : vector<8x128xf32>
      %1491 = tpu.reciprocal %1490 {approx = true} : vector<8x128xf32> -> vector<8x128xf32>
      %1492 = arith.mulf %1490, %1491 : vector<8x128xf32>
      %cst_255 = arith.constant 2.000000e+00 : f32
      %1493 = vector.broadcast %cst_255 : f32 to vector<8x128xf32>
      %1494 = arith.subf %1493, %1492 : vector<8x128xf32>
      %1495 = arith.mulf %1491, %1494 : vector<8x128xf32>
      %1496 = arith.mulf %1487, %1495 : vector<8x128xf32>
      %1497 = arith.mulf %1478, %1496 : vector<8x128xf32>
      %1498 = arith.mulf %1480, %1496 : vector<8x128xf32>
      %1499 = arith.mulf %1497, %1497 : vector<8x128xf32>
      %1500 = arith.mulf %1498, %1498 : vector<8x128xf32>
      %1501 = arith.addf %1499, %1500 : vector<8x128xf32>
      %1502 = vector.broadcast %13 : f32 to vector<8x128xf32>
      %1503 = arith.mulf %1501, %1502 : vector<8x128xf32>
      %1504 = vector.broadcast %12 : f32 to vector<8x128xf32>
      %1505 = arith.addf %1504, %1503 : vector<8x128xf32>
      %1506 = arith.mulf %1501, %1505 : vector<8x128xf32>
      %1507 = vector.broadcast %11 : f32 to vector<8x128xf32>
      %1508 = arith.addf %1507, %1506 : vector<8x128xf32>
      %1509 = arith.mulf %1501, %1508 : vector<8x128xf32>
      %cst_256 = arith.constant 1.000000e+00 : f32
      %1510 = vector.broadcast %cst_256 : f32 to vector<8x128xf32>
      %1511 = arith.addf %1510, %1509 : vector<8x128xf32>
      %1512 = arith.mulf %1497, %1511 : vector<8x128xf32>
      %1513 = arith.mulf %1498, %1511 : vector<8x128xf32>
      %1514 = vector.broadcast %9 : f32 to vector<8x128xf32>
      %1515 = arith.mulf %1512, %1514 : vector<8x128xf32>
      %1516 = vector.broadcast %7 : f32 to vector<8x128xf32>
      %1517 = arith.addf %1515, %1516 : vector<8x128xf32>
      %1518 = vector.broadcast %9 : f32 to vector<8x128xf32>
      %1519 = arith.mulf %1513, %1518 : vector<8x128xf32>
      %1520 = vector.broadcast %8 : f32 to vector<8x128xf32>
      %1521 = arith.addf %1519, %1520 : vector<8x128xf32>
      %c29_257 = arith.constant 29 : index
      %1522 = arith.index_cast %66 : i32 to index
      %c0_258 = arith.constant 0 : index
      %1523 = vector.load %arg3[%c29_257, %1522, %c0_258] : memref<39x16x128xf32, #tpu.memory_space<vmem>>, vector<1x8x128xf32>
      %1524 = vector.shape_cast %1523 : vector<1x8x128xf32> to vector<8x128xf32>
      %1525 = vector.shape_cast %1517 : vector<8x128xf32> to vector<1x8x128xf32>
      tpu.vector_store %arg3[%c29_257, %1522, %c0_258], %1525 {strides = array<i32>} : memref<39x16x128xf32, #tpu.memory_space<vmem>>, vector<1x8x128xf32>,
      %c30_259 = arith.constant 30 : index
      %1526 = arith.index_cast %66 : i32 to index
      %c0_260 = arith.constant 0 : index
      %1527 = vector.load %arg3[%c30_259, %1526, %c0_260] : memref<39x16x128xf32, #tpu.memory_space<vmem>>, vector<1x8x128xf32>
      %1528 = vector.shape_cast %1527 : vector<1x8x128xf32> to vector<8x128xf32>
      %1529 = vector.shape_cast %1521 : vector<8x128xf32> to vector<1x8x128xf32>
      tpu.vector_store %arg3[%c30_259, %1526, %c0_260], %1529 {strides = array<i32>} : memref<39x16x128xf32, #tpu.memory_space<vmem>>, vector<1x8x128xf32>,
      %1530 = arith.mulf %1512, %1512 : vector<8x128xf32>
      %1531 = arith.mulf %1513, %1513 : vector<8x128xf32>
      %1532 = arith.addf %1530, %1531 : vector<8x128xf32>
      %1533 = vector.broadcast %13 : f32 to vector<8x128xf32>
      %1534 = arith.mulf %1532, %1533 : vector<8x128xf32>
      %1535 = vector.broadcast %12 : f32 to vector<8x128xf32>
      %1536 = arith.addf %1535, %1534 : vector<8x128xf32>
      %1537 = arith.mulf %1532, %1536 : vector<8x128xf32>
      %1538 = vector.broadcast %11 : f32 to vector<8x128xf32>
      %1539 = arith.addf %1538, %1537 : vector<8x128xf32>
      %1540 = arith.mulf %1532, %1539 : vector<8x128xf32>
      %1541 = arith.mulf %1540, %1540 : vector<8x128xf32>
      %c38_261 = arith.constant 38 : index
      %1542 = arith.index_cast %66 : i32 to index
      %c0_262 = arith.constant 0 : index
      %1543 = vector.load %arg3[%c38_261, %1542, %c0_262] : memref<39x16x128xf32, #tpu.memory_space<vmem>>, vector<1x8x128xf32>
      %1544 = vector.shape_cast %1543 : vector<1x8x128xf32> to vector<8x128xf32>
      %1545 = vector.shape_cast %1541 : vector<8x128xf32> to vector<1x8x128xf32>
      tpu.vector_store %arg3[%c38_261, %1542, %c0_262], %1545 {strides = array<i32>} : memref<39x16x128xf32, #tpu.memory_space<vmem>>, vector<1x8x128xf32>,
      %cst_263 = arith.constant 0.000000e+00 : f32
      %1546 = vector.broadcast %cst_263 : f32 to vector<8x128xf32>
      %1547 = arith.cmpf olt, %959, %1546 : vector<8x128xf32>
      %cst_264 = arith.constant -1.000000e+00 : f32
      %cst_265 = arith.constant 1.000000e+00 : f32
      %1548 = vector.broadcast %cst_264 : f32 to vector<8x128xf32>
      %1549 = vector.broadcast %cst_265 : f32 to vector<8x128xf32>
      %1550 = arith.select %1547, %1548, %1549 : vector<8x128xi1>, vector<8x128xf32>
      %1551 = math.absf %959 : vector<8x128xf32>
      %cst_266 = arith.constant 9.99999971E-10 : f32
      %1552 = vector.broadcast %cst_266 : f32 to vector<8x128xf32>
      %1553 = arith.maximumf %1551, %1552 : vector<8x128xf32>
      %1554 = tpu.reciprocal %1553 {approx = true} : vector<8x128xf32> -> vector<8x128xf32>
      %1555 = arith.mulf %1553, %1554 : vector<8x128xf32>
      %cst_267 = arith.constant 2.000000e+00 : f32
      %1556 = vector.broadcast %cst_267 : f32 to vector<8x128xf32>
      %1557 = arith.subf %1556, %1555 : vector<8x128xf32>
      %1558 = arith.mulf %1554, %1557 : vector<8x128xf32>
      %1559 = arith.mulf %1550, %1558 : vector<8x128xf32>
      %1560 = arith.mulf %955, %1559 : vector<8x128xf32>
      %1561 = arith.mulf %957, %1559 : vector<8x128xf32>
      %1562 = arith.mulf %1560, %1560 : vector<8x128xf32>
      %1563 = arith.mulf %1561, %1561 : vector<8x128xf32>
      %1564 = arith.addf %1562, %1563 : vector<8x128xf32>
      %1565 = vector.broadcast %6 : f32 to vector<8x128xf32>
      %1566 = arith.mulf %1564, %1565 : vector<8x128xf32>
      %1567 = vector.broadcast %5 : f32 to vector<8x128xf32>
      %1568 = arith.addf %1567, %1566 : vector<8x128xf32>
      %1569 = arith.mulf %1564, %1568 : vector<8x128xf32>
      %1570 = vector.broadcast %4 : f32 to vector<8x128xf32>
      %1571 = arith.addf %1570, %1569 : vector<8x128xf32>
      %1572 = arith.mulf %1564, %1571 : vector<8x128xf32>
      %cst_268 = arith.constant 1.000000e+00 : f32
      %1573 = vector.broadcast %cst_268 : f32 to vector<8x128xf32>
      %1574 = arith.addf %1573, %1572 : vector<8x128xf32>
      %1575 = arith.mulf %1560, %1574 : vector<8x128xf32>
      %1576 = arith.mulf %1561, %1574 : vector<8x128xf32>
      %1577 = vector.broadcast %2 : f32 to vector<8x128xf32>
      %1578 = arith.mulf %1575, %1577 : vector<8x128xf32>
      %1579 = vector.broadcast %0 : f32 to vector<8x128xf32>
      %1580 = arith.addf %1578, %1579 : vector<8x128xf32>
      %1581 = vector.broadcast %2 : f32 to vector<8x128xf32>
      %1582 = arith.mulf %1576, %1581 : vector<8x128xf32>
      %1583 = vector.broadcast %1 : f32 to vector<8x128xf32>
      %1584 = arith.addf %1582, %1583 : vector<8x128xf32>
      %c31_269 = arith.constant 31 : index
      %1585 = arith.index_cast %66 : i32 to index
      %c0_270 = arith.constant 0 : index
      %1586 = vector.load %arg3[%c31_269, %1585, %c0_270] : memref<39x16x128xf32, #tpu.memory_space<vmem>>, vector<1x8x128xf32>
      %1587 = vector.shape_cast %1586 : vector<1x8x128xf32> to vector<8x128xf32>
      %1588 = vector.shape_cast %1580 : vector<8x128xf32> to vector<1x8x128xf32>
      tpu.vector_store %arg3[%c31_269, %1585, %c0_270], %1588 {strides = array<i32>} : memref<39x16x128xf32, #tpu.memory_space<vmem>>, vector<1x8x128xf32>,
      %c32_271 = arith.constant 32 : index
      %1589 = arith.index_cast %66 : i32 to index
      %c0_272 = arith.constant 0 : index
      %1590 = vector.load %arg3[%c32_271, %1589, %c0_272] : memref<39x16x128xf32, #tpu.memory_space<vmem>>, vector<1x8x128xf32>
      %1591 = vector.shape_cast %1590 : vector<1x8x128xf32> to vector<8x128xf32>
      %1592 = vector.shape_cast %1584 : vector<8x128xf32> to vector<1x8x128xf32>
      tpu.vector_store %arg3[%c32_271, %1589, %c0_272], %1592 {strides = array<i32>} : memref<39x16x128xf32, #tpu.memory_space<vmem>>, vector<1x8x128xf32>,
      %1593 = vector.broadcast %14 : f32 to vector<8x128xf32>
      %1594 = arith.mulf %1593, %955 : vector<8x128xf32>
      %1595 = vector.broadcast %15 : f32 to vector<8x128xf32>
      %1596 = arith.mulf %1595, %957 : vector<8x128xf32>
      %1597 = arith.addf %1594, %1596 : vector<8x128xf32>
      %1598 = vector.broadcast %16 : f32 to vector<8x128xf32>
      %1599 = arith.mulf %1598, %959 : vector<8x128xf32>
      %1600 = arith.addf %1597, %1599 : vector<8x128xf32>
      %1601 = vector.broadcast %17 : f32 to vector<8x128xf32>
      %1602 = arith.mulf %1601, %955 : vector<8x128xf32>
      %1603 = vector.broadcast %18 : f32 to vector<8x128xf32>
      %1604 = arith.mulf %1603, %957 : vector<8x128xf32>
      %1605 = arith.addf %1602, %1604 : vector<8x128xf32>
      %1606 = vector.broadcast %19 : f32 to vector<8x128xf32>
      %1607 = arith.mulf %1606, %959 : vector<8x128xf32>
      %1608 = arith.addf %1605, %1607 : vector<8x128xf32>
      %1609 = vector.broadcast %20 : f32 to vector<8x128xf32>
      %1610 = arith.mulf %1609, %955 : vector<8x128xf32>
      %1611 = vector.broadcast %21 : f32 to vector<8x128xf32>
      %1612 = arith.mulf %1611, %957 : vector<8x128xf32>
      %1613 = arith.addf %1610, %1612 : vector<8x128xf32>
      %1614 = vector.broadcast %22 : f32 to vector<8x128xf32>
      %1615 = arith.mulf %1614, %959 : vector<8x128xf32>
      %1616 = arith.addf %1613, %1615 : vector<8x128xf32>
      %1617 = vector.broadcast %23 : f32 to vector<8x128xf32>
      %1618 = arith.addf %1600, %1617 : vector<8x128xf32>
      %1619 = vector.broadcast %24 : f32 to vector<8x128xf32>
      %1620 = arith.addf %1608, %1619 : vector<8x128xf32>
      %1621 = vector.broadcast %25 : f32 to vector<8x128xf32>
      %1622 = arith.addf %1616, %1621 : vector<8x128xf32>
      %cst_273 = arith.constant 0.000000e+00 : f32
      %1623 = vector.broadcast %cst_273 : f32 to vector<8x128xf32>
      %1624 = arith.cmpf olt, %1622, %1623 : vector<8x128xf32>
      %cst_274 = arith.constant -1.000000e+00 : f32
      %cst_275 = arith.constant 1.000000e+00 : f32
      %1625 = vector.broadcast %cst_274 : f32 to vector<8x128xf32>
      %1626 = vector.broadcast %cst_275 : f32 to vector<8x128xf32>
      %1627 = arith.select %1624, %1625, %1626 : vector<8x128xi1>, vector<8x128xf32>
      %1628 = math.absf %1622 : vector<8x128xf32>
      %cst_276 = arith.constant 9.99999971E-10 : f32
      %1629 = vector.broadcast %cst_276 : f32 to vector<8x128xf32>
      %1630 = arith.maximumf %1628, %1629 : vector<8x128xf32>
      %1631 = tpu.reciprocal %1630 {approx = true} : vector<8x128xf32> -> vector<8x128xf32>
      %1632 = arith.mulf %1630, %1631 : vector<8x128xf32>
      %cst_277 = arith.constant 2.000000e+00 : f32
      %1633 = vector.broadcast %cst_277 : f32 to vector<8x128xf32>
      %1634 = arith.subf %1633, %1632 : vector<8x128xf32>
      %1635 = arith.mulf %1631, %1634 : vector<8x128xf32>
      %1636 = arith.mulf %1627, %1635 : vector<8x128xf32>
      %1637 = arith.mulf %1618, %1636 : vector<8x128xf32>
      %1638 = arith.mulf %1620, %1636 : vector<8x128xf32>
      %1639 = arith.mulf %1637, %1637 : vector<8x128xf32>
      %1640 = arith.mulf %1638, %1638 : vector<8x128xf32>
      %1641 = arith.addf %1639, %1640 : vector<8x128xf32>
      %1642 = vector.broadcast %13 : f32 to vector<8x128xf32>
      %1643 = arith.mulf %1641, %1642 : vector<8x128xf32>
      %1644 = vector.broadcast %12 : f32 to vector<8x128xf32>
      %1645 = arith.addf %1644, %1643 : vector<8x128xf32>
      %1646 = arith.mulf %1641, %1645 : vector<8x128xf32>
      %1647 = vector.broadcast %11 : f32 to vector<8x128xf32>
      %1648 = arith.addf %1647, %1646 : vector<8x128xf32>
      %1649 = arith.mulf %1641, %1648 : vector<8x128xf32>
      %cst_278 = arith.constant 1.000000e+00 : f32
      %1650 = vector.broadcast %cst_278 : f32 to vector<8x128xf32>
      %1651 = arith.addf %1650, %1649 : vector<8x128xf32>
      %1652 = arith.mulf %1637, %1651 : vector<8x128xf32>
      %1653 = arith.mulf %1638, %1651 : vector<8x128xf32>
      %1654 = vector.broadcast %9 : f32 to vector<8x128xf32>
      %1655 = arith.mulf %1652, %1654 : vector<8x128xf32>
      %1656 = vector.broadcast %7 : f32 to vector<8x128xf32>
      %1657 = arith.addf %1655, %1656 : vector<8x128xf32>
      %1658 = vector.broadcast %9 : f32 to vector<8x128xf32>
      %1659 = arith.mulf %1653, %1658 : vector<8x128xf32>
      %1660 = vector.broadcast %8 : f32 to vector<8x128xf32>
      %1661 = arith.addf %1659, %1660 : vector<8x128xf32>
      %c33_279 = arith.constant 33 : index
      %1662 = arith.index_cast %66 : i32 to index
      %c0_280 = arith.constant 0 : index
      %1663 = vector.load %arg3[%c33_279, %1662, %c0_280] : memref<39x16x128xf32, #tpu.memory_space<vmem>>, vector<1x8x128xf32>
      %1664 = vector.shape_cast %1663 : vector<1x8x128xf32> to vector<8x128xf32>
      %1665 = vector.shape_cast %1657 : vector<8x128xf32> to vector<1x8x128xf32>
      tpu.vector_store %arg3[%c33_279, %1662, %c0_280], %1665 {strides = array<i32>} : memref<39x16x128xf32, #tpu.memory_space<vmem>>, vector<1x8x128xf32>,
      %c34_281 = arith.constant 34 : index
      %1666 = arith.index_cast %66 : i32 to index
      %c0_282 = arith.constant 0 : index
      %1667 = vector.load %arg3[%c34_281, %1666, %c0_282] : memref<39x16x128xf32, #tpu.memory_space<vmem>>, vector<1x8x128xf32>
      %1668 = vector.shape_cast %1667 : vector<1x8x128xf32> to vector<8x128xf32>
      %1669 = vector.shape_cast %1661 : vector<8x128xf32> to vector<1x8x128xf32>
      tpu.vector_store %arg3[%c34_281, %1666, %c0_282], %1669 {strides = array<i32>} : memref<39x16x128xf32, #tpu.memory_space<vmem>>, vector<1x8x128xf32>,
    }
    %c2_i32_5 = arith.constant 2 : i32
    return
  }
  func.func @transform_0(%arg0: i32) -> i32 {
    %c0_i32 = arith.constant 0 : i32
    %c0_i32_0 = arith.constant 0 : i32
    return %c0_i32 : i32
  }
  func.func @transform_1(%arg0: i32) -> (i32, i32, i32) {
    %c0_i32 = arith.constant 0 : i32
    %c0_i32_0 = arith.constant 0 : i32
    %c0_i32_1 = arith.constant 0 : i32
    return %c0_i32, %arg0, %c0_i32_0 : i32, i32, i32
  }
  func.func @transform_2(%arg0: i32) -> (i32, i32, i32) {
    %c0_i32 = arith.constant 0 : i32
    %c0_i32_0 = arith.constant 0 : i32
    %c0_i32_1 = arith.constant 0 : i32
    return %c0_i32, %arg0, %c0_i32_0 : i32, i32, i32
  }
}

</mosaic_0001>

<llo_original>
// kernel: a_call__.1
$region0: #{a_call__.1}
  #allocation0 [shape = 'u32[]', space=smem, size = 0x4, offset = 0x4, fixed_abs, tag = 'smem constant byte address 0x4 - core index']
  #allocation1 [shape = 'u32[144,128]{1,0:T(1,128)}', space=vmem, size = 0x12000, scoped, tag = 'internal scratch']
  %s0 = inlined_call_operand.vmem [shape: f32[49], index: 0, kind: input, shape index: {}]
  %s1 = inlined_call_operand.vmem [shape: f32[8,32,128], index: 1, kind: input, shape index: {}]
  %s2 = inlined_call_operand.vmem [shape: f32[39,32,128], index: 2, kind: output, shape index: {}]
  %s3 = sld [smem:[#allocation0]]
  $region124: #{a_call__.1} parent=0
    _
  %s5 = ssub.s32 1, %s3
  %s6 = scalar_select 0, %s5, %s3
  $region1: #{a_call__.1} parent=0
    #allocation2 [shape = 'u8[512]{0}', space=smem, size = 0x200, scoped, tag = 'input window, operand 0, single buffered']
    #allocation3 [shape = 's32[2]{0}', space=sflag, size = 0x8, scoped, tag = 'scoped memory for a_call__.1']
    #allocation4 [shape = 'u8[131072]{0}', space=vmem, size = 0x20000, scoped, tag = 'input window, operand 1']
    #allocation5 [shape = 'u8[638976]{0}', space=vmem, size = 0x9c000, scoped, tag = 'output window, operand 0']
    %7 = vsyncpa [#allocation3], 0
    loop: start=0, step=1, limit=4
    $region2: #{a_call__.1} parent=1 // loop_pre_header
      _
    $region3: #{a_call__.1} parent=1 // loop_header
      %s9 = sphi 0, %s13
      %p10 = scmp.ge.s32.totalorder %s9, 4
      %s17 = sphi 0, %s17
      %s19 = sphi 0, %s17
      %s20 = sphi 0, %s19
      %s34 = sphi 0, %s20
      %s40 = sphi 0, %s42
      %s43 = sphi 0, %s40
      %s44 = sphi 0, %s43
      %s60 = sphi 0, %s44
      %s66 = sphi 0, %s68
      %s69 = sphi 0, %s66
      %s70 = sphi 0, %s69
      %s86 = sphi 0, %s70
    $region4: #{a_call__.1} parent=1 // loop_header_branch
      %12 = sbr.rel (%p10) target = $region8
    $region5: #{a_call__.1} parent=1 // loop_body
      %s14 = ssub.s32 %s9, 1
      %s15 = ssub.s32 %s9, 2
      %s16 = sadd.s32 %s9, 1
      %s18 = sadd.s32 %s17, 1
      %p21 = scmp.eq.s32.totalorder %s9, 1
      %p22 = scmp.ne.s32.totalorder %s17, %s19
      %p23 = scmp.eq.s32.totalorder %s9, 0
      %p24 = por %p22, %p23
      %p25 = scmp.ne.s32.totalorder %s17, %s19
      %p26 = scmp.eq.s32.totalorder %s14, 1
      %p27 = por %p25, %p26
      %p28 = scmp.ne.s32.totalorder %s19, %s20
      %p29 = scmp.eq.s32.totalorder %s14, 0
      %p30 = por %p28, %p29
      %p31 = scmp.ne.s32.totalorder %s19, %s20
      %p32 = scmp.eq.s32.totalorder %s15, 1
      %p33 = por %p31, %p32
      %p35 = scmp.ne.s32.totalorder %s20, %s34
      %p36 = scmp.eq.s32.totalorder %s15, 0
      %p37 = por %p35, %p36
      %s38 = ssub.s32 %s9, %s16
      %p39 = scmp.eq.s32.totalorder %s38, 0
      %s41 = sadd.s32 %s40, 1
      %s42 = scalar_select %p39, %s40, %s41
      %p45 = pneg %p39
      %p46 = scmp.eq.s32.totalorder %s9, 1
      %p47 = por %p45, %p46
      %p48 = scmp.ne.s32.totalorder %s40, %s43
      %p49 = scmp.eq.s32.totalorder %s9, 0
      %p50 = por %p48, %p49
      %p51 = scmp.ne.s32.totalorder %s40, %s43
      %p52 = scmp.eq.s32.totalorder %s14, 1
      %p53 = por %p51, %p52
      %p54 = scmp.ne.s32.totalorder %s43, %s44
      %p55 = scmp.eq.s32.totalorder %s14, 0
      %p56 = por %p54, %p55
      %p57 = scmp.ne.s32.totalorder %s43, %s44
      %p58 = scmp.eq.s32.totalorder %s15, 1
      %p59 = por %p57, %p58
      %p61 = scmp.ne.s32.totalorder %s44, %s60
      %p62 = scmp.eq.s32.totalorder %s15, 0
      %p63 = por %p61, %p62
      %s64 = ssub.s32 %s9, %s16
      %p65 = scmp.eq.s32.totalorder %s64, 0
      %s67 = sadd.s32 %s66, 1
      %s68 = scalar_select %p65, %s66, %s67
      %p71 = pneg %p65
      %p72 = scmp.eq.s32.totalorder %s9, 1
      %p73 = por %p71, %p72
      %p74 = scmp.ne.s32.totalorder %s66, %s69
      %p75 = scmp.eq.s32.totalorder %s9, 0
      %p76 = por %p74, %p75
      %p77 = scmp.ne.s32.totalorder %s66, %s69
      %p78 = scmp.eq.s32.totalorder %s14, 1
      %p79 = por %p77, %p78
      %p80 = scmp.ne.s32.totalorder %s69, %s70
      %p81 = scmp.eq.s32.totalorder %s14, 0
      %p82 = por %p80, %p81
      %p83 = scmp.ne.s32.totalorder %s69, %s70
      %p84 = scmp.eq.s32.totalorder %s15, 1
      %p85 = por %p83, %p84
      %p87 = scmp.ne.s32.totalorder %s70, %s86
      %p88 = scmp.eq.s32.totalorder %s15, 0
      %p89 = por %p87, %p88
      %p90 = scmp.le.s32.totalorder 1, %s9
      %p91 = scmp.lt.s32.totalorder %s9, 3
      %p92 = pnand %p90, %p91
      %p93 = pneg %p92
      // Predicated region
      $region9: #{a_call__.1} parent=5 // pred_check
        _
      $region10: #{a_call__.1} parent=5 // pred_check_branch
        %95 = sbr.rel (%p92) target = $region12
      $region11: #{a_call__.1} parent=5 // pred_region
        %s96 = ssub.s32 %s9, 1
        // Predicated region
        $region13: #{a_call__.1} parent=11 // pred_check
          %p97 = pneg %p30
        $region14: #{a_call__.1} parent=11 // pred_check_branch
          %99 = sbr.rel (%p97) target = $region16
        $region15: #{a_call__.1} parent=11 // pred_region
          %s101 = ssub.s32 16, 16
          %102 = vsyncadd [#allocation3], %s101
          %s104 = sshll.u32 %s0, 4
          %s105 = int_to_ptr.vmem [resolvable:$true] %s104
          %107 = dma.vmem_to_smem %s105, 16, [#allocation2], [#allocation3]
        $region16: #{a_call__.1} parent=11 // pred_fallthru
          _
      $region12: #{a_call__.1} parent=5 // pred_fallthru
        _
      %p108 = scmp.lt.s32.totalorder %s9, 2
      // Predicated region
      $region17: #{a_call__.1} parent=5 // pred_check
        %p109 = pneg %p108
      $region18: #{a_call__.1} parent=5 // pred_check_branch
        %111 = sbr.rel (%p109) target = $region20
      $region19: #{a_call__.1} parent=5 // pred_region
        // Predicated region
        $region21: #{a_call__.1} parent=19 // pred_check
          %p112 = pneg %p50
        $region22: #{a_call__.1} parent=19 // pred_check_branch
          %114 = sbr.rel (%p112) target = $region24
        $region23: #{a_call__.1} parent=19 // pred_region
          %s115 = sand.u32 %s40, 1
          %s116 = sand.u32 %s40, 1
          %s117 = smul.addr %s116, 128
          %s118 = scalar_lea.vmem [#allocation4], %s117
          %s119 = smul.u32 2, %s9
          %s120 = smul.addr %s119, 8
          %s121 = scalar_lea.vmem %s1, %s120
          // Predicated region
          $region25: #{a_call__.1} parent=23 // pred_check
            _
          $region26: #{a_call__.1} parent=23 // pred_check_branch
            %123 = sbr.rel (0) target = $region28
          $region27: #{a_call__.1} parent=23 // pred_region
            // Predicated region
            $region29: #{a_call__.1} parent=27 // pred_check
              _
            $region30: #{a_call__.1} parent=27 // pred_check_branch
              %125 = sbr.rel (0) target = $region32
            $region31: #{a_call__.1} parent=27 // pred_region
              // Predicated region
              $region44: #{a_call__.1} parent=31 // pred_check
                _
              $region45: #{a_call__.1} parent=31 // pred_check_branch
                %170 = sbr.rel (0) target = $region47
              $region46: #{a_call__.1} parent=31 // pred_region
                loop: start=0, step=1, limit=1
                $region48: #{a_call__.1} parent=46 // loop_pre_header
                  _
                $region49: #{a_call__.1} parent=46 // loop_header
                  %s172 = sphi 0, %s176
                  %p173 = scmp.ge.s32.totalorder %s172, 1
                  %s177 = sphi %s121, %s121
                  %s178 = sphi %s118, %s118
                $region50: #{a_call__.1} parent=46 // loop_header_branch
                  %175 = sbr.rel (%p173) target = $region54
                $region51: #{a_call__.1} parent=46 // loop_body
                  %v179 = vld [vmem:[%s177] sm:$0xff]
                  %180 = vst [vmem:[%s178] sm:$0xff] %v179
                  %v181 = vld [vmem:[%s177 + $0x8] sm:$0xff]
                  %182 = vst [vmem:[%s178 + $0x8] sm:$0xff] %v181
                  %v183 = vld [vmem:[%s177 + $0x20] sm:$0xff]
                  %184 = vst [vmem:[%s178 + $0x10] sm:$0xff] %v183
                  %v185 = vld [vmem:[%s177 + $0x28] sm:$0xff]
                  %186 = vst [vmem:[%s178 + $0x18] sm:$0xff] %v185
                  %v187 = vld [vmem:[%s177 + $0x40] sm:$0xff]
                  %188 = vst [vmem:[%s178 + $0x20] sm:$0xff] %v187
                  %v189 = vld [vmem:[%s177 + $0x48] sm:$0xff]
                  %190 = vst [vmem:[%s178 + $0x28] sm:$0xff] %v189
                  %v191 = vld [vmem:[%s177 + $0x60] sm:$0xff]
                  %192 = vst [vmem:[%s178 + $0x30] sm:$0xff] %v191
                  %v193 = vld [vmem:[%s177 + $0x68] sm:$0xff]
                  %194 = vst [vmem:[%s178 + $0x38] sm:$0xff] %v193
                  %v195 = vld [vmem:[%s177 + $0x80] sm:$0xff]
                  %196 = vst [vmem:[%s178 + $0x40] sm:$0xff] %v195
                  %v197 = vld [vmem:[%s177 + $0x88] sm:$0xff]
                  %198 = vst [vmem:[%s178 + $0x48] sm:$0xff] %v197
                  %v199 = vld [vmem:[%s177 + $0xa0] sm:$0xff]
                  %200 = vst [vmem:[%s178 + $0x50] sm:$0xff] %v199
                  %v201 = vld [vmem:[%s177 + $0xa8] sm:$0xff]
                  %202 = vst [vmem:[%s178 + $0x58] sm:$0xff] %v201
                  %v203 = vld [vmem:[%s177 + $0xc0] sm:$0xff]
                  %204 = vst [vmem:[%s178 + $0x60] sm:$0xff] %v203
                  %v205 = vld [vmem:[%s177 + $0xc8] sm:$0xff]
                  %206 = vst [vmem:[%s178 + $0x68] sm:$0xff] %v205
                  %v207 = vld [vmem:[%s177 + $0xe0] sm:$0xff]
                  %208 = vst [vmem:[%s178 + $0x70] sm:$0xff] %v207
                  %v209 = vld [vmem:[%s177 + $0xe8] sm:$0xff]
                  %210 = vst [vmem:[%s178 + $0x78] sm:$0xff] %v209
                $region52: #{a_call__.1} parent=46 // loop_footer
                  %s176 = sadd.s32 1, %s172
                $region53: #{a_call__.1} parent=46 // loop_footer_branch
                  %171 = sbr.rel target = $region49
                $region54: #{a_call__.1} parent=46 // loop_exit
                  _
              $region47: #{a_call__.1} parent=31 // pred_fallthru
                _
              // Predicated region
              $region55: #{a_call__.1} parent=31 // pred_check
                _
              $region56: #{a_call__.1} parent=31 // pred_check_branch
                %212 = sbr.rel target = $region58
              $region57: #{a_call__.1} parent=31 // pred_region
                _
              $region58: #{a_call__.1} parent=31 // pred_fallthru
                _
            $region32: #{a_call__.1} parent=27 // pred_fallthru
              _
            // Predicated region
            $region33: #{a_call__.1} parent=27 // pred_check
              _
            $region34: #{a_call__.1} parent=27 // pred_check_branch
              %127 = sbr.rel target = $region36
            $region35: #{a_call__.1} parent=27 // pred_region
              loop: start=0, step=1, limit=1
              $region37: #{a_call__.1} parent=35 // loop_pre_header
                _
              $region38: #{a_call__.1} parent=35 // loop_header
                %s130 = sphi 0, %s134
                %p131 = scmp.ge.s32.totalorder %s130, 1
                %s135 = sphi %s121, %s121
                %s136 = sphi %s118, %s118
              $region39: #{a_call__.1} parent=35 // loop_header_branch
                %133 = sbr.rel (%p131) target = $region43
              $region40: #{a_call__.1} parent=35 // loop_body
                %v137 = vld [vmem:[%s135] sm:$0xff]
                %138 = vst [vmem:[%s136] sm:$0xff] %v137
                %v139 = vld [vmem:[%s135 + $0x8] sm:$0xff]
                %140 = vst [vmem:[%s136 + $0x8] sm:$0xff] %v139
                %v141 = vld [vmem:[%s135 + $0x20] sm:$0xff]
                %142 = vst [vmem:[%s136 + $0x10] sm:$0xff] %v141
                %v143 = vld [vmem:[%s135 + $0x28] sm:$0xff]
                %144 = vst [vmem:[%s136 + $0x18] sm:$0xff] %v143
                %v145 = vld [vmem:[%s135 + $0x40] sm:$0xff]
                %146 = vst [vmem:[%s136 + $0x20] sm:$0xff] %v145
                %v147 = vld [vmem:[%s135 + $0x48] sm:$0xff]
                %148 = vst [vmem:[%s136 + $0x28] sm:$0xff] %v147
                %v149 = vld [vmem:[%s135 + $0x60] sm:$0xff]
                %150 = vst [vmem:[%s136 + $0x30] sm:$0xff] %v149
                %v151 = vld [vmem:[%s135 + $0x68] sm:$0xff]
                %152 = vst [vmem:[%s136 + $0x38] sm:$0xff] %v151
                %v153 = vld [vmem:[%s135 + $0x80] sm:$0xff]
                %154 = vst [vmem:[%s136 + $0x40] sm:$0xff] %v153
                %v155 = vld [vmem:[%s135 + $0x88] sm:$0xff]
                %156 = vst [vmem:[%s136 + $0x48] sm:$0xff] %v155
                %v157 = vld [vmem:[%s135 + $0xa0] sm:$0xff]
                %158 = vst [vmem:[%s136 + $0x50] sm:$0xff] %v157
                %v159 = vld [vmem:[%s135 + $0xa8] sm:$0xff]
                %160 = vst [vmem:[%s136 + $0x58] sm:$0xff] %v159
                %v161 = vld [vmem:[%s135 + $0xc0] sm:$0xff]
                %162 = vst [vmem:[%s136 + $0x60] sm:$0xff] %v161
                %v163 = vld [vmem:[%s135 + $0xc8] sm:$0xff]
                %164 = vst [vmem:[%s136 + $0x68] sm:$0xff] %v163
                %v165 = vld [vmem:[%s135 + $0xe0] sm:$0xff]
                %166 = vst [vmem:[%s136 + $0x70] sm:$0xff] %v165
                %v167 = vld [vmem:[%s135 + $0xe8] sm:$0xff]
                %168 = vst [vmem:[%s136 + $0x78] sm:$0xff] %v167
              $region41: #{a_call__.1} parent=35 // loop_footer
                %s134 = sadd.s32 1, %s130
              $region42: #{a_call__.1} parent=35 // loop_footer_branch
                %129 = sbr.rel target = $region38
              $region43: #{a_call__.1} parent=35 // loop_exit
                _
            $region36: #{a_call__.1} parent=27 // pred_fallthru
              _
          $region28: #{a_call__.1} parent=23 // pred_fallthru
            _
          %213 = vnop
        $region24: #{a_call__.1} parent=19 // pred_fallthru
          _
      $region20: #{a_call__.1} parent=5 // pred_fallthru
        _
      %p214 = scmp.le.s32.totalorder 1, %s9
      %p215 = scmp.lt.s32.totalorder %s9, 3
      %p216 = pnand %p214, %p215
      %p217 = pneg %p216
      // Predicated region
      $region59: #{a_call__.1} parent=5 // pred_check
        _
      $region60: #{a_call__.1} parent=5 // pred_check_branch
        %219 = sbr.rel (%p216) target = $region62
      $region61: #{a_call__.1} parent=5 // pred_region
        %s220 = ssub.s32 %s9, 1
        // Predicated region
        $region63: #{a_call__.1} parent=61 // pred_check
          %p221 = pneg %p30
        $region64: #{a_call__.1} parent=61 // pred_check_branch
          %223 = sbr.rel (%p221) target = $region66
        $region65: #{a_call__.1} parent=61 // pred_region
          %224 = dma.done [#allocation3], 16
        $region66: #{a_call__.1} parent=61 // pred_fallthru
          _
        %s225 = sand.u32 %s43, 1
        %s226 = sand.u32 %s43, 1
        %s227 = smul.addr %s226, 128
        %s228 = scalar_lea.vmem [#allocation4], %s227
        // Predicated region
        $region67: #{a_call__.1} parent=61 // pred_check
          %p229 = pneg %p56
        $region68: #{a_call__.1} parent=61 // pred_check_branch
          %231 = sbr.rel (%p229) target = $region70
        $region69: #{a_call__.1} parent=61 // pred_region
          _
        $region70: #{a_call__.1} parent=61 // pred_fallthru
          _
        %232 = sfence
        %p233 = pneg %p30
        %p234 = pneg %p27
        %s235 = sand.u32 %s43, 1
        %s236 = sand.u32 %s43, 1
        %s237 = smul.addr %s236, 128
        %s238 = scalar_lea.vmem [#allocation4], %s237
        %p239 = pneg %p56
        %p240 = pneg %p53
        %p241 = pneg %p82
        %p242 = pneg %p79
        %s243 = sand.u32 %s69, 1
        %s244 = sand.u32 %s69, 1
        %s245 = smul.addr %s244, 624
        %s246 = scalar_lea.vmem [#allocation5], %s245
        %s247 = smul.u32 2, %s14
        %s248 = smul.u32 2, %s14
        %s249 = sld [smem:[#allocation2]]
        %s250 = sld [smem:[#allocation2 + $0x1]]
        %s251 = sld [smem:[#allocation2 + $0x2]]
        %s252 = sld [smem:[#allocation2 + $0x3]]
        %s253 = sld [smem:[#allocation2 + $0x4]]
        %s254 = sld [smem:[#allocation2 + $0x5]]
        %s255 = sld [smem:[#allocation2 + $0x6]]
        %s256 = sld [smem:[#allocation2 + $0x7]]
        %s257 = sld [smem:[#allocation2 + $0x8]]
        %s258 = sld [smem:[#allocation2 + $0x9]]
        %s259 = sld [smem:[#allocation2 + $0xa]]
        %s260 = sld [smem:[#allocation2 + $0xb]]
        %s261 = sld [smem:[#allocation2 + $0xc]]
        %s262 = sld [smem:[#allocation2 + $0xd]]
        %s263 = sld [smem:[#allocation2 + $0xe]]
        %s264 = sld [smem:[#allocation2 + $0xf]]
        %s265 = sld [smem:[#allocation2 + $0x10]]
        %s266 = sld [smem:[#allocation2 + $0x11]]
        %s267 = sld [smem:[#allocation2 + $0x12]]
        %s268 = sld [smem:[#allocation2 + $0x13]]
        %s269 = sld [smem:[#allocation2 + $0x14]]
        %s270 = sld [smem:[#allocation2 + $0x15]]
        %s271 = sld [smem:[#allocation2 + $0x16]]
        %s272 = sld [smem:[#allocation2 + $0x17]]
        %s273 = sld [smem:[#allocation2 + $0x18]]
        %s274 = sld [smem:[#allocation2 + $0x19]]
        %s275 = sld [smem:[#allocation2 + $0x1a]]
        %s276 = sld [smem:[#allocation2 + $0x1b]]
        %s277 = sld [smem:[#allocation2 + $0x1c]]
        %s278 = sld [smem:[#allocation2 + $0x1d]]
        %s279 = sld [smem:[#allocation2 + $0x1e]]
        %s280 = sld [smem:[#allocation2 + $0x1f]]
        %s281 = sld [smem:[#allocation2 + $0x20]]
        %s282 = sld [smem:[#allocation2 + $0x21]]
        %s283 = sld [smem:[#allocation2 + $0x22]]
        %s284 = sld [smem:[#allocation2 + $0x23]]
        %s285 = sld [smem:[#allocation2 + $0x24]]
        %s286 = sld [smem:[#allocation2 + $0x25]]
        %s287 = sld [smem:[#allocation2 + $0x26]]
        %s288 = sld [smem:[#allocation2 + $0x27]]
        %s289 = sld [smem:[#allocation2 + $0x28]]
        %s290 = sld [smem:[#allocation2 + $0x29]]
        %s291 = sld [smem:[#allocation2 + $0x2b]]
        %s292 = sld [smem:[#allocation2 + $0x2c]]
        %s293 = sld [smem:[#allocation2 + $0x2e]]
        %s294 = sld [smem:[#allocation2 + $0x2f]]
        %s295 = smul.f32 %s284, 0.5
        %s296 = smul.f32 %s295, %s281
        %s297 = ssub.f32 %s278, %s296
        %s298 = smul.f32 %s295, %s282
        %s299 = ssub.f32 %s279, %s298
        %s300 = smul.f32 %s295, %s283
        %s301 = ssub.f32 %s280, %s300
        %s302 = sadd.f32 %s278, %s296
        %s303 = sadd.f32 %s279, %s298
        %s304 = sadd.f32 %s280, %s300
        loop: start=0, step=1, limit=2
        $region71: #{a_call__.1} parent=61 // loop_pre_header
          _
        $region72: #{a_call__.1} parent=61 // loop_header
          %s306 = sphi 0, %s310
          %p307 = scmp.ge.s32.totalorder %s306, 2
        $region73: #{a_call__.1} parent=61 // loop_header_branch
          %309 = sbr.rel (%p307) target = $region77
        $region74: #{a_call__.1} parent=61 // loop_body
          %s311 = smul.u32 %s306, 8
          %s312 = scalar_lea.vmem %s228, %s311 [#allocation4]
          %v313 = vld [vmem:[%s312] sm:$0xff]
          %s314 = sadd.s32 %s311, 16
          %s315 = scalar_lea.vmem %s228, %s314 [#allocation4]
          %v316 = vld [vmem:[%s315] sm:$0xff]
          %s317 = sadd.s32 %s311, 32
          %s318 = scalar_lea.vmem %s228, %s317 [#allocation4]
          %v319 = vld [vmem:[%s318] sm:$0xff]
          %s320 = sadd.s32 %s311, 48
          %s321 = scalar_lea.vmem %s228, %s320 [#allocation4]
          %v322 = vld [vmem:[%s321] sm:$0xff]
          %s323 = sadd.s32 %s311, 64
          %s324 = scalar_lea.vmem %s228, %s323 [#allocation4]
          %v325 = vld [vmem:[%s324] sm:$0xff]
          %s326 = sadd.s32 %s311, 80
          %s327 = scalar_lea.vmem %s228, %s326 [#allocation4]
          %v328 = vld [vmem:[%s327] sm:$0xff]
          %s329 = sadd.s32 %s311, 96
          %s330 = scalar_lea.vmem %s228, %s329 [#allocation4]
          %v331 = vld [vmem:[%s330] sm:$0xff]
          %s332 = sadd.s32 %s311, 112
          %s333 = scalar_lea.vmem %s228, %s332 [#allocation4]
          %v334 = vld [vmem:[%s333] sm:$0xff]
          %v335 = vstv %s249
          %v336 = vsub.f32 %v313, %v335
          %v337 = vstv %s252
          %v338 = vmul.f32 %v336, %v337
          %v339 = vstv %s250
          %v340 = vsub.f32 %v316, %v339
          %v341 = vmul.f32 %v340, %v337
          %v342 = vmul.f32 %v338, %v338
          %v343 = vmul.f32 %v341, %v341
          %v344 = vadd.f32 %v342, %v343
          %v345 = vstv %s255
          %v346 = vmul.f32 %v344, %v345
          %v347 = vstv %s254
          %v348 = vadd.f32 %v347, %v346
          %v349 = vmul.f32 %v344, %v348
          %v350 = vstv %s253
          %v351 = vadd.f32 %v350, %v349
          %v352 = vmul.f32 %v344, %v351
          %v353 = vadd.f32 %v352, 1.0
          %v354 = vrcp.pop %v353
          %v355 = vmul.f32 %v353, %v354
          %v356 = vsub.f32 2.0, %v355
          %v357 = vmul.f32 %v354, %v356
          %v358 = vmul.f32 %v338, %v357
          %v359 = vmul.f32 %v341, %v357
          %v360 = vstv %s256
          %v361 = vsub.f32 %v319, %v360
          %v362 = vstv %s259
          %v363 = vmul.f32 %v361, %v362
          %v364 = vstv %s257
          %v365 = vsub.f32 %v322, %v364
          %v366 = vmul.f32 %v365, %v362
          %v367 = vmul.f32 %v363, %v363
          %v368 = vmul.f32 %v366, %v366
          %v369 = vadd.f32 %v367, %v368
          %v370 = vstv %s262
          %v371 = vmul.f32 %v369, %v370
          %v372 = vstv %s261
          %v373 = vadd.f32 %v372, %v371
          %v374 = vmul.f32 %v369, %v373
          %v375 = vstv %s260
          %v376 = vadd.f32 %v375, %v374
          %v377 = vmul.f32 %v369, %v376
          %v378 = vadd.f32 %v377, 1.0
          %v379 = vrcp.pop %v378
          %v380 = vmul.f32 %v378, %v379
          %v381 = vsub.f32 2.0, %v380
          %v382 = vmul.f32 %v379, %v381
          %v383 = vmul.f32 %v363, %v382
          %v384 = vmul.f32 %v366, %v382
          %v385 = vsub.f32 %v325, %v335
          %v386 = vmul.f32 %v385, %v337
          %v387 = vsub.f32 %v328, %v339
          %v388 = vmul.f32 %v387, %v337
          %v389 = vmul.f32 %v386, %v386
          %v390 = vmul.f32 %v388, %v388
          %v391 = vadd.f32 %v389, %v390
          %v392 = vmul.f32 %v391, %v345
          %v393 = vadd.f32 %v347, %v392
          %v394 = vmul.f32 %v391, %v393
          %v395 = vadd.f32 %v350, %v394
          %v396 = vmul.f32 %v391, %v395
          %v397 = vadd.f32 %v396, 1.0
          %v398 = vrcp.pop %v397
          %v399 = vmul.f32 %v397, %v398
          %v400 = vsub.f32 2.0, %v399
          %v401 = vmul.f32 %v398, %v400
          %v402 = vmul.f32 %v386, %v401
          %v403 = vmul.f32 %v388, %v401
          %v404 = vsub.f32 %v331, %v360
          %v405 = vmul.f32 %v404, %v362
          %v406 = vsub.f32 %v334, %v364
          %v407 = vmul.f32 %v406, %v362
          %v408 = vmul.f32 %v405, %v405
          %v409 = vmul.f32 %v407, %v407
          %v410 = vadd.f32 %v408, %v409
          %v411 = vmul.f32 %v410, %v370
          %v412 = vadd.f32 %v372, %v411
          %v413 = vmul.f32 %v410, %v412
          %v414 = vadd.f32 %v375, %v413
          %v415 = vmul.f32 %v410, %v414
          %v416 = vadd.f32 %v415, 1.0
          %v417 = vrcp.pop %v416
          %v418 = vmul.f32 %v416, %v417
          %v419 = vsub.f32 2.0, %v418
          %v420 = vmul.f32 %v417, %v419
          %v421 = vmul.f32 %v405, %v420
          %v422 = vmul.f32 %v407, %v420
          %v423 = vmul.f32 %v358, %v358
          %v424 = vmul.f32 %v359, %v359
          %v425 = vadd.f32 %v423, %v424
          %v426 = vadd.f32 %v425, 1.0
          %v427 = vadd.f32 %v426, 1e-20
          %v428 = vrsqrt.pop %v427
          %v429 = vmul.f32 %v358, %v428
          %v430 = vmul.f32 %v359, %v428
          %v431 = vstv %s263
          %v432 = vmul.f32 %v431, %v383
          %v433 = vstv %s266
          %v434 = vmul.f32 %v433, %v384
          %v435 = vadd.f32 %v432, %v434
          %v436 = vstv %s269
          %v437 = vadd.f32 %v435, %v436
          %v438 = vstv %s264
          %v439 = vmul.f32 %v438, %v383
          %v440 = vstv %s267
          %v441 = vmul.f32 %v440, %v384
          %v442 = vadd.f32 %v439, %v441
          %v443 = vstv %s270
          %v444 = vadd.f32 %v442, %v443
          %v445 = vstv %s265
          %v446 = vmul.f32 %v445, %v383
          %v447 = vstv %s268
          %v448 = vmul.f32 %v447, %v384
          %v449 = vadd.f32 %v446, %v448
          %v450 = vstv %s271
          %v451 = vadd.f32 %v449, %v450
          %v452 = vmul.f32 %v437, %v437
          %v453 = vmul.f32 %v444, %v444
          %v454 = vadd.f32 %v452, %v453
          %v455 = vmul.f32 %v451, %v451
          %v456 = vadd.f32 %v454, %v455
          %v457 = vadd.f32 %v456, 1e-20
          %v458 = vrsqrt.pop %v457
          %v459 = vmul.f32 %v437, %v458
          %v460 = vmul.f32 %v444, %v458
          %v461 = vmul.f32 %v451, %v458
          %v462 = vmul.f32 %v402, %v402
          %v463 = vmul.f32 %v403, %v403
          %v464 = vadd.f32 %v462, %v463
          %v465 = vadd.f32 %v464, 1.0
          %v466 = vadd.f32 %v465, 1e-20
          %v467 = vrsqrt.pop %v466
          %v468 = vmul.f32 %v402, %v467
          %v469 = vmul.f32 %v403, %v467
          %v470 = vmul.f32 %v431, %v421
          %v471 = vmul.f32 %v433, %v422
          %v472 = vadd.f32 %v470, %v471
          %v473 = vadd.f32 %v472, %v436
          %v474 = vmul.f32 %v438, %v421
          %v475 = vmul.f32 %v440, %v422
          %v476 = vadd.f32 %v474, %v475
          %v477 = vadd.f32 %v476, %v443
          %v478 = vmul.f32 %v445, %v421
          %v479 = vmul.f32 %v447, %v422
          %v480 = vadd.f32 %v478, %v479
          %v481 = vadd.f32 %v480, %v450
          %v482 = vmul.f32 %v473, %v473
          %v483 = vmul.f32 %v477, %v477
          %v484 = vadd.f32 %v482, %v483
          %v485 = vmul.f32 %v481, %v481
          %v486 = vadd.f32 %v484, %v485
          %v487 = vadd.f32 %v486, 1e-20
          %v488 = vrsqrt.pop %v487
          %v489 = vmul.f32 %v473, %v488
          %v490 = vmul.f32 %v477, %v488
          %v491 = vmul.f32 %v481, %v488
          %v492 = vstv %s281
          %v493 = vmul.f32 %v492, %v468
          %v494 = vstv %s282
          %v495 = vmul.f32 %v494, %v469
          %v496 = vadd.f32 %v493, %v495
          %v497 = vstv %s283
          %v498 = vmul.f32 %v497, %v467
          %v499 = vadd.f32 %v496, %v498
          %vm500 = vcmp.lt.f32.partialorder %v499, 0.0
          %v501 = vsel %vm500, -1.0, 1.0
          %v502 = vand.u32 2147483647, %v499
          %v503 = vmax.f32 %v502, 1e-09
          %v504 = vrcp.pop %v503
          %v505 = vmul.f32 %v503, %v504
          %v506 = vsub.f32 2.0, %v505
          %v507 = vmul.f32 %v504, %v506
          %v508 = vmul.f32 %v501, %v507
          %s509 = smul.f32 %s281, %s297
          %s510 = smul.f32 %s282, %s299
          %s511 = sadd.f32 %s509, %s510
          %s512 = smul.f32 %s283, %s301
          %s513 = sadd.f32 %s511, %s512
          %v514 = vstv %s513
          %v515 = vmul.f32 %v514, %v508
          %v516 = vmul.f32 %v468, %v515
          %v517 = vmul.f32 %v469, %v515
          %v518 = vmul.f32 %v467, %v515
          %v519 = vadd.f32 %v516, 0.0
          %v520 = vadd.f32 %v517, 0.0
          %v521 = vadd.f32 %v518, 0.0
          %v522 = vsub.f32 0.0, %v499
          %vm523 = vcmp.lt.f32.partialorder %v522, 0.0
          %v524 = vsel %vm523, -1.0, 1.0
          %v525 = vmul.f32 %v492, %v524
          %v526 = vmul.f32 %v494, %v524
          %v527 = vmul.f32 %v497, %v524
          %v528 = vand.u32 2147483647, %v522
          %s529 = smul.f32 %s288, %s288
          %v530 = vmul.f32 %v528, %v528
          %v531 = vsub.f32 1.0, %v530
          %v532 = vstv %s529
          %v533 = vmul.f32 %v532, %v531
          %v534 = vsub.f32 1.0, %v533
          %v535 = vmax.f32 %v534, 0.0
          %v536 = vrsqrt.pop %v535
          %v537 = vmul.f32 %v535, %v536
          %vm538 = vcmp.eq.f32.partialorder %v535, inf
          %v539 = vsel %vm538, %v535, %v537
          %vm540 = vcmp.eq.f32.partialorder %v535, 0.0
          %v541 = vand.u32 %v535, 2147483648
          %v542 = vsel %vm540, %v541, %v539
          %v543 = vstv %s288
          %v544 = vmul.f32 %v468, %v543
          %v545 = vmul.f32 %v469, %v543
          %v546 = vmul.f32 %v467, %v543
          %v547 = vmul.f32 %v543, %v528
          %v548 = vsub.f32 %v547, %v542
          %v549 = vmul.f32 %v525, %v548
          %v550 = vmul.f32 %v526, %v548
          %v551 = vmul.f32 %v527, %v548
          %v552 = vadd.f32 %v544, %v549
          %v553 = vadd.f32 %v545, %v550
          %v554 = vadd.f32 %v546, %v551
          %v555 = vmul.f32 %v492, %v552
          %v556 = vmul.f32 %v494, %v553
          %v557 = vadd.f32 %v555, %v556
          %v558 = vmul.f32 %v497, %v554
          %v559 = vadd.f32 %v557, %v558
          %vm560 = vcmp.lt.f32.partialorder %v559, 0.0
          %v561 = vsel %vm560, -1.0, 1.0
          %v562 = vand.u32 2147483647, %v559
          %v563 = vmax.f32 %v562, 1e-09
          %v564 = vrcp.pop %v563
          %v565 = vmul.f32 %v563, %v564
          %v566 = vsub.f32 2.0, %v565
          %v567 = vmul.f32 %v564, %v566
          %v568 = vmul.f32 %v561, %v567
          %v569 = vstv %s302
          %v570 = vsub.f32 %v569, %v519
          %v571 = vstv %s303
          %v572 = vsub.f32 %v571, %v520
          %v573 = vstv %s304
          %v574 = vsub.f32 %v573, %v521
          %v575 = vmul.f32 %v492, %v570
          %v576 = vmul.f32 %v494, %v572
          %v577 = vadd.f32 %v575, %v576
          %v578 = vmul.f32 %v497, %v574
          %v579 = vadd.f32 %v577, %v578
          %v580 = vmul.f32 %v579, %v568
          %v581 = vmul.f32 %v552, %v580
          %v582 = vmul.f32 %v553, %v580
          %v583 = vmul.f32 %v554, %v580
          %v584 = vadd.f32 %v519, %v581
          %v585 = vadd.f32 %v520, %v582
          %v586 = vadd.f32 %v521, %v583
          %v587 = vsub.f32 0.0, %v559
          %vm588 = vcmp.lt.f32.partialorder %v587, 0.0
          %v589 = vsel %vm588, -1.0, 1.0
          %v590 = vmul.f32 %v492, %v589
          %v591 = vmul.f32 %v494, %v589
          %v592 = vmul.f32 %v497, %v589
          %v593 = vand.u32 2147483647, %v587
          %s594 = smul.f32 %s287, %s287
          %v595 = vmul.f32 %v593, %v593
          %v596 = vsub.f32 1.0, %v595
          %v597 = vstv %s594
          %v598 = vmul.f32 %v597, %v596
          %v599 = vsub.f32 1.0, %v598
          %v600 = vmax.f32 %v599, 0.0
          %v601 = vrsqrt.pop %v600
          %v602 = vmul.f32 %v600, %v601
          %vm603 = vcmp.eq.f32.partialorder %v600, inf
          %v604 = vsel %vm603, %v600, %v602
          %vm605 = vcmp.eq.f32.partialorder %v600, 0.0
          %v606 = vand.u32 %v600, 2147483648
          %v607 = vsel %vm605, %v606, %v604
          %v608 = vstv %s287
          %v609 = vmul.f32 %v552, %v608
          %v610 = vmul.f32 %v553, %v608
          %v611 = vmul.f32 %v554, %v608
          %v612 = vmul.f32 %v608, %v593
          %v613 = vsub.f32 %v612, %v607
          %v614 = vmul.f32 %v590, %v613
          %v615 = vmul.f32 %v591, %v613
          %v616 = vmul.f32 %v592, %v613
          %v617 = vadd.f32 %v609, %v614
          %v618 = vadd.f32 %v610, %v615
          %v619 = vadd.f32 %v611, %v616
          %v620 = vstv %s278
          %v621 = vsub.f32 %v519, %v620
          %v622 = vstv %s279
          %v623 = vsub.f32 %v520, %v622
          %v624 = vstv %s280
          %v625 = vsub.f32 %v521, %v624
          %v626 = vstv %s289
          %v627 = vmul.f32 %v626, %v621
          %v628 = vstv %s291
          %v629 = vmul.f32 %v628, %v623
          %v630 = vadd.f32 %v627, %v629
          %v631 = vstv %s293
          %v632 = vmul.f32 %v631, %v625
          %v633 = vadd.f32 %v630, %v632
          %v634 = vstv %s290
          %v635 = vmul.f32 %v634, %v621
          %v636 = vstv %s292
          %v637 = vmul.f32 %v636, %v623
          %v638 = vadd.f32 %v635, %v637
          %v639 = vstv %s294
          %v640 = vmul.f32 %v639, %v625
          %v641 = vadd.f32 %v638, %v640
          %v642 = vand.u32 2147483647, %v633
          %v643 = vstv %s285
          %v644 = vsub.f32 %v642, %v643
          %v645 = vmax.f32 %v644, 0.0
          %v646 = vand.u32 2147483647, %v641
          %v647 = vstv %s286
          %v648 = vsub.f32 %v646, %v647
          %v649 = vmax.f32 %v648, 0.0
          %v650 = vadd.f32 %v645, %v649
          %v651 = vsub.f32 %v584, %v620
          %v652 = vsub.f32 %v585, %v622
          %v653 = vsub.f32 %v586, %v624
          %v654 = vmul.f32 %v626, %v651
          %v655 = vmul.f32 %v628, %v652
          %v656 = vadd.f32 %v654, %v655
          %v657 = vmul.f32 %v631, %v653
          %v658 = vadd.f32 %v656, %v657
          %v659 = vmul.f32 %v634, %v651
          %v660 = vmul.f32 %v636, %v652
          %v661 = vadd.f32 %v659, %v660
          %v662 = vmul.f32 %v639, %v653
          %v663 = vadd.f32 %v661, %v662
          %v664 = vand.u32 2147483647, %v658
          %v665 = vsub.f32 %v664, %v643
          %v666 = vmax.f32 %v665, 0.0
          %v667 = vand.u32 2147483647, %v663
          %v668 = vsub.f32 %v667, %v647
          %v669 = vmax.f32 %v668, 0.0
          %v670 = vadd.f32 %v666, %v669
          %v671 = vadd.f32 %v650, %v670
          %v672 = vmul.f32 %v492, %v489
          %v673 = vmul.f32 %v494, %v490
          %v674 = vadd.f32 %v672, %v673
          %v675 = vmul.f32 %v497, %v491
          %v676 = vadd.f32 %v674, %v675
          %vm677 = vcmp.lt.f32.partialorder %v676, 0.0
          %v678 = vsel %vm677, -1.0, 1.0
          %v679 = vand.u32 2147483647, %v676
          %v680 = vmax.f32 %v679, 1e-09
          %v681 = vrcp.pop %v680
          %v682 = vmul.f32 %v680, %v681
          %v683 = vsub.f32 2.0, %v682
          %v684 = vmul.f32 %v681, %v683
          %v685 = vmul.f32 %v678, %v684
          %s686 = ssub.f32 %s297, %s275
          %s687 = ssub.f32 %s299, %s276
          %s688 = ssub.f32 %s301, %s277
          %s689 = smul.f32 %s281, %s686
          %s690 = smul.f32 %s282, %s687
          %s691 = sadd.f32 %s689, %s690
          %s692 = smul.f32 %s283, %s688
          %s693 = sadd.f32 %s691, %s692
          %v694 = vstv %s693
          %v695 = vmul.f32 %v694, %v685
          %v696 = vmul.f32 %v489, %v695
          %v697 = vmul.f32 %v490, %v695
          %v698 = vmul.f32 %v491, %v695
          %v699 = vstv %s275
          %v700 = vadd.f32 %v699, %v696
          %v701 = vstv %s276
          %v702 = vadd.f32 %v701, %v697
          %v703 = vstv %s277
          %v704 = vadd.f32 %v703, %v698
          %v705 = vsub.f32 0.0, %v676
          %vm706 = vcmp.lt.f32.partialorder %v705, 0.0
          %v707 = vsel %vm706, -1.0, 1.0
          %v708 = vmul.f32 %v492, %v707
          %v709 = vmul.f32 %v494, %v707
          %v710 = vmul.f32 %v497, %v707
          %v711 = vand.u32 2147483647, %v705
          %v712 = vmul.f32 %v711, %v711
          %v713 = vsub.f32 1.0, %v712
          %v714 = vmul.f32 %v532, %v713
          %v715 = vsub.f32 1.0, %v714
          %v716 = vmax.f32 %v715, 0.0
          %v717 = vrsqrt.pop %v716
          %v718 = vmul.f32 %v716, %v717
          %vm719 = vcmp.eq.f32.partialorder %v716, inf
          %v720 = vsel %vm719, %v716, %v718
          %vm721 = vcmp.eq.f32.partialorder %v716, 0.0
          %v722 = vand.u32 %v716, 2147483648
          %v723 = vsel %vm721, %v722, %v720
          %v724 = vmul.f32 %v489, %v543
          %v725 = vmul.f32 %v490, %v543
          %v726 = vmul.f32 %v491, %v543
          %v727 = vmul.f32 %v543, %v711
          %v728 = vsub.f32 %v727, %v723
          %v729 = vmul.f32 %v708, %v728
          %v730 = vmul.f32 %v709, %v728
          %v731 = vmul.f32 %v710, %v728
          %v732 = vadd.f32 %v724, %v729
          %v733 = vadd.f32 %v725, %v730
          %v734 = vadd.f32 %v726, %v731
          %v735 = vmul.f32 %v492, %v732
          %v736 = vmul.f32 %v494, %v733
          %v737 = vadd.f32 %v735, %v736
          %v738 = vmul.f32 %v497, %v734
          %v739 = vadd.f32 %v737, %v738
          %vm740 = vcmp.lt.f32.partialorder %v739, 0.0
          %v741 = vsel %vm740, -1.0, 1.0
          %v742 = vand.u32 2147483647, %v739
          %v743 = vmax.f32 %v742, 1e-09
          %v744 = vrcp.pop %v743
          %v745 = vmul.f32 %v743, %v744
          %v746 = vsub.f32 2.0, %v745
          %v747 = vmul.f32 %v744, %v746
          %v748 = vmul.f32 %v741, %v747
          %v749 = vsub.f32 %v569, %v700
          %v750 = vsub.f32 %v571, %v702
          %v751 = vsub.f32 %v573, %v704
          %v752 = vmul.f32 %v492, %v749
          %v753 = vmul.f32 %v494, %v750
          %v754 = vadd.f32 %v752, %v753
          %v755 = vmul.f32 %v497, %v751
          %v756 = vadd.f32 %v754, %v755
          %v757 = vmul.f32 %v756, %v748
          %v758 = vmul.f32 %v732, %v757
          %v759 = vmul.f32 %v733, %v757
          %v760 = vmul.f32 %v734, %v757
          %v761 = vadd.f32 %v700, %v758
          %v762 = vadd.f32 %v702, %v759
          %v763 = vadd.f32 %v704, %v760
          %v764 = vsub.f32 0.0, %v739
          %vm765 = vcmp.lt.f32.partialorder %v764, 0.0
          %v766 = vsel %vm765, -1.0, 1.0
          %v767 = vmul.f32 %v492, %v766
          %v768 = vmul.f32 %v494, %v766
          %v769 = vmul.f32 %v497, %v766
          %v770 = vand.u32 2147483647, %v764
          %v771 = vmul.f32 %v770, %v770
          %v772 = vsub.f32 1.0, %v771
          %v773 = vmul.f32 %v597, %v772
          %v774 = vsub.f32 1.0, %v773
          %v775 = vmax.f32 %v774, 0.0
          %v776 = vrsqrt.pop %v775
          %v777 = vmul.f32 %v775, %v776
          %vm778 = vcmp.eq.f32.partialorder %v775, inf
          %v779 = vsel %vm778, %v775, %v777
          %vm780 = vcmp.eq.f32.partialorder %v775, 0.0
          %v781 = vand.u32 %v775, 2147483648
          %v782 = vsel %vm780, %v781, %v779
          %v783 = vmul.f32 %v732, %v608
          %v784 = vmul.f32 %v733, %v608
          %v785 = vmul.f32 %v734, %v608
          %v786 = vmul.f32 %v608, %v770
          %v787 = vsub.f32 %v786, %v782
          %v788 = vmul.f32 %v767, %v787
          %v789 = vmul.f32 %v768, %v787
          %v790 = vmul.f32 %v769, %v787
          %v791 = vadd.f32 %v783, %v788
          %v792 = vadd.f32 %v784, %v789
          %v793 = vadd.f32 %v785, %v790
          %v794 = vsub.f32 %v700, %v620
          %v795 = vsub.f32 %v702, %v622
          %v796 = vsub.f32 %v704, %v624
          %v797 = vmul.f32 %v626, %v794
          %v798 = vmul.f32 %v628, %v795
          %v799 = vadd.f32 %v797, %v798
          %v800 = vmul.f32 %v631, %v796
          %v801 = vadd.f32 %v799, %v800
          %v802 = vmul.f32 %v634, %v794
          %v803 = vmul.f32 %v636, %v795
          %v804 = vadd.f32 %v802, %v803
          %v805 = vmul.f32 %v639, %v796
          %v806 = vadd.f32 %v804, %v805
          %v807 = vand.u32 2147483647, %v801
          %v808 = vsub.f32 %v807, %v643
          %v809 = vmax.f32 %v808, 0.0
          %v810 = vand.u32 2147483647, %v806
          %v811 = vsub.f32 %v810, %v647
          %v812 = vmax.f32 %v811, 0.0
          %v813 = vadd.f32 %v809, %v812
          %v814 = vsub.f32 %v761, %v620
          %v815 = vsub.f32 %v762, %v622
          %v816 = vsub.f32 %v763, %v624
          %v817 = vmul.f32 %v626, %v814
          %v818 = vmul.f32 %v628, %v815
          %v819 = vadd.f32 %v817, %v818
          %v820 = vmul.f32 %v631, %v816
          %v821 = vadd.f32 %v819, %v820
          %v822 = vmul.f32 %v634, %v814
          %v823 = vmul.f32 %v636, %v815
          %v824 = vadd.f32 %v822, %v823
          %v825 = vmul.f32 %v639, %v816
          %v826 = vadd.f32 %v824, %v825
          %v827 = vand.u32 2147483647, %v821
          %v828 = vsub.f32 %v827, %v643
          %v829 = vmax.f32 %v828, 0.0
          %v830 = vand.u32 2147483647, %v826
          %v831 = vsub.f32 %v830, %v647
          %v832 = vmax.f32 %v831, 0.0
          %v833 = vadd.f32 %v829, %v832
          %v834 = vadd.f32 %v813, %v833
          %s835 = sadd.s32 %s311, 560
          %s836 = scalar_lea.vmem %s246, %s835 [#allocation5]
          %837 = vst [vmem:[%s836] sm:$0xff] %v671
          %s838 = sadd.s32 %s311, 576
          %s839 = scalar_lea.vmem %s246, %s838 [#allocation5]
          %840 = vst [vmem:[%s839] sm:$0xff] %v834
          %s841 = ssub.f32 0.0, %s275
          %s842 = ssub.f32 0.0, %s276
          %s843 = ssub.f32 0.0, %s277
          %v844 = vmul.f32 %v429, %v459
          %v845 = vmul.f32 %v430, %v460
          %v846 = vadd.f32 %v844, %v845
          %v847 = vmul.f32 %v428, %v461
          %v848 = vadd.f32 %v846, %v847
          %v849 = vstv %s841
          %v850 = vmul.f32 %v429, %v849
          %v851 = vstv %s842
          %v852 = vmul.f32 %v430, %v851
          %v853 = vadd.f32 %v850, %v852
          %v854 = vstv %s843
          %v855 = vmul.f32 %v428, %v854
          %v856 = vadd.f32 %v853, %v855
          %v857 = vmul.f32 %v459, %v849
          %v858 = vmul.f32 %v460, %v851
          %v859 = vadd.f32 %v857, %v858
          %v860 = vmul.f32 %v461, %v854
          %v861 = vadd.f32 %v859, %v860
          %v862 = vmul.f32 %v848, %v848
          %v863 = vsub.f32 1.0, %v862
          %vm864 = vcmp.lt.f32.partialorder %v863, 0.0
          %v865 = vsel %vm864, -1.0, 1.0
          %v866 = vand.u32 2147483647, %v863
          %v867 = vmax.f32 %v866, 1e-09
          %v868 = vrcp.pop %v867
          %v869 = vmul.f32 %v867, %v868
          %v870 = vsub.f32 2.0, %v869
          %v871 = vmul.f32 %v868, %v870
          %v872 = vmul.f32 %v865, %v871
          %v873 = vmul.f32 %v848, %v861
          %v874 = vsub.f32 %v873, %v856
          %v875 = vmul.f32 %v874, %v872
          %v876 = vmul.f32 %v848, %v856
          %v877 = vsub.f32 %v861, %v876
          %v878 = vmul.f32 %v877, %v872
          %v879 = vmul.f32 %v429, %v875
          %v880 = vmul.f32 %v430, %v875
          %v881 = vmul.f32 %v428, %v875
          %v882 = vadd.f32 %v879, 0.0
          %v883 = vadd.f32 %v880, 0.0
          %v884 = vadd.f32 %v881, 0.0
          %v885 = vmul.f32 %v459, %v878
          %v886 = vmul.f32 %v460, %v878
          %v887 = vmul.f32 %v461, %v878
          %v888 = vadd.f32 %v699, %v885
          %v889 = vadd.f32 %v701, %v886
          %v890 = vadd.f32 %v703, %v887
          %v891 = vadd.f32 %v882, %v888
          %v892 = vadd.f32 %v883, %v889
          %v893 = vadd.f32 %v884, %v890
          %v894 = vmul.f32 %v891, 0.5
          %v895 = vmul.f32 %v892, 0.5
          %v896 = vmul.f32 %v893, 0.5
          %v897 = vsub.f32 %v882, %v888
          %v898 = vsub.f32 %v883, %v889
          %v899 = vsub.f32 %v884, %v890
          %v900 = vmul.f32 %v897, %v897
          %v901 = vmul.f32 %v898, %v898
          %v902 = vadd.f32 %v900, %v901
          %v903 = vmul.f32 %v899, %v899
          %v904 = vadd.f32 %v902, %v903
          %v905 = vrsqrt.pop %v904
          %v906 = vmul.f32 %v904, %v905
          %vm907 = vcmp.eq.f32.partialorder %v904, inf
          %v908 = vsel %vm907, %v904, %v906
          %vm909 = vcmp.eq.f32.partialorder %v904, 0.0
          %v910 = vand.u32 %v904, 2147483648
          %v911 = vsel %vm909, %v910, %v908
          %s912 = scalar_lea.vmem %s246, %s320 [#allocation5]
          %913 = vst [vmem:[%s912] sm:$0xff] %v894
          %s914 = scalar_lea.vmem %s246, %s323 [#allocation5]
          %915 = vst [vmem:[%s914] sm:$0xff] %v895
          %s916 = scalar_lea.vmem %s246, %s326 [#allocation5]
          %917 = vst [vmem:[%s916] sm:$0xff] %v896
          %s918 = sadd.s32 %s311, 336
          %s919 = scalar_lea.vmem %s246, %s918 [#allocation5]
          %920 = vst [vmem:[%s919] sm:$0xff] %v911
          %v921 = vsub.f32 %v584, %v761
          %v922 = vsub.f32 %v585, %v762
          %v923 = vsub.f32 %v586, %v763
          %v924 = vmul.f32 %v617, %v791
          %v925 = vmul.f32 %v618, %v792
          %v926 = vadd.f32 %v924, %v925
          %v927 = vmul.f32 %v619, %v793
          %v928 = vadd.f32 %v926, %v927
          %v929 = vmul.f32 %v617, %v921
          %v930 = vmul.f32 %v618, %v922
          %v931 = vadd.f32 %v929, %v930
          %v932 = vmul.f32 %v619, %v923
          %v933 = vadd.f32 %v931, %v932
          %v934 = vmul.f32 %v791, %v921
          %v935 = vmul.f32 %v792, %v922
          %v936 = vadd.f32 %v934, %v935
          %v937 = vmul.f32 %v793, %v923
          %v938 = vadd.f32 %v936, %v937
          %v939 = vmul.f32 %v928, %v928
          %v940 = vsub.f32 1.0, %v939
          %vm941 = vcmp.lt.f32.partialorder %v940, 0.0
          %v942 = vsel %vm941, -1.0, 1.0
          %v943 = vand.u32 2147483647, %v940
          %v944 = vmax.f32 %v943, 1e-09
          %v945 = vrcp.pop %v944
          %v946 = vmul.f32 %v944, %v945
          %v947 = vsub.f32 2.0, %v946
          %v948 = vmul.f32 %v945, %v947
          %v949 = vmul.f32 %v942, %v948
          %v950 = vmul.f32 %v928, %v938
          %v951 = vsub.f32 %v950, %v933
          %v952 = vmul.f32 %v951, %v949
          %v953 = vmul.f32 %v928, %v933
          %v954 = vsub.f32 %v938, %v953
          %v955 = vmul.f32 %v954, %v949
          %v956 = vmul.f32 %v617, %v952
          %v957 = vmul.f32 %v618, %v952
          %v958 = vmul.f32 %v619, %v952
          %v959 = vadd.f32 %v584, %v956
          %v960 = vadd.f32 %v585, %v957
          %v961 = vadd.f32 %v586, %v958
          %v962 = vmul.f32 %v791, %v955
          %v963 = vmul.f32 %v792, %v955
          %v964 = vmul.f32 %v793, %v955
          %v965 = vadd.f32 %v761, %v962
          %v966 = vadd.f32 %v762, %v963
          %v967 = vadd.f32 %v763, %v964
          %v968 = vadd.f32 %v959, %v965
          %v969 = vadd.f32 %v960, %v966
          %v970 = vadd.f32 %v961, %v967
          %v971 = vmul.f32 %v968, 0.5
          %v972 = vmul.f32 %v969, 0.5
          %v973 = vmul.f32 %v970, 0.5
          %v974 = vsub.f32 %v959, %v965
          %v975 = vsub.f32 %v960, %v966
          %v976 = vsub.f32 %v961, %v967
          %v977 = vmul.f32 %v974, %v974
          %v978 = vmul.f32 %v975, %v975
          %v979 = vadd.f32 %v977, %v978
          %v980 = vmul.f32 %v976, %v976
          %v981 = vadd.f32 %v979, %v980
          %v982 = vrsqrt.pop %v981
          %v983 = vmul.f32 %v981, %v982
          %vm984 = vcmp.eq.f32.partialorder %v981, inf
          %v985 = vsel %vm984, %v981, %v983
          %vm986 = vcmp.eq.f32.partialorder %v981, 0.0
          %v987 = vand.u32 %v981, 2147483648
          %v988 = vsel %vm986, %v987, %v985
          %s989 = scalar_lea.vmem %s246, %s329 [#allocation5]
          %990 = vst [vmem:[%s989] sm:$0xff] %v971
          %s991 = scalar_lea.vmem %s246, %s332 [#allocation5]
          %992 = vst [vmem:[%s991] sm:$0xff] %v972
          %s993 = sadd.s32 %s311, 128
          %s994 = scalar_lea.vmem %s246, %s993 [#allocation5]
          %995 = vst [vmem:[%s994] sm:$0xff] %v973
          %s996 = sadd.s32 %s311, 352
          %s997 = scalar_lea.vmem %s246, %s996 [#allocation5]
          %998 = vst [vmem:[%s997] sm:$0xff] %v988
          %v999 = vadd.f32 %v894, %v971
          %v1000 = vadd.f32 %v895, %v972
          %v1001 = vadd.f32 %v896, %v973
          %v1002 = vmul.f32 %v617, %v429
          %v1003 = vmul.f32 %v618, %v430
          %v1004 = vadd.f32 %v1002, %v1003
          %v1005 = vmul.f32 %v619, %v428
          %v1006 = vadd.f32 %v1004, %v1005
          %v1007 = vmul.f32 %v617, %v584
          %v1008 = vmul.f32 %v618, %v585
          %v1009 = vadd.f32 %v1007, %v1008
          %v1010 = vmul.f32 %v619, %v586
          %v1011 = vadd.f32 %v1009, %v1010
          %v1012 = vmul.f32 %v429, %v584
          %v1013 = vmul.f32 %v430, %v585
          %v1014 = vadd.f32 %v1012, %v1013
          %v1015 = vmul.f32 %v428, %v586
          %v1016 = vadd.f32 %v1014, %v1015
          %v1017 = vmul.f32 %v1006, %v1006
          %v1018 = vsub.f32 1.0, %v1017
          %vm1019 = vcmp.lt.f32.partialorder %v1018, 0.0
          %v1020 = vsel %vm1019, -1.0, 1.0
          %v1021 = vand.u32 2147483647, %v1018
          %v1022 = vmax.f32 %v1021, 1e-09
          %v1023 = vrcp.pop %v1022
          %v1024 = vmul.f32 %v1022, %v1023
          %v1025 = vsub.f32 2.0, %v1024
          %v1026 = vmul.f32 %v1023, %v1025
          %v1027 = vmul.f32 %v1020, %v1026
          %v1028 = vmul.f32 %v1006, %v1016
          %v1029 = vsub.f32 %v1028, %v1011
          %v1030 = vmul.f32 %v1029, %v1027
          %v1031 = vmul.f32 %v1006, %v1011
          %v1032 = vsub.f32 %v1016, %v1031
          %v1033 = vmul.f32 %v1032, %v1027
          %v1034 = vmul.f32 %v617, %v1030
          %v1035 = vmul.f32 %v618, %v1030
          %v1036 = vmul.f32 %v619, %v1030
          %v1037 = vadd.f32 %v584, %v1034
          %v1038 = vadd.f32 %v585, %v1035
          %v1039 = vadd.f32 %v586, %v1036
          %v1040 = vmul.f32 %v429, %v1033
          %v1041 = vmul.f32 %v430, %v1033
          %v1042 = vmul.f32 %v428, %v1033
          %v1043 = vadd.f32 %v1040, 0.0
          %v1044 = vadd.f32 %v1041, 0.0
          %v1045 = vadd.f32 %v1042, 0.0
          %v1046 = vadd.f32 %v1037, %v1043
          %v1047 = vadd.f32 %v1038, %v1044
          %v1048 = vadd.f32 %v1039, %v1045
          %v1049 = vmul.f32 %v1046, 0.5
          %v1050 = vmul.f32 %v1047, 0.5
          %v1051 = vmul.f32 %v1048, 0.5
          %v1052 = vsub.f32 %v1037, %v1043
          %v1053 = vsub.f32 %v1038, %v1044
          %v1054 = vsub.f32 %v1039, %v1045
          %v1055 = vmul.f32 %v1052, %v1052
          %v1056 = vmul.f32 %v1053, %v1053
          %v1057 = vadd.f32 %v1055, %v1056
          %v1058 = vmul.f32 %v1054, %v1054
          %v1059 = vadd.f32 %v1057, %v1058
          %v1060 = vrsqrt.pop %v1059
          %v1061 = vmul.f32 %v1059, %v1060
          %vm1062 = vcmp.eq.f32.partialorder %v1059, inf
          %v1063 = vsel %vm1062, %v1059, %v1061
          %vm1064 = vcmp.eq.f32.partialorder %v1059, 0.0
          %v1065 = vand.u32 %v1059, 2147483648
          %v1066 = vsel %vm1064, %v1065, %v1063
          %s1067 = sadd.s32 %s311, 144
          %s1068 = scalar_lea.vmem %s246, %s1067 [#allocation5]
          %1069 = vst [vmem:[%s1068] sm:$0xff] %v1049
          %s1070 = sadd.s32 %s311, 160
          %s1071 = scalar_lea.vmem %s246, %s1070 [#allocation5]
          %1072 = vst [vmem:[%s1071] sm:$0xff] %v1050
          %s1073 = sadd.s32 %s311, 176
          %s1074 = scalar_lea.vmem %s246, %s1073 [#allocation5]
          %1075 = vst [vmem:[%s1074] sm:$0xff] %v1051
          %s1076 = sadd.s32 %s311, 368
          %s1077 = scalar_lea.vmem %s246, %s1076 [#allocation5]
          %1078 = vst [vmem:[%s1077] sm:$0xff] %v1066
          %v1079 = vadd.f32 %v999, %v1049
          %v1080 = vadd.f32 %v1000, %v1050
          %v1081 = vadd.f32 %v1001, %v1051
          %v1082 = vsub.f32 %v761, %v699
          %v1083 = vsub.f32 %v762, %v701
          %v1084 = vsub.f32 %v763, %v703
          %v1085 = vmul.f32 %v791, %v459
          %v1086 = vmul.f32 %v792, %v460
          %v1087 = vadd.f32 %v1085, %v1086
          %v1088 = vmul.f32 %v793, %v461
          %v1089 = vadd.f32 %v1087, %v1088
          %v1090 = vmul.f32 %v791, %v1082
          %v1091 = vmul.f32 %v792, %v1083
          %v1092 = vadd.f32 %v1090, %v1091
          %v1093 = vmul.f32 %v793, %v1084
          %v1094 = vadd.f32 %v1092, %v1093
          %v1095 = vmul.f32 %v459, %v1082
          %v1096 = vmul.f32 %v460, %v1083
          %v1097 = vadd.f32 %v1095, %v1096
          %v1098 = vmul.f32 %v461, %v1084
          %v1099 = vadd.f32 %v1097, %v1098
          %v1100 = vmul.f32 %v1089, %v1089
          %v1101 = vsub.f32 1.0, %v1100
          %vm1102 = vcmp.lt.f32.partialorder %v1101, 0.0
          %v1103 = vsel %vm1102, -1.0, 1.0
          %v1104 = vand.u32 2147483647, %v1101
          %v1105 = vmax.f32 %v1104, 1e-09
          %v1106 = vrcp.pop %v1105
          %v1107 = vmul.f32 %v1105, %v1106
          %v1108 = vsub.f32 2.0, %v1107
          %v1109 = vmul.f32 %v1106, %v1108
          %v1110 = vmul.f32 %v1103, %v1109
          %v1111 = vmul.f32 %v1089, %v1099
          %v1112 = vsub.f32 %v1111, %v1094
          %v1113 = vmul.f32 %v1112, %v1110
          %v1114 = vmul.f32 %v1089, %v1094
          %v1115 = vsub.f32 %v1099, %v1114
          %v1116 = vmul.f32 %v1115, %v1110
          %v1117 = vmul.f32 %v791, %v1113
          %v1118 = vmul.f32 %v792, %v1113
          %v1119 = vmul.f32 %v793, %v1113
          %v1120 = vadd.f32 %v761, %v1117
          %v1121 = vadd.f32 %v762, %v1118
          %v1122 = vadd.f32 %v763, %v1119
          %v1123 = vmul.f32 %v459, %v1116
          %v1124 = vmul.f32 %v460, %v1116
          %v1125 = vmul.f32 %v461, %v1116
          %v1126 = vadd.f32 %v699, %v1123
          %v1127 = vadd.f32 %v701, %v1124
          %v1128 = vadd.f32 %v703, %v1125
          %v1129 = vadd.f32 %v1120, %v1126
          %v1130 = vadd.f32 %v1121, %v1127
          %v1131 = vadd.f32 %v1122, %v1128
          %v1132 = vmul.f32 %v1129, 0.5
          %v1133 = vmul.f32 %v1130, 0.5
          %v1134 = vmul.f32 %v1131, 0.5
          %v1135 = vsub.f32 %v1120, %v1126
          %v1136 = vsub.f32 %v1121, %v1127
          %v1137 = vsub.f32 %v1122, %v1128
          %v1138 = vmul.f32 %v1135, %v1135
          %v1139 = vmul.f32 %v1136, %v1136
          %v1140 = vadd.f32 %v1138, %v1139
          %v1141 = vmul.f32 %v1137, %v1137
          %v1142 = vadd.f32 %v1140, %v1141
          %v1143 = vrsqrt.pop %v1142
          %v1144 = vmul.f32 %v1142, %v1143
          %vm1145 = vcmp.eq.f32.partialorder %v1142, inf
          %v1146 = vsel %vm1145, %v1142, %v1144
          %vm1147 = vcmp.eq.f32.partialorder %v1142, 0.0
          %v1148 = vand.u32 %v1142, 2147483648
          %v1149 = vsel %vm1147, %v1148, %v1146
          %s1150 = sadd.s32 %s311, 192
          %s1151 = scalar_lea.vmem %s246, %s1150 [#allocation5]
          %1152 = vst [vmem:[%s1151] sm:$0xff] %v1132
          %s1153 = sadd.s32 %s311, 208
          %s1154 = scalar_lea.vmem %s246, %s1153 [#allocation5]
          %1155 = vst [vmem:[%s1154] sm:$0xff] %v1133
          %s1156 = sadd.s32 %s311, 224
          %s1157 = scalar_lea.vmem %s246, %s1156 [#allocation5]
          %1158 = vst [vmem:[%s1157] sm:$0xff] %v1134
          %s1159 = sadd.s32 %s311, 384
          %s1160 = scalar_lea.vmem %s246, %s1159 [#allocation5]
          %1161 = vst [vmem:[%s1160] sm:$0xff] %v1149
          %v1162 = vadd.f32 %v1079, %v1132
          %v1163 = vadd.f32 %v1080, %v1133
          %v1164 = vadd.f32 %v1081, %v1134
          %v1165 = vsub.f32 %v584, %v699
          %v1166 = vsub.f32 %v585, %v701
          %v1167 = vsub.f32 %v586, %v703
          %v1168 = vmul.f32 %v617, %v459
          %v1169 = vmul.f32 %v618, %v460
          %v1170 = vadd.f32 %v1168, %v1169
          %v1171 = vmul.f32 %v619, %v461
          %v1172 = vadd.f32 %v1170, %v1171
          %v1173 = vmul.f32 %v617, %v1165
          %v1174 = vmul.f32 %v618, %v1166
          %v1175 = vadd.f32 %v1173, %v1174
          %v1176 = vmul.f32 %v619, %v1167
          %v1177 = vadd.f32 %v1175, %v1176
          %v1178 = vmul.f32 %v459, %v1165
          %v1179 = vmul.f32 %v460, %v1166
          %v1180 = vadd.f32 %v1178, %v1179
          %v1181 = vmul.f32 %v461, %v1167
          %v1182 = vadd.f32 %v1180, %v1181
          %v1183 = vmul.f32 %v1172, %v1172
          %v1184 = vsub.f32 1.0, %v1183
          %vm1185 = vcmp.lt.f32.partialorder %v1184, 0.0
          %v1186 = vsel %vm1185, -1.0, 1.0
          %v1187 = vand.u32 2147483647, %v1184
          %v1188 = vmax.f32 %v1187, 1e-09
          %v1189 = vrcp.pop %v1188
          %v1190 = vmul.f32 %v1188, %v1189
          %v1191 = vsub.f32 2.0, %v1190
          %v1192 = vmul.f32 %v1189, %v1191
          %v1193 = vmul.f32 %v1186, %v1192
          %v1194 = vmul.f32 %v1172, %v1182
          %v1195 = vsub.f32 %v1194, %v1177
          %v1196 = vmul.f32 %v1195, %v1193
          %v1197 = vmul.f32 %v1172, %v1177
          %v1198 = vsub.f32 %v1182, %v1197
          %v1199 = vmul.f32 %v1198, %v1193
          %v1200 = vmul.f32 %v617, %v1196
          %v1201 = vmul.f32 %v618, %v1196
          %v1202 = vmul.f32 %v619, %v1196
          %v1203 = vadd.f32 %v584, %v1200
          %v1204 = vadd.f32 %v585, %v1201
          %v1205 = vadd.f32 %v586, %v1202
          %v1206 = vmul.f32 %v459, %v1199
          %v1207 = vmul.f32 %v460, %v1199
          %v1208 = vmul.f32 %v461, %v1199
          %v1209 = vadd.f32 %v699, %v1206
          %v1210 = vadd.f32 %v701, %v1207
          %v1211 = vadd.f32 %v703, %v1208
          %v1212 = vadd.f32 %v1203, %v1209
          %v1213 = vadd.f32 %v1204, %v1210
          %v1214 = vadd.f32 %v1205, %v1211
          %v1215 = vmul.f32 %v1212, 0.5
          %v1216 = vmul.f32 %v1213, 0.5
          %v1217 = vmul.f32 %v1214, 0.5
          %v1218 = vsub.f32 %v1203, %v1209
          %v1219 = vsub.f32 %v1204, %v1210
          %v1220 = vsub.f32 %v1205, %v1211
          %v1221 = vmul.f32 %v1218, %v1218
          %v1222 = vmul.f32 %v1219, %v1219
          %v1223 = vadd.f32 %v1221, %v1222
          %v1224 = vmul.f32 %v1220, %v1220
          %v1225 = vadd.f32 %v1223, %v1224
          %v1226 = vrsqrt.pop %v1225
          %v1227 = vmul.f32 %v1225, %v1226
          %vm1228 = vcmp.eq.f32.partialorder %v1225, inf
          %v1229 = vsel %vm1228, %v1225, %v1227
          %vm1230 = vcmp.eq.f32.partialorder %v1225, 0.0
          %v1231 = vand.u32 %v1225, 2147483648
          %v1232 = vsel %vm1230, %v1231, %v1229
          %s1233 = sadd.s32 %s311, 240
          %s1234 = scalar_lea.vmem %s246, %s1233 [#allocation5]
          %1235 = vst [vmem:[%s1234] sm:$0xff] %v1215
          %s1236 = sadd.s32 %s311, 256
          %s1237 = scalar_lea.vmem %s246, %s1236 [#allocation5]
          %1238 = vst [vmem:[%s1237] sm:$0xff] %v1216
          %s1239 = sadd.s32 %s311, 272
          %s1240 = scalar_lea.vmem %s246, %s1239 [#allocation5]
          %1241 = vst [vmem:[%s1240] sm:$0xff] %v1217
          %s1242 = sadd.s32 %s311, 400
          %s1243 = scalar_lea.vmem %s246, %s1242 [#allocation5]
          %1244 = vst [vmem:[%s1243] sm:$0xff] %v1232
          %v1245 = vadd.f32 %v1162, %v1215
          %v1246 = vadd.f32 %v1163, %v1216
          %v1247 = vadd.f32 %v1164, %v1217
          %v1248 = vmul.f32 %v791, %v429
          %v1249 = vmul.f32 %v792, %v430
          %v1250 = vadd.f32 %v1248, %v1249
          %v1251 = vmul.f32 %v793, %v428
          %v1252 = vadd.f32 %v1250, %v1251
          %v1253 = vmul.f32 %v791, %v761
          %v1254 = vmul.f32 %v792, %v762
          %v1255 = vadd.f32 %v1253, %v1254
          %v1256 = vmul.f32 %v793, %v763
          %v1257 = vadd.f32 %v1255, %v1256
          %v1258 = vmul.f32 %v429, %v761
          %v1259 = vmul.f32 %v430, %v762
          %v1260 = vadd.f32 %v1258, %v1259
          %v1261 = vmul.f32 %v428, %v763
          %v1262 = vadd.f32 %v1260, %v1261
          %v1263 = vmul.f32 %v1252, %v1252
          %v1264 = vsub.f32 1.0, %v1263
          %vm1265 = vcmp.lt.f32.partialorder %v1264, 0.0
          %v1266 = vsel %vm1265, -1.0, 1.0
          %v1267 = vand.u32 2147483647, %v1264
          %v1268 = vmax.f32 %v1267, 1e-09
          %v1269 = vrcp.pop %v1268
          %v1270 = vmul.f32 %v1268, %v1269
          %v1271 = vsub.f32 2.0, %v1270
          %v1272 = vmul.f32 %v1269, %v1271
          %v1273 = vmul.f32 %v1266, %v1272
          %v1274 = vmul.f32 %v1252, %v1262
          %v1275 = vsub.f32 %v1274, %v1257
          %v1276 = vmul.f32 %v1275, %v1273
          %v1277 = vmul.f32 %v1252, %v1257
          %v1278 = vsub.f32 %v1262, %v1277
          %v1279 = vmul.f32 %v1278, %v1273
          %v1280 = vmul.f32 %v791, %v1276
          %v1281 = vmul.f32 %v792, %v1276
          %v1282 = vmul.f32 %v793, %v1276
          %v1283 = vadd.f32 %v761, %v1280
          %v1284 = vadd.f32 %v762, %v1281
          %v1285 = vadd.f32 %v763, %v1282
          %v1286 = vmul.f32 %v429, %v1279
          %v1287 = vmul.f32 %v430, %v1279
          %v1288 = vmul.f32 %v428, %v1279
          %v1289 = vadd.f32 %v1286, 0.0
          %v1290 = vadd.f32 %v1287, 0.0
          %v1291 = vadd.f32 %v1288, 0.0
          %v1292 = vadd.f32 %v1283, %v1289
          %v1293 = vadd.f32 %v1284, %v1290
          %v1294 = vadd.f32 %v1285, %v1291
          %v1295 = vmul.f32 %v1292, 0.5
          %v1296 = vmul.f32 %v1293, 0.5
          %v1297 = vmul.f32 %v1294, 0.5
          %v1298 = vsub.f32 %v1283, %v1289
          %v1299 = vsub.f32 %v1284, %v1290
          %v1300 = vsub.f32 %v1285, %v1291
          %v1301 = vmul.f32 %v1298, %v1298
          %v1302 = vmul.f32 %v1299, %v1299
          %v1303 = vadd.f32 %v1301, %v1302
          %v1304 = vmul.f32 %v1300, %v1300
          %v1305 = vadd.f32 %v1303, %v1304
          %v1306 = vrsqrt.pop %v1305
          %v1307 = vmul.f32 %v1305, %v1306
          %vm1308 = vcmp.eq.f32.partialorder %v1305, inf
          %v1309 = vsel %vm1308, %v1305, %v1307
          %vm1310 = vcmp.eq.f32.partialorder %v1305, 0.0
          %v1311 = vand.u32 %v1305, 2147483648
          %v1312 = vsel %vm1310, %v1311, %v1309
          %s1313 = sadd.s32 %s311, 288
          %s1314 = scalar_lea.vmem %s246, %s1313 [#allocation5]
          %1315 = vst [vmem:[%s1314] sm:$0xff] %v1295
          %s1316 = sadd.s32 %s311, 304
          %s1317 = scalar_lea.vmem %s246, %s1316 [#allocation5]
          %1318 = vst [vmem:[%s1317] sm:$0xff] %v1296
          %s1319 = sadd.s32 %s311, 320
          %s1320 = scalar_lea.vmem %s246, %s1319 [#allocation5]
          %1321 = vst [vmem:[%s1320] sm:$0xff] %v1297
          %s1322 = sadd.s32 %s311, 416
          %s1323 = scalar_lea.vmem %s246, %s1322 [#allocation5]
          %1324 = vst [vmem:[%s1323] sm:$0xff] %v1312
          %v1325 = vadd.f32 %v1245, %v1295
          %v1326 = vadd.f32 %v1246, %v1296
          %v1327 = vadd.f32 %v1247, %v1297
          %v1328 = vmul.f32 %v1325, 0.16666667
          %v1329 = vmul.f32 %v1326, 0.16666667
          %v1330 = vmul.f32 %v1327, 0.16666667
          %s1331 = scalar_lea.vmem %s246, %s311 [#allocation5]
          %1332 = vst [vmem:[%s1331] sm:$0xff] %v1328
          %s1333 = scalar_lea.vmem %s246, %s314 [#allocation5]
          %1334 = vst [vmem:[%s1333] sm:$0xff] %v1329
          %s1335 = scalar_lea.vmem %s246, %s317 [#allocation5]
          %1336 = vst [vmem:[%s1335] sm:$0xff] %v1330
          %vm1337 = vcmp.lt.f32.partialorder %v1330, 0.0
          %v1338 = vsel %vm1337, -1.0, 1.0
          %v1339 = vand.u32 2147483647, %v1330
          %v1340 = vmax.f32 %v1339, 1e-09
          %v1341 = vrcp.pop %v1340
          %v1342 = vmul.f32 %v1340, %v1341
          %v1343 = vsub.f32 2.0, %v1342
          %v1344 = vmul.f32 %v1341, %v1343
          %v1345 = vmul.f32 %v1338, %v1344
          %v1346 = vmul.f32 %v1328, %v1345
          %v1347 = vmul.f32 %v1329, %v1345
          %v1348 = vmul.f32 %v1346, %v1346
          %v1349 = vmul.f32 %v1347, %v1347
          %v1350 = vadd.f32 %v1348, %v1349
          %v1351 = vmul.f32 %v1350, %v345
          %v1352 = vadd.f32 %v347, %v1351
          %v1353 = vmul.f32 %v1350, %v1352
          %v1354 = vadd.f32 %v350, %v1353
          %v1355 = vmul.f32 %v1350, %v1354
          %v1356 = vadd.f32 %v1355, 1.0
          %v1357 = vmul.f32 %v1346, %v1356
          %v1358 = vmul.f32 %v1347, %v1356
          %v1359 = vstv %s251
          %v1360 = vmul.f32 %v1357, %v1359
          %v1361 = vadd.f32 %v1360, %v335
          %v1362 = vmul.f32 %v1358, %v1359
          %v1363 = vadd.f32 %v1362, %v339
          %s1364 = sadd.s32 %s311, 432
          %s1365 = scalar_lea.vmem %s246, %s1364 [#allocation5]
          %1366 = vst [vmem:[%s1365] sm:$0xff] %v1361
          %s1367 = sadd.s32 %s311, 448
          %s1368 = scalar_lea.vmem %s246, %s1367 [#allocation5]
          %1369 = vst [vmem:[%s1368] sm:$0xff] %v1363
          %v1370 = vmul.f32 %v1357, %v1357
          %v1371 = vmul.f32 %v1358, %v1358
          %v1372 = vadd.f32 %v1370, %v1371
          %v1373 = vmul.f32 %v1372, %v345
          %v1374 = vadd.f32 %v347, %v1373
          %v1375 = vmul.f32 %v1372, %v1374
          %v1376 = vadd.f32 %v350, %v1375
          %v1377 = vmul.f32 %v1372, %v1376
          %v1378 = vmul.f32 %v1377, %v1377
          %s1379 = sadd.s32 %s311, 592
          %s1380 = scalar_lea.vmem %s246, %s1379 [#allocation5]
          %1381 = vst [vmem:[%s1380] sm:$0xff] %v1378
          %v1382 = vmul.f32 %v431, %v1328
          %v1383 = vmul.f32 %v438, %v1329
          %v1384 = vadd.f32 %v1382, %v1383
          %v1385 = vmul.f32 %v445, %v1330
          %v1386 = vadd.f32 %v1384, %v1385
          %v1387 = vmul.f32 %v433, %v1328
          %v1388 = vmul.f32 %v440, %v1329
          %v1389 = vadd.f32 %v1387, %v1388
          %v1390 = vmul.f32 %v447, %v1330
          %v1391 = vadd.f32 %v1389, %v1390
          %v1392 = vmul.f32 %v436, %v1328
          %v1393 = vmul.f32 %v443, %v1329
          %v1394 = vadd.f32 %v1392, %v1393
          %v1395 = vmul.f32 %v450, %v1330
          %v1396 = vadd.f32 %v1394, %v1395
          %v1397 = vstv %s272
          %v1398 = vadd.f32 %v1386, %v1397
          %v1399 = vstv %s273
          %v1400 = vadd.f32 %v1391, %v1399
          %v1401 = vstv %s274
          %v1402 = vadd.f32 %v1396, %v1401
          %vm1403 = vcmp.lt.f32.partialorder %v1402, 0.0
          %v1404 = vsel %vm1403, -1.0, 1.0
          %v1405 = vand.u32 2147483647, %v1402
          %v1406 = vmax.f32 %v1405, 1e-09
          %v1407 = vrcp.pop %v1406
          %v1408 = vmul.f32 %v1406, %v1407
          %v1409 = vsub.f32 2.0, %v1408
          %v1410 = vmul.f32 %v1407, %v1409
          %v1411 = vmul.f32 %v1404, %v1410
          %v1412 = vmul.f32 %v1398, %v1411
          %v1413 = vmul.f32 %v1400, %v1411
          %v1414 = vmul.f32 %v1412, %v1412
          %v1415 = vmul.f32 %v1413, %v1413
          %v1416 = vadd.f32 %v1414, %v1415
          %v1417 = vmul.f32 %v1416, %v370
          %v1418 = vadd.f32 %v372, %v1417
          %v1419 = vmul.f32 %v1416, %v1418
          %v1420 = vadd.f32 %v375, %v1419
          %v1421 = vmul.f32 %v1416, %v1420
          %v1422 = vadd.f32 %v1421, 1.0
          %v1423 = vmul.f32 %v1412, %v1422
          %v1424 = vmul.f32 %v1413, %v1422
          %v1425 = vstv %s258
          %v1426 = vmul.f32 %v1423, %v1425
          %v1427 = vadd.f32 %v1426, %v360
          %v1428 = vmul.f32 %v1424, %v1425
          %v1429 = vadd.f32 %v1428, %v364
          %s1430 = sadd.s32 %s311, 464
          %s1431 = scalar_lea.vmem %s246, %s1430 [#allocation5]
          %1432 = vst [vmem:[%s1431] sm:$0xff] %v1427
          %s1433 = sadd.s32 %s311, 480
          %s1434 = scalar_lea.vmem %s246, %s1433 [#allocation5]
          %1435 = vst [vmem:[%s1434] sm:$0xff] %v1429
          %v1436 = vmul.f32 %v1423, %v1423
          %v1437 = vmul.f32 %v1424, %v1424
          %v1438 = vadd.f32 %v1436, %v1437
          %v1439 = vmul.f32 %v1438, %v370
          %v1440 = vadd.f32 %v372, %v1439
          %v1441 = vmul.f32 %v1438, %v1440
          %v1442 = vadd.f32 %v375, %v1441
          %v1443 = vmul.f32 %v1438, %v1442
          %v1444 = vmul.f32 %v1443, %v1443
          %s1445 = sadd.s32 %s311, 608
          %s1446 = scalar_lea.vmem %s246, %s1445 [#allocation5]
          %1447 = vst [vmem:[%s1446] sm:$0xff] %v1444
          %vm1448 = vcmp.lt.f32.partialorder %v973, 0.0
          %v1449 = vsel %vm1448, -1.0, 1.0
          %v1450 = vand.u32 2147483647, %v973
          %v1451 = vmax.f32 %v1450, 1e-09
          %v1452 = vrcp.pop %v1451
          %v1453 = vmul.f32 %v1451, %v1452
          %v1454 = vsub.f32 2.0, %v1453
          %v1455 = vmul.f32 %v1452, %v1454
          %v1456 = vmul.f32 %v1449, %v1455
          %v1457 = vmul.f32 %v971, %v1456
          %v1458 = vmul.f32 %v972, %v1456
          %v1459 = vmul.f32 %v1457, %v1457
          %v1460 = vmul.f32 %v1458, %v1458
          %v1461 = vadd.f32 %v1459, %v1460
          %v1462 = vmul.f32 %v1461, %v345
          %v1463 = vadd.f32 %v347, %v1462
          %v1464 = vmul.f32 %v1461, %v1463
          %v1465 = vadd.f32 %v350, %v1464
          %v1466 = vmul.f32 %v1461, %v1465
          %v1467 = vadd.f32 %v1466, 1.0
          %v1468 = vmul.f32 %v1457, %v1467
          %v1469 = vmul.f32 %v1458, %v1467
          %v1470 = vmul.f32 %v1468, %v1359
          %v1471 = vadd.f32 %v1470, %v335
          %v1472 = vmul.f32 %v1469, %v1359
          %v1473 = vadd.f32 %v1472, %v339
          %s1474 = sadd.s32 %s311, 496
          %s1475 = scalar_lea.vmem %s246, %s1474 [#allocation5]
          %1476 = vst [vmem:[%s1475] sm:$0xff] %v1471
          %s1477 = sadd.s32 %s311, 512
          %s1478 = scalar_lea.vmem %s246, %s1477 [#allocation5]
          %1479 = vst [vmem:[%s1478] sm:$0xff] %v1473
          %v1480 = vmul.f32 %v431, %v971
          %v1481 = vmul.f32 %v438, %v972
          %v1482 = vadd.f32 %v1480, %v1481
          %v1483 = vmul.f32 %v445, %v973
          %v1484 = vadd.f32 %v1482, %v1483
          %v1485 = vmul.f32 %v433, %v971
          %v1486 = vmul.f32 %v440, %v972
          %v1487 = vadd.f32 %v1485, %v1486
          %v1488 = vmul.f32 %v447, %v973
          %v1489 = vadd.f32 %v1487, %v1488
          %v1490 = vmul.f32 %v436, %v971
          %v1491 = vmul.f32 %v443, %v972
          %v1492 = vadd.f32 %v1490, %v1491
          %v1493 = vmul.f32 %v450, %v973
          %v1494 = vadd.f32 %v1492, %v1493
          %v1495 = vadd.f32 %v1484, %v1397
          %v1496 = vadd.f32 %v1489, %v1399
          %v1497 = vadd.f32 %v1494, %v1401
          %vm1498 = vcmp.lt.f32.partialorder %v1497, 0.0
          %v1499 = vsel %vm1498, -1.0, 1.0
          %v1500 = vand.u32 2147483647, %v1497
          %v1501 = vmax.f32 %v1500, 1e-09
          %v1502 = vrcp.pop %v1501
          %v1503 = vmul.f32 %v1501, %v1502
          %v1504 = vsub.f32 2.0, %v1503
          %v1505 = vmul.f32 %v1502, %v1504
          %v1506 = vmul.f32 %v1499, %v1505
          %v1507 = vmul.f32 %v1495, %v1506
          %v1508 = vmul.f32 %v1496, %v1506
          %v1509 = vmul.f32 %v1507, %v1507
          %v1510 = vmul.f32 %v1508, %v1508
          %v1511 = vadd.f32 %v1509, %v1510
          %v1512 = vmul.f32 %v1511, %v370
          %v1513 = vadd.f32 %v372, %v1512
          %v1514 = vmul.f32 %v1511, %v1513
          %v1515 = vadd.f32 %v375, %v1514
          %v1516 = vmul.f32 %v1511, %v1515
          %v1517 = vadd.f32 %v1516, 1.0
          %v1518 = vmul.f32 %v1507, %v1517
          %v1519 = vmul.f32 %v1508, %v1517
          %v1520 = vmul.f32 %v1518, %v1425
          %v1521 = vadd.f32 %v1520, %v360
          %v1522 = vmul.f32 %v1519, %v1425
          %v1523 = vadd.f32 %v1522, %v364
          %s1524 = sadd.s32 %s311, 528
          %s1525 = scalar_lea.vmem %s246, %s1524 [#allocation5]
          %1526 = vst [vmem:[%s1525] sm:$0xff] %v1521
          %s1527 = sadd.s32 %s311, 544
          %s1528 = scalar_lea.vmem %s246, %s1527 [#allocation5]
          %1529 = vst [vmem:[%s1528] sm:$0xff] %v1523
        $region75: #{a_call__.1} parent=61 // loop_footer
          %s310 = sadd.s32 1, %s306
        $region76: #{a_call__.1} parent=61 // loop_footer_branch
          %305 = sbr.rel target = $region72
        $region77: #{a_call__.1} parent=61 // loop_exit
          _
        %s1530 = sand.u32 %s69, 1
        %s1531 = sand.u32 %s69, 1
        %s1532 = smul.addr %s1531, 624
        %s1533 = scalar_lea.vmem [#allocation5], %s1532
        // Predicated region
        $region78: #{a_call__.1} parent=61 // pred_check
          %p1534 = pneg %p79
        $region79: #{a_call__.1} parent=61 // pred_check_branch
          %1536 = sbr.rel (%p1534) target = $region81
        $region80: #{a_call__.1} parent=61 // pred_region
          %s1537 = smul.u32 2, %s14
          %s1538 = smul.addr %s1537, 8
          %s1539 = scalar_lea.vmem %s2, %s1538
          // Predicated region
          $region82: #{a_call__.1} parent=80 // pred_check
            _
          $region83: #{a_call__.1} parent=80 // pred_check_branch
            %1541 = sbr.rel (0) target = $region85
          $region84: #{a_call__.1} parent=80 // pred_region
            // Predicated region
            $region86: #{a_call__.1} parent=84 // pred_check
              _
            $region87: #{a_call__.1} parent=84 // pred_check_branch
              %1543 = sbr.rel (0) target = $region89
            $region88: #{a_call__.1} parent=84 // pred_region
              // Predicated region
              $region101: #{a_call__.1} parent=88 // pred_check
                _
              $region102: #{a_call__.1} parent=88 // pred_check_branch
                %1712 = sbr.rel (0) target = $region104
              $region103: #{a_call__.1} parent=88 // pred_region
                loop: start=0, step=1, limit=1
                $region105: #{a_call__.1} parent=103 // loop_pre_header
                  _
                $region106: #{a_call__.1} parent=103 // loop_header
                  %s1714 = sphi 0, %s1718
                  %p1715 = scmp.ge.s32.totalorder %s1714, 1
                  %s1719 = sphi %s1533, %s1533
                  %s1720 = sphi %s1539, %s1539
                $region107: #{a_call__.1} parent=103 // loop_header_branch
                  %1717 = sbr.rel (%p1715) target = $region111
                $region108: #{a_call__.1} parent=103 // loop_body
                  %v1721 = vld [vmem:[%s1719] sm:$0xff]
                  %1722 = vst [vmem:[%s1720] sm:$0xff] %v1721
                  %v1723 = vld [vmem:[%s1719 + $0x8] sm:$0xff]
                  %1724 = vst [vmem:[%s1720 + $0x8] sm:$0xff] %v1723
                  %v1725 = vld [vmem:[%s1719 + $0x10] sm:$0xff]
                  %1726 = vst [vmem:[%s1720 + $0x20] sm:$0xff] %v1725
                  %v1727 = vld [vmem:[%s1719 + $0x18] sm:$0xff]
                  %1728 = vst [vmem:[%s1720 + $0x28] sm:$0xff] %v1727
                  %v1729 = vld [vmem:[%s1719 + $0x20] sm:$0xff]
                  %1730 = vst [vmem:[%s1720 + $0x40] sm:$0xff] %v1729
                  %v1731 = vld [vmem:[%s1719 + $0x28] sm:$0xff]
                  %1732 = vst [vmem:[%s1720 + $0x48] sm:$0xff] %v1731
                  %v1733 = vld [vmem:[%s1719 + $0x30] sm:$0xff]
                  %1734 = vst [vmem:[%s1720 + $0x60] sm:$0xff] %v1733
                  %v1735 = vld [vmem:[%s1719 + $0x38] sm:$0xff]
                  %1736 = vst [vmem:[%s1720 + $0x68] sm:$0xff] %v1735
                  %v1737 = vld [vmem:[%s1719 + $0x40] sm:$0xff]
                  %1738 = vst [vmem:[%s1720 + $0x80] sm:$0xff] %v1737
                  %v1739 = vld [vmem:[%s1719 + $0x48] sm:$0xff]
                  %1740 = vst [vmem:[%s1720 + $0x88] sm:$0xff] %v1739
                  %v1741 = vld [vmem:[%s1719 + $0x50] sm:$0xff]
                  %1742 = vst [vmem:[%s1720 + $0xa0] sm:$0xff] %v1741
                  %v1743 = vld [vmem:[%s1719 + $0x58] sm:$0xff]
                  %1744 = vst [vmem:[%s1720 + $0xa8] sm:$0xff] %v1743
                  %v1745 = vld [vmem:[%s1719 + $0x60] sm:$0xff]
                  %1746 = vst [vmem:[%s1720 + $0xc0] sm:$0xff] %v1745
                  %v1747 = vld [vmem:[%s1719 + $0x68] sm:$0xff]
                  %1748 = vst [vmem:[%s1720 + $0xc8] sm:$0xff] %v1747
                  %v1749 = vld [vmem:[%s1719 + $0x70] sm:$0xff]
                  %1750 = vst [vmem:[%s1720 + $0xe0] sm:$0xff] %v1749
                  %v1751 = vld [vmem:[%s1719 + $0x78] sm:$0xff]
                  %1752 = vst [vmem:[%s1720 + $0xe8] sm:$0xff] %v1751
                  %v1753 = vld [vmem:[%s1719 + $0x80] sm:$0xff]
                  %1754 = vst [vmem:[%s1720 + $0x100] sm:$0xff] %v1753
                  %v1755 = vld [vmem:[%s1719 + $0x88] sm:$0xff]
                  %1756 = vst [vmem:[%s1720 + $0x108] sm:$0xff] %v1755
                  %v1757 = vld [vmem:[%s1719 + $0x90] sm:$0xff]
                  %1758 = vst [vmem:[%s1720 + $0x120] sm:$0xff] %v1757
                  %v1759 = vld [vmem:[%s1719 + $0x98] sm:$0xff]
                  %1760 = vst [vmem:[%s1720 + $0x128] sm:$0xff] %v1759
                  %v1761 = vld [vmem:[%s1719 + $0xa0] sm:$0xff]
                  %1762 = vst [vmem:[%s1720 + $0x140] sm:$0xff] %v1761
                  %v1763 = vld [vmem:[%s1719 + $0xa8] sm:$0xff]
                  %1764 = vst [vmem:[%s1720 + $0x148] sm:$0xff] %v1763
                  %v1765 = vld [vmem:[%s1719 + $0xb0] sm:$0xff]
                  %1766 = vst [vmem:[%s1720 + $0x160] sm:$0xff] %v1765
                  %v1767 = vld [vmem:[%s1719 + $0xb8] sm:$0xff]
                  %1768 = vst [vmem:[%s1720 + $0x168] sm:$0xff] %v1767
                  %v1769 = vld [vmem:[%s1719 + $0xc0] sm:$0xff]
                  %1770 = vst [vmem:[%s1720 + $0x180] sm:$0xff] %v1769
                  %v1771 = vld [vmem:[%s1719 + $0xc8] sm:$0xff]
                  %1772 = vst [vmem:[%s1720 + $0x188] sm:$0xff] %v1771
                  %v1773 = vld [vmem:[%s1719 + $0xd0] sm:$0xff]
                  %1774 = vst [vmem:[%s1720 + $0x1a0] sm:$0xff] %v1773
                  %v1775 = vld [vmem:[%s1719 + $0xd8] sm:$0xff]
                  %1776 = vst [vmem:[%s1720 + $0x1a8] sm:$0xff] %v1775
                  %v1777 = vld [vmem:[%s1719 + $0xe0] sm:$0xff]
                  %1778 = vst [vmem:[%s1720 + $0x1c0] sm:$0xff] %v1777
                  %v1779 = vld [vmem:[%s1719 + $0xe8] sm:$0xff]
                  %1780 = vst [vmem:[%s1720 + $0x1c8] sm:$0xff] %v1779
                  %v1781 = vld [vmem:[%s1719 + $0xf0] sm:$0xff]
                  %1782 = vst [vmem:[%s1720 + $0x1e0] sm:$0xff] %v1781
                  %v1783 = vld [vmem:[%s1719 + $0xf8] sm:$0xff]
                  %1784 = vst [vmem:[%s1720 + $0x1e8] sm:$0xff] %v1783
                  %v1785 = vld [vmem:[%s1719 + $0x100] sm:$0xff]
                  %1786 = vst [vmem:[%s1720 + $0x200] sm:$0xff] %v1785
                  %v1787 = vld [vmem:[%s1719 + $0x108] sm:$0xff]
                  %1788 = vst [vmem:[%s1720 + $0x208] sm:$0xff] %v1787
                  %v1789 = vld [vmem:[%s1719 + $0x110] sm:$0xff]
                  %1790 = vst [vmem:[%s1720 + $0x220] sm:$0xff] %v1789
                  %v1791 = vld [vmem:[%s1719 + $0x118] sm:$0xff]
                  %1792 = vst [vmem:[%s1720 + $0x228] sm:$0xff] %v1791
                  %v1793 = vld [vmem:[%s1719 + $0x120] sm:$0xff]
                  %1794 = vst [vmem:[%s1720 + $0x240] sm:$0xff] %v1793
                  %v1795 = vld [vmem:[%s1719 + $0x128] sm:$0xff]
                  %1796 = vst [vmem:[%s1720 + $0x248] sm:$0xff] %v1795
                  %v1797 = vld [vmem:[%s1719 + $0x130] sm:$0xff]
                  %1798 = vst [vmem:[%s1720 + $0x260] sm:$0xff] %v1797
                  %v1799 = vld [vmem:[%s1719 + $0x138] sm:$0xff]
                  %1800 = vst [vmem:[%s1720 + $0x268] sm:$0xff] %v1799
                  %v1801 = vld [vmem:[%s1719 + $0x140] sm:$0xff]
                  %1802 = vst [vmem:[%s1720 + $0x280] sm:$0xff] %v1801
                  %v1803 = vld [vmem:[%s1719 + $0x148] sm:$0xff]
                  %1804 = vst [vmem:[%s1720 + $0x288] sm:$0xff] %v1803
                  %v1805 = vld [vmem:[%s1719 + $0x150] sm:$0xff]
                  %1806 = vst [vmem:[%s1720 + $0x2a0] sm:$0xff] %v1805
                  %v1807 = vld [vmem:[%s1719 + $0x158] sm:$0xff]
                  %1808 = vst [vmem:[%s1720 + $0x2a8] sm:$0xff] %v1807
                  %v1809 = vld [vmem:[%s1719 + $0x160] sm:$0xff]
                  %1810 = vst [vmem:[%s1720 + $0x2c0] sm:$0xff] %v1809
                  %v1811 = vld [vmem:[%s1719 + $0x168] sm:$0xff]
                  %1812 = vst [vmem:[%s1720 + $0x2c8] sm:$0xff] %v1811
                  %v1813 = vld [vmem:[%s1719 + $0x170] sm:$0xff]
                  %1814 = vst [vmem:[%s1720 + $0x2e0] sm:$0xff] %v1813
                  %v1815 = vld [vmem:[%s1719 + $0x178] sm:$0xff]
                  %1816 = vst [vmem:[%s1720 + $0x2e8] sm:$0xff] %v1815
                  %v1817 = vld [vmem:[%s1719 + $0x180] sm:$0xff]
                  %1818 = vst [vmem:[%s1720 + $0x300] sm:$0xff] %v1817
                  %v1819 = vld [vmem:[%s1719 + $0x188] sm:$0xff]
                  %1820 = vst [vmem:[%s1720 + $0x308] sm:$0xff] %v1819
                  %v1821 = vld [vmem:[%s1719 + $0x190] sm:$0xff]
                  %1822 = vst [vmem:[%s1720 + $0x320] sm:$0xff] %v1821
                  %v1823 = vld [vmem:[%s1719 + $0x198] sm:$0xff]
                  %1824 = vst [vmem:[%s1720 + $0x328] sm:$0xff] %v1823
                  %v1825 = vld [vmem:[%s1719 + $0x1a0] sm:$0xff]
                  %1826 = vst [vmem:[%s1720 + $0x340] sm:$0xff] %v1825
                  %v1827 = vld [vmem:[%s1719 + $0x1a8] sm:$0xff]
                  %1828 = vst [vmem:[%s1720 + $0x348] sm:$0xff] %v1827
                  %v1829 = vld [vmem:[%s1719 + $0x1b0] sm:$0xff]
                  %1830 = vst [vmem:[%s1720 + $0x360] sm:$0xff] %v1829
                  %v1831 = vld [vmem:[%s1719 + $0x1b8] sm:$0xff]
                  %1832 = vst [vmem:[%s1720 + $0x368] sm:$0xff] %v1831
                  %v1833 = vld [vmem:[%s1719 + $0x1c0] sm:$0xff]
                  %1834 = vst [vmem:[%s1720 + $0x380] sm:$0xff] %v1833
                  %v1835 = vld [vmem:[%s1719 + $0x1c8] sm:$0xff]
                  %1836 = vst [vmem:[%s1720 + $0x388] sm:$0xff] %v1835
                  %v1837 = vld [vmem:[%s1719 + $0x1d0] sm:$0xff]
                  %1838 = vst [vmem:[%s1720 + $0x3a0] sm:$0xff] %v1837
                  %v1839 = vld [vmem:[%s1719 + $0x1d8] sm:$0xff]
                  %1840 = vst [vmem:[%s1720 + $0x3a8] sm:$0xff] %v1839
                  %v1841 = vld [vmem:[%s1719 + $0x1e0] sm:$0xff]
                  %1842 = vst [vmem:[%s1720 + $0x3c0] sm:$0xff] %v1841
                  %v1843 = vld [vmem:[%s1719 + $0x1e8] sm:$0xff]
                  %1844 = vst [vmem:[%s1720 + $0x3c8] sm:$0xff] %v1843
                  %v1845 = vld [vmem:[%s1719 + $0x1f0] sm:$0xff]
                  %1846 = vst [vmem:[%s1720 + $0x3e0] sm:$0xff] %v1845
                  %v1847 = vld [vmem:[%s1719 + $0x1f8] sm:$0xff]
                  %1848 = vst [vmem:[%s1720 + $0x3e8] sm:$0xff] %v1847
                  %v1849 = vld [vmem:[%s1719 + $0x200] sm:$0xff]
                  %1850 = vst [vmem:[%s1720 + $0x400] sm:$0xff] %v1849
                  %v1851 = vld [vmem:[%s1719 + $0x208] sm:$0xff]
                  %1852 = vst [vmem:[%s1720 + $0x408] sm:$0xff] %v1851
                  %v1853 = vld [vmem:[%s1719 + $0x210] sm:$0xff]
                  %1854 = vst [vmem:[%s1720 + $0x420] sm:$0xff] %v1853
                  %v1855 = vld [vmem:[%s1719 + $0x218] sm:$0xff]
                  %1856 = vst [vmem:[%s1720 + $0x428] sm:$0xff] %v1855
                  %v1857 = vld [vmem:[%s1719 + $0x220] sm:$0xff]
                  %1858 = vst [vmem:[%s1720 + $0x440] sm:$0xff] %v1857
                  %v1859 = vld [vmem:[%s1719 + $0x228] sm:$0xff]
                  %1860 = vst [vmem:[%s1720 + $0x448] sm:$0xff] %v1859
                  %v1861 = vld [vmem:[%s1719 + $0x230] sm:$0xff]
                  %1862 = vst [vmem:[%s1720 + $0x460] sm:$0xff] %v1861
                  %v1863 = vld [vmem:[%s1719 + $0x238] sm:$0xff]
                  %1864 = vst [vmem:[%s1720 + $0x468] sm:$0xff] %v1863
                  %v1865 = vld [vmem:[%s1719 + $0x240] sm:$0xff]
                  %1866 = vst [vmem:[%s1720 + $0x480] sm:$0xff] %v1865
                  %v1867 = vld [vmem:[%s1719 + $0x248] sm:$0xff]
                  %1868 = vst [vmem:[%s1720 + $0x488] sm:$0xff] %v1867
                  %v1869 = vld [vmem:[%s1719 + $0x250] sm:$0xff]
                  %1870 = vst [vmem:[%s1720 + $0x4a0] sm:$0xff] %v1869
                  %v1871 = vld [vmem:[%s1719 + $0x258] sm:$0xff]
                  %1872 = vst [vmem:[%s1720 + $0x4a8] sm:$0xff] %v1871
                  %v1873 = vld [vmem:[%s1719 + $0x260] sm:$0xff]
                  %1874 = vst [vmem:[%s1720 + $0x4c0] sm:$0xff] %v1873
                  %v1875 = vld [vmem:[%s1719 + $0x268] sm:$0xff]
                  %1876 = vst [vmem:[%s1720 + $0x4c8] sm:$0xff] %v1875
                $region109: #{a_call__.1} parent=103 // loop_footer
                  %s1718 = sadd.s32 1, %s1714
                $region110: #{a_call__.1} parent=103 // loop_footer_branch
                  %1713 = sbr.rel target = $region106
                $region111: #{a_call__.1} parent=103 // loop_exit
                  _
              $region104: #{a_call__.1} parent=88 // pred_fallthru
                _
              // Predicated region
              $region112: #{a_call__.1} parent=88 // pred_check
                _
              $region113: #{a_call__.1} parent=88 // pred_check_branch
                %1878 = sbr.rel target = $region115
              $region114: #{a_call__.1} parent=88 // pred_region
                _
              $region115: #{a_call__.1} parent=88 // pred_fallthru
                _
            $region89: #{a_call__.1} parent=84 // pred_fallthru
              _
            // Predicated region
            $region90: #{a_call__.1} parent=84 // pred_check
              _
            $region91: #{a_call__.1} parent=84 // pred_check_branch
              %1545 = sbr.rel target = $region93
            $region92: #{a_call__.1} parent=84 // pred_region
              loop: start=0, step=1, limit=1
              $region94: #{a_call__.1} parent=92 // loop_pre_header
                _
              $region95: #{a_call__.1} parent=92 // loop_header
                %s1548 = sphi 0, %s1552
                %p1549 = scmp.ge.s32.totalorder %s1548, 1
                %s1553 = sphi %s1533, %s1533
                %s1554 = sphi %s1539, %s1539
              $region96: #{a_call__.1} parent=92 // loop_header_branch
                %1551 = sbr.rel (%p1549) target = $region100
              $region97: #{a_call__.1} parent=92 // loop_body
                %v1555 = vld [vmem:[%s1553] sm:$0xff]
                %1556 = vst [vmem:[%s1554] sm:$0xff] %v1555
                %v1557 = vld [vmem:[%s1553 + $0x8] sm:$0xff]
                %1558 = vst [vmem:[%s1554 + $0x8] sm:$0xff] %v1557
                %v1559 = vld [vmem:[%s1553 + $0x10] sm:$0xff]
                %1560 = vst [vmem:[%s1554 + $0x20] sm:$0xff] %v1559
                %v1561 = vld [vmem:[%s1553 + $0x18] sm:$0xff]
                %1562 = vst [vmem:[%s1554 + $0x28] sm:$0xff] %v1561
                %v1563 = vld [vmem:[%s1553 + $0x20] sm:$0xff]
                %1564 = vst [vmem:[%s1554 + $0x40] sm:$0xff] %v1563
                %v1565 = vld [vmem:[%s1553 + $0x28] sm:$0xff]
                %1566 = vst [vmem:[%s1554 + $0x48] sm:$0xff] %v1565
                %v1567 = vld [vmem:[%s1553 + $0x30] sm:$0xff]
                %1568 = vst [vmem:[%s1554 + $0x60] sm:$0xff] %v1567
                %v1569 = vld [vmem:[%s1553 + $0x38] sm:$0xff]
                %1570 = vst [vmem:[%s1554 + $0x68] sm:$0xff] %v1569
                %v1571 = vld [vmem:[%s1553 + $0x40] sm:$0xff]
                %1572 = vst [vmem:[%s1554 + $0x80] sm:$0xff] %v1571
                %v1573 = vld [vmem:[%s1553 + $0x48] sm:$0xff]
                %1574 = vst [vmem:[%s1554 + $0x88] sm:$0xff] %v1573
                %v1575 = vld [vmem:[%s1553 + $0x50] sm:$0xff]
                %1576 = vst [vmem:[%s1554 + $0xa0] sm:$0xff] %v1575
                %v1577 = vld [vmem:[%s1553 + $0x58] sm:$0xff]
                %1578 = vst [vmem:[%s1554 + $0xa8] sm:$0xff] %v1577
                %v1579 = vld [vmem:[%s1553 + $0x60] sm:$0xff]
                %1580 = vst [vmem:[%s1554 + $0xc0] sm:$0xff] %v1579
                %v1581 = vld [vmem:[%s1553 + $0x68] sm:$0xff]
                %1582 = vst [vmem:[%s1554 + $0xc8] sm:$0xff] %v1581
                %v1583 = vld [vmem:[%s1553 + $0x70] sm:$0xff]
                %1584 = vst [vmem:[%s1554 + $0xe0] sm:$0xff] %v1583
                %v1585 = vld [vmem:[%s1553 + $0x78] sm:$0xff]
                %1586 = vst [vmem:[%s1554 + $0xe8] sm:$0xff] %v1585
                %v1587 = vld [vmem:[%s1553 + $0x80] sm:$0xff]
                %1588 = vst [vmem:[%s1554 + $0x100] sm:$0xff] %v1587
                %v1589 = vld [vmem:[%s1553 + $0x88] sm:$0xff]
                %1590 = vst [vmem:[%s1554 + $0x108] sm:$0xff] %v1589
                %v1591 = vld [vmem:[%s1553 + $0x90] sm:$0xff]
                %1592 = vst [vmem:[%s1554 + $0x120] sm:$0xff] %v1591
                %v1593 = vld [vmem:[%s1553 + $0x98] sm:$0xff]
                %1594 = vst [vmem:[%s1554 + $0x128] sm:$0xff] %v1593
                %v1595 = vld [vmem:[%s1553 + $0xa0] sm:$0xff]
                %1596 = vst [vmem:[%s1554 + $0x140] sm:$0xff] %v1595
                %v1597 = vld [vmem:[%s1553 + $0xa8] sm:$0xff]
                %1598 = vst [vmem:[%s1554 + $0x148] sm:$0xff] %v1597
                %v1599 = vld [vmem:[%s1553 + $0xb0] sm:$0xff]
                %1600 = vst [vmem:[%s1554 + $0x160] sm:$0xff] %v1599
                %v1601 = vld [vmem:[%s1553 + $0xb8] sm:$0xff]
                %1602 = vst [vmem:[%s1554 + $0x168] sm:$0xff] %v1601
                %v1603 = vld [vmem:[%s1553 + $0xc0] sm:$0xff]
                %1604 = vst [vmem:[%s1554 + $0x180] sm:$0xff] %v1603
                %v1605 = vld [vmem:[%s1553 + $0xc8] sm:$0xff]
                %1606 = vst [vmem:[%s1554 + $0x188] sm:$0xff] %v1605
                %v1607 = vld [vmem:[%s1553 + $0xd0] sm:$0xff]
                %1608 = vst [vmem:[%s1554 + $0x1a0] sm:$0xff] %v1607
                %v1609 = vld [vmem:[%s1553 + $0xd8] sm:$0xff]
                %1610 = vst [vmem:[%s1554 + $0x1a8] sm:$0xff] %v1609
                %v1611 = vld [vmem:[%s1553 + $0xe0] sm:$0xff]
                %1612 = vst [vmem:[%s1554 + $0x1c0] sm:$0xff] %v1611
                %v1613 = vld [vmem:[%s1553 + $0xe8] sm:$0xff]
                %1614 = vst [vmem:[%s1554 + $0x1c8] sm:$0xff] %v1613
                %v1615 = vld [vmem:[%s1553 + $0xf0] sm:$0xff]
                %1616 = vst [vmem:[%s1554 + $0x1e0] sm:$0xff] %v1615
                %v1617 = vld [vmem:[%s1553 + $0xf8] sm:$0xff]
                %1618 = vst [vmem:[%s1554 + $0x1e8] sm:$0xff] %v1617
                %v1619 = vld [vmem:[%s1553 + $0x100] sm:$0xff]
                %1620 = vst [vmem:[%s1554 + $0x200] sm:$0xff] %v1619
                %v1621 = vld [vmem:[%s1553 + $0x108] sm:$0xff]
                %1622 = vst [vmem:[%s1554 + $0x208] sm:$0xff] %v1621
                %v1623 = vld [vmem:[%s1553 + $0x110] sm:$0xff]
                %1624 = vst [vmem:[%s1554 + $0x220] sm:$0xff] %v1623
                %v1625 = vld [vmem:[%s1553 + $0x118] sm:$0xff]
                %1626 = vst [vmem:[%s1554 + $0x228] sm:$0xff] %v1625
                %v1627 = vld [vmem:[%s1553 + $0x120] sm:$0xff]
                %1628 = vst [vmem:[%s1554 + $0x240] sm:$0xff] %v1627
                %v1629 = vld [vmem:[%s1553 + $0x128] sm:$0xff]
                %1630 = vst [vmem:[%s1554 + $0x248] sm:$0xff] %v1629
                %v1631 = vld [vmem:[%s1553 + $0x130] sm:$0xff]
                %1632 = vst [vmem:[%s1554 + $0x260] sm:$0xff] %v1631
                %v1633 = vld [vmem:[%s1553 + $0x138] sm:$0xff]
                %1634 = vst [vmem:[%s1554 + $0x268] sm:$0xff] %v1633
                %v1635 = vld [vmem:[%s1553 + $0x140] sm:$0xff]
                %1636 = vst [vmem:[%s1554 + $0x280] sm:$0xff] %v1635
                %v1637 = vld [vmem:[%s1553 + $0x148] sm:$0xff]
                %1638 = vst [vmem:[%s1554 + $0x288] sm:$0xff] %v1637
                %v1639 = vld [vmem:[%s1553 + $0x150] sm:$0xff]
                %1640 = vst [vmem:[%s1554 + $0x2a0] sm:$0xff] %v1639
                %v1641 = vld [vmem:[%s1553 + $0x158] sm:$0xff]
                %1642 = vst [vmem:[%s1554 + $0x2a8] sm:$0xff] %v1641
                %v1643 = vld [vmem:[%s1553 + $0x160] sm:$0xff]
                %1644 = vst [vmem:[%s1554 + $0x2c0] sm:$0xff] %v1643
                %v1645 = vld [vmem:[%s1553 + $0x168] sm:$0xff]
                %1646 = vst [vmem:[%s1554 + $0x2c8] sm:$0xff] %v1645
                %v1647 = vld [vmem:[%s1553 + $0x170] sm:$0xff]
                %1648 = vst [vmem:[%s1554 + $0x2e0] sm:$0xff] %v1647
                %v1649 = vld [vmem:[%s1553 + $0x178] sm:$0xff]
                %1650 = vst [vmem:[%s1554 + $0x2e8] sm:$0xff] %v1649
                %v1651 = vld [vmem:[%s1553 + $0x180] sm:$0xff]
                %1652 = vst [vmem:[%s1554 + $0x300] sm:$0xff] %v1651
                %v1653 = vld [vmem:[%s1553 + $0x188] sm:$0xff]
                %1654 = vst [vmem:[%s1554 + $0x308] sm:$0xff] %v1653
                %v1655 = vld [vmem:[%s1553 + $0x190] sm:$0xff]
                %1656 = vst [vmem:[%s1554 + $0x320] sm:$0xff] %v1655
                %v1657 = vld [vmem:[%s1553 + $0x198] sm:$0xff]
                %1658 = vst [vmem:[%s1554 + $0x328] sm:$0xff] %v1657
                %v1659 = vld [vmem:[%s1553 + $0x1a0] sm:$0xff]
                %1660 = vst [vmem:[%s1554 + $0x340] sm:$0xff] %v1659
                %v1661 = vld [vmem:[%s1553 + $0x1a8] sm:$0xff]
                %1662 = vst [vmem:[%s1554 + $0x348] sm:$0xff] %v1661
                %v1663 = vld [vmem:[%s1553 + $0x1b0] sm:$0xff]
                %1664 = vst [vmem:[%s1554 + $0x360] sm:$0xff] %v1663
                %v1665 = vld [vmem:[%s1553 + $0x1b8] sm:$0xff]
                %1666 = vst [vmem:[%s1554 + $0x368] sm:$0xff] %v1665
                %v1667 = vld [vmem:[%s1553 + $0x1c0] sm:$0xff]
                %1668 = vst [vmem:[%s1554 + $0x380] sm:$0xff] %v1667
                %v1669 = vld [vmem:[%s1553 + $0x1c8] sm:$0xff]
                %1670 = vst [vmem:[%s1554 + $0x388] sm:$0xff] %v1669
                %v1671 = vld [vmem:[%s1553 + $0x1d0] sm:$0xff]
                %1672 = vst [vmem:[%s1554 + $0x3a0] sm:$0xff] %v1671
                %v1673 = vld [vmem:[%s1553 + $0x1d8] sm:$0xff]
                %1674 = vst [vmem:[%s1554 + $0x3a8] sm:$0xff] %v1673
                %v1675 = vld [vmem:[%s1553 + $0x1e0] sm:$0xff]
                %1676 = vst [vmem:[%s1554 + $0x3c0] sm:$0xff] %v1675
                %v1677 = vld [vmem:[%s1553 + $0x1e8] sm:$0xff]
                %1678 = vst [vmem:[%s1554 + $0x3c8] sm:$0xff] %v1677
                %v1679 = vld [vmem:[%s1553 + $0x1f0] sm:$0xff]
                %1680 = vst [vmem:[%s1554 + $0x3e0] sm:$0xff] %v1679
                %v1681 = vld [vmem:[%s1553 + $0x1f8] sm:$0xff]
                %1682 = vst [vmem:[%s1554 + $0x3e8] sm:$0xff] %v1681
                %v1683 = vld [vmem:[%s1553 + $0x200] sm:$0xff]
                %1684 = vst [vmem:[%s1554 + $0x400] sm:$0xff] %v1683
                %v1685 = vld [vmem:[%s1553 + $0x208] sm:$0xff]
                %1686 = vst [vmem:[%s1554 + $0x408] sm:$0xff] %v1685
                %v1687 = vld [vmem:[%s1553 + $0x210] sm:$0xff]
                %1688 = vst [vmem:[%s1554 + $0x420] sm:$0xff] %v1687
                %v1689 = vld [vmem:[%s1553 + $0x218] sm:$0xff]
                %1690 = vst [vmem:[%s1554 + $0x428] sm:$0xff] %v1689
                %v1691 = vld [vmem:[%s1553 + $0x220] sm:$0xff]
                %1692 = vst [vmem:[%s1554 + $0x440] sm:$0xff] %v1691
                %v1693 = vld [vmem:[%s1553 + $0x228] sm:$0xff]
                %1694 = vst [vmem:[%s1554 + $0x448] sm:$0xff] %v1693
                %v1695 = vld [vmem:[%s1553 + $0x230] sm:$0xff]
                %1696 = vst [vmem:[%s1554 + $0x460] sm:$0xff] %v1695
                %v1697 = vld [vmem:[%s1553 + $0x238] sm:$0xff]
                %1698 = vst [vmem:[%s1554 + $0x468] sm:$0xff] %v1697
                %v1699 = vld [vmem:[%s1553 + $0x240] sm:$0xff]
                %1700 = vst [vmem:[%s1554 + $0x480] sm:$0xff] %v1699
                %v1701 = vld [vmem:[%s1553 + $0x248] sm:$0xff]
                %1702 = vst [vmem:[%s1554 + $0x488] sm:$0xff] %v1701
                %v1703 = vld [vmem:[%s1553 + $0x250] sm:$0xff]
                %1704 = vst [vmem:[%s1554 + $0x4a0] sm:$0xff] %v1703
                %v1705 = vld [vmem:[%s1553 + $0x258] sm:$0xff]
                %1706 = vst [vmem:[%s1554 + $0x4a8] sm:$0xff] %v1705
                %v1707 = vld [vmem:[%s1553 + $0x260] sm:$0xff]
                %1708 = vst [vmem:[%s1554 + $0x4c0] sm:$0xff] %v1707
                %v1709 = vld [vmem:[%s1553 + $0x268] sm:$0xff]
                %1710 = vst [vmem:[%s1554 + $0x4c8] sm:$0xff] %v1709
              $region98: #{a_call__.1} parent=92 // loop_footer
                %s1552 = sadd.s32 1, %s1548
              $region99: #{a_call__.1} parent=92 // loop_footer_branch
                %1547 = sbr.rel target = $region95
              $region100: #{a_call__.1} parent=92 // loop_exit
                _
            $region93: #{a_call__.1} parent=84 // pred_fallthru
              _
          $region85: #{a_call__.1} parent=80 // pred_fallthru
            _
          %1879 = vnop
        $region81: #{a_call__.1} parent=61 // pred_fallthru
          _
      $region62: #{a_call__.1} parent=5 // pred_fallthru
        _
      %p1880 = scmp.le.s32.totalorder 2, %s9
      // Predicated region
      $region116: #{a_call__.1} parent=5 // pred_check
        %p1881 = pneg %p1880
      $region117: #{a_call__.1} parent=5 // pred_check_branch
        %1883 = sbr.rel (%p1881) target = $region119
      $region118: #{a_call__.1} parent=5 // pred_region
        %s1884 = ssub.s32 %s9, 2
        // Predicated region
        $region120: #{a_call__.1} parent=118 // pred_check
          %p1885 = pneg %p85
        $region121: #{a_call__.1} parent=118 // pred_check_branch
          %1887 = sbr.rel (%p1885) target = $region123
        $region122: #{a_call__.1} parent=118 // pred_region
          %s1888 = sand.u32 %s70, 1
          %s1889 = sand.u32 %s70, 1
          %s1890 = smul.addr %s1889, 624
          %s1891 = scalar_lea.vmem [#allocation5], %s1890
        $region123: #{a_call__.1} parent=118 // pred_fallthru
          _
      $region119: #{a_call__.1} parent=5 // pred_fallthru
        _
    $region6: #{a_call__.1} parent=1 // loop_footer
      %s13 = sadd.s32 1, %s9
    $region7: #{a_call__.1} parent=1 // loop_footer_branch
      %8 = sbr.rel target = $region3
    $region8: #{a_call__.1} parent=1 // loop_exit
      _
    %1892 = vsyncpa [#allocation3], 1
    %s1893 = scalar_lea.sflag [#allocation3], 1
    %1894 = vsyncpa %s1893, 1

</llo_original>
